<compile_context>
chip_gen: v7x
topology: tpu7x:2x2x1
jax: 0.10.0
libtpu: 0.0.40
codegen_flags: <defaults>
</compile_context>

<pallas_src>
import jax
import jax.numpy as jnp
from jax import lax
from jax.experimental import pallas as pl
from jax.experimental.pallas import tpu as pltpu


# ----------------------------------------------------------------------------
# grad_reverse: identity forward, negated gradient (matches GradReverse).
# ----------------------------------------------------------------------------
@jax.custom_vjp
def grad_reverse(x):
    return x


def _gr_fwd(x):
    return x, None


def _gr_bwd(_, g):
    return (-g,)


grad_reverse.defvjp(_gr_fwd, _gr_bwd)


# ----------------------------------------------------------------------------
# Kernel 1: 3x3 "SAME" conv, NHWC, row-tiled grid.
#
#   grid = (N, H // TH)                 both axes "parallel"
#   xb_ref  : (1, TH, W, Cin)  bf16     body rows of this tile
#   xt_ref  : (1, 1,  W, Cin)  bf16     row above the tile (clamped index map)
#   xbt_ref : (1, 1,  W, Cin)  bf16     row below the tile (clamped index map)
#   w_ref   : (3, 3*Cin, Cout) bf16     ky-major, kx folded into K
#   b_ref   : (1, Cout)        f32
#   out_ref : (1, TH, W, Cout) f32
#   stage_ref: VMEM ((TH+2)*W, 3*Cin) bf16   flattened padded rows x {kx=0,1,2}
#   acc_ref : VMEM (TH*W, Cout) f32          matmul accumulator
# ----------------------------------------------------------------------------
def conv3x3_kernel(xb_ref, xt_ref, xbt_ref, w_ref, b_ref, out_ref,
                   stage_ref, acc_ref):
    _, TH, W, Cout = out_ref.shape
    Cin = xb_ref.shape[-1]
    i = pl.program_id(1)
    n_tiles = pl.num_programs(1)
    M = TH * W
    L = M + 2 * W                       # rows of the flattened padded tile

    zrow = jnp.zeros((W, Cin), stage_ref.dtype)

    # --- centre (kx=1) slab: body + halo rows, flattened row-major (r*W + c).
    #     All stores are sublane-aligned (offsets are multiples of W).
    stage_ref[W:W + M, Cin:2 * Cin] = xb_ref[0].reshape(M, Cin)

    @pl.when(i == 0)
    def _():
        stage_ref[0:W, Cin:2 * Cin] = zrow

    @pl.when(i > 0)
    def _():
        stage_ref[0:W, Cin:2 * Cin] = xt_ref[0].reshape(W, Cin)

    @pl.when(i == n_tiles - 1)
    def _():
        stage_ref[W + M:L, Cin:2 * Cin] = zrow

    @pl.when(i < n_tiles - 1)
    def _():
        stage_ref[W + M:L, Cin:2 * Cin] = xbt_ref[0].reshape(W, Cin)

    # --- kx=0 / kx=2 slabs via XLU roll of the flattened slab (+/-1 row shift
    #     == +/-1 column shift; row-boundary wraps hit the masked edge cols).
    #     Rolls run in f32 (bf16<->f32 round trip is exact).
    center = stage_ref[:, Cin:2 * Cin].astype(jnp.float32)          # (L, Cin)
    col = lax.broadcasted_iota(jnp.int32, (TH + 2, W, 1), 1).reshape(L, 1)
    left = jnp.where(col == 0, 0.0, pltpu.roll(center, 1, 0))        # x[.., c-1]
    right = jnp.where(col == W - 1, 0.0, pltpu.roll(center, L - 1, 0))  # x[.., c+1]
    stage_ref[:, 0:Cin] = left.astype(stage_ref.dtype)
    stage_ref[:, 2 * Cin:3 * Cin] = right.astype(stage_ref.dtype)

    # --- 3 MXU matmuls with K = 3*Cin; f32 accumulation in VMEM scratch.
    for ky in range(3):
        contrib = jnp.dot(stage_ref[ky * W:ky * W + M, :], w_ref[ky],
                          preferred_element_type=jnp.float32)
        if ky == 0:
            acc_ref[...] = contrib
        else:
            acc_ref[...] += contrib

    out_ref[...] = (acc_ref[...] + b_ref[...]).reshape(
        1, TH, W, Cout).astype(out_ref.dtype)


def _pick_tile_rows(H, W, Cin, Cout, target_m=512, stage_budget_bytes=12 << 20):
    """Smallest divisor of H with TH*W >= target_m (else H), shrunk while the
    in-kernel staging/accumulator scratch would exceed the VMEM budget."""
    divisors = [d for d in range(1, H + 1) if H % d == 0]
    th = next((d for d in divisors if d * W >= target_m), H)

    def scratch_bytes(d):
        return (d + 2) * W * 3 * Cin * 2 + d * W * Cout * 4

    while scratch_bytes(th) > stage_budget_bytes:
        smaller = [d for d in divisors if d < th]
        if not smaller:
            break
        th = smaller[-1]
    return th


def _conv_vmem_limit(TH, W, Cin, Cout):
    """Size vmem_limit_bytes from the actual footprint (not a blanket 48 MiB)."""
    body = TH * W * Cin * 2 * 2              # double-buffered body block
    halos = 2 * (W * Cin * 2) * 2
    wts = 9 * Cin * Cout * 2 * 2             # weights (double-buffered default)
    outb = TH * W * Cout * 4 * 2
    stage = (TH + 2) * W * 3 * Cin * 2
    acc = TH * W * Cout * 4
    need = body + halos + wts + outb + stage + acc
    return int(min(max(2 * need + (8 << 20), 16 << 20), 64 << 20))


def conv3x3_same(x_nchw, w_oihw, b, *, compute_dtype=jnp.bfloat16, target_m=512):
    """3x3 stride-1 SAME conv; returns NHWC f32.

    target_m ~512 suits v6e/v7x (256-wide MXU); use ~256 on v5e.
    Layout note: W % 8 == 0 keeps every staging slice sublane-aligned and the
    reshapes free; other W still give correct results (with relayout copies).
    """
    N, Cin, H, W = x_nchw.shape
    Cout = w_oihw.shape[0]
    TH = _pick_tile_rows(H, W, Cin, Cout, target_m=target_m)
    n_tiles = H // TH

    # Single layout pass over the activation (no wrapper-side jnp.pad).
    x_nhwc = jnp.transpose(x_nchw, (0, 2, 3, 1)).astype(compute_dtype)
    # (Cout, Cin, 3, 3) -> (ky, kx*Cin, Cout): kx folded into the contraction.
    w = jnp.transpose(w_oihw, (2, 3, 1, 0)).reshape(3, 3 * Cin, Cout)
    w = w.astype(compute_dtype)
    b2d = b.reshape(1, Cout).astype(jnp.float32)

    body_spec = pl.BlockSpec((1, TH, W, Cin), lambda n, i: (n, i, 0, 0))
    top_spec = pl.BlockSpec(
        (1, 1, W, Cin), lambda n, i: (n, jnp.maximum(i * TH - 1, 0), 0, 0))
    bot_spec = pl.BlockSpec(
        (1, 1, W, Cin), lambda n, i: (n, jnp.minimum(i * TH + TH, H - 1), 0, 0))
    # NOTE: the constant weight block could be single-buffered
    # (pipeline_mode=pl.Buffered(1)) to reclaim its second VMEM buffer at
    # production shapes; left at the default here for portability.
    w_spec = pl.BlockSpec((3, 3 * Cin, Cout), lambda n, i: (0, 0, 0))
    b_spec = pl.BlockSpec((1, Cout), lambda n, i: (0, 0))

    return pl.pallas_call(
        conv3x3_kernel,
        out_shape=jax.ShapeDtypeStruct((N, H, W, Cout), jnp.float32),
        grid=(N, n_tiles),
        in_specs=[body_spec, top_spec, bot_spec, w_spec, b_spec],
        out_specs=pl.BlockSpec((1, TH, W, Cout), lambda n, i: (n, i, 0, 0)),
        scratch_shapes=[
            pltpu.VMEM(((TH + 2) * W, 3 * Cin), compute_dtype),
            pltpu.VMEM((TH * W, Cout), jnp.float32),
        ],
        compiler_params=pltpu.CompilerParams(
            dimension_semantics=("parallel", "parallel"),
            vmem_limit_bytes=_conv_vmem_limit(TH, W, Cin, Cout)),
    )(x_nhwc, x_nhwc, x_nhwc, w, b2d)


# ----------------------------------------------------------------------------
# Kernel 2: Linear -> ReLU -> BatchNorm1d (training batch stats, eps=1e-5)
#           -> Linear.  The adaptive average pool runs in XLA; only the
#           pooled (N, C0) vector enters the kernel (bf16 operands, f32 acc).
# ----------------------------------------------------------------------------
def classifier_kernel(pooled_ref, w1_ref, p3_ref, w2_ref, b2_ref, out_ref):
    h = jnp.dot(pooled_ref[...], w1_ref[...],
                preferred_element_type=jnp.float32)
    h = h + p3_ref[0:1, :]                                       # bias1
    h = jnp.maximum(h, 0.0)                                      # ReLU
    mu = jnp.mean(h, axis=0, keepdims=True)                      # batch stats
    var = jnp.mean(jnp.square(h - mu), axis=0, keepdims=True)
    h = (h - mu) * lax.rsqrt(var + 1e-5)
    h = h * p3_ref[1:2, :] + p3_ref[2:3, :]                      # gamma, beta
    pd = jnp.dot(h.astype(w2_ref.dtype), w2_ref[...],
                 preferred_element_type=jnp.float32)
    pd = pd + b2_ref[...]
    out_ref[...] = pd.astype(out_ref.dtype)


def adv_net_forward(x0_nchw, x1_nchw, params, *, compute_dtype=jnp.bfloat16):
    """Pallas AdvNet.forward given the backbone outputs x['0'], x['1'].

    Returns (feat_nchw, pd) matching the PyTorch module.
    """
    N = x0_nchw.shape[0]
    D = params["w2"].shape[1]

    # ---- conv branch (feat = conv(x['1'])) ----
    feat_nhwc = conv3x3_same(x1_nchw, params["conv_w"], params["conv_b"],
                             compute_dtype=compute_dtype)
    # Module-compatible NCHW f32 output; drop this transpose (and/or emit bf16
    # from the conv) if the consumer accepts NHWC -- it is an extra HBM pass.
    feat = jnp.transpose(feat_nhwc, (0, 3, 1, 2))

    # ---- domain classifier branch ----
    # grad_reverse -> adaptive_avg_pool2d(1,1) -> flatten, pooled in XLA
    # (mem-bound reduction at roofline; kernel input shrinks to (N, C0)).
    pooled = jnp.mean(grad_reverse(x0_nchw), axis=(2, 3))
    p3 = jnp.stack([params["b1"], params["bn_gamma"], params["bn_beta"]],
                   axis=0).astype(jnp.float32)
    vmem = pl.BlockSpec(memory_space=pltpu.MemorySpace.VMEM)
    pd = pl.pallas_call(
        classifier_kernel,
        out_shape=jax.ShapeDtypeStruct((N, D), jnp.float32),
        in_specs=[vmem] * 5,
        out_specs=vmem,
    )(pooled.astype(compute_dtype),
      params["w1"].astype(compute_dtype),
      p3,
      params["w2"].astype(compute_dtype),
      params["b2"].reshape(1, D).astype(jnp.float32))

    return feat, pd


def make_params(key, in_channels, conv_in, out_channels, domain_num):
    hidden = in_channels // 2
    ks = jax.random.split(key, 6)
    return {
        # nn.Conv2d(conv_in, out_channels, 3, padding=1)
        "conv_w": jax.random.normal(ks[0], (out_channels, conv_in, 3, 3),
                                    jnp.float32) * 0.05,
        "conv_b": jax.random.normal(ks[1], (out_channels,), jnp.float32) * 0.05,
        # nn.Linear(in_channels, in_channels//2), stored as (in, out)
        "w1": jax.random.normal(ks[2], (in_channels, hidden), jnp.float32) * 0.05,
        "b1": jax.random.normal(ks[3], (hidden,), jnp.float32) * 0.05,
        # nn.BatchNorm1d(in_channels//2)
        "bn_gamma": jnp.ones((hidden,), jnp.float32),
        "bn_beta": jnp.zeros((hidden,), jnp.float32),
        # nn.Linear(in_channels//2, domain_num)
        "w2": jax.random.normal(ks[4], (hidden, domain_num), jnp.float32) * 0.05,
        "b2": jax.random.normal(ks[5], (domain_num,), jnp.float32) * 0.05,
    }


def reference_forward(x0, x1, params, compute_dtype=jnp.bfloat16):
    """Plain-JAX reference mirroring the kernels' bf16-operand / f32-accum math."""
    feat = lax.conv_general_dilated(
        x1.astype(compute_dtype), params["conv_w"].astype(compute_dtype),
        window_strides=(1, 1), padding="SAME",
        dimension_numbers=("NCHW", "OIHW", "NCHW"),
        preferred_element_type=jnp.float32)
    feat = feat + params["conv_b"][None, :, None, None]

    pooled = jnp.mean(x0, axis=(2, 3))
    h = jnp.dot(pooled.astype(compute_dtype),
                params["w1"].astype(compute_dtype),
                preferred_element_type=jnp.float32) + params["b1"]
    h = jnp.maximum(h, 0.0)
    mu = jnp.mean(h, axis=0, keepdims=True)
    var = jnp.mean((h - mu) ** 2, axis=0, keepdims=True)
    h = (h - mu) * lax.rsqrt(var + 1e-5) * params["bn_gamma"] + params["bn_beta"]
    pd = jnp.dot(h.astype(compute_dtype),
                 params["w2"].astype(compute_dtype),
                 preferred_element_type=jnp.float32) + params["b2"]
    return feat, pd


if __name__ == "__main__":
    # Small shapes consistent with AdvNet(in_channels=1024, conv-in=2048,
    # out_channels=256), scaled down (lane-friendly channel counts):
    #   x['0']: (2, 256, 16, 16), x['1']: (2, 128, 16, 16),
    #   conv out = 128 channels, domain_num = 4.
    N, C0, C1, H, W = 2, 256, 128, 16, 16
    OUT_CH, DOMAIN = 128, 4

    key = jax.random.PRNGKey(0)
    kx0, kx1, kp = jax.random.split(key, 3)
    x0 = jax.random.normal(kx0, (N, C0, H, W), jnp.float32)   # x['0'] (NCHW)
    x1 = jax.random.normal(kx1, (N, C1, H, W), jnp.float32)   # x['1'] (NCHW)
    params = make_params(kp, C0, C1, OUT_CH, DOMAIN)

    feat, pd = jax.jit(adv_net_forward)(x0, x1, params)
    jax.block_until_ready((feat, pd))

    feat_ref, pd_ref = reference_forward(x0, x1, params)
    assert feat.shape == (N, OUT_CH, H, W) and pd.shape == (N, DOMAIN)
    assert jnp.allclose(feat, feat_ref, atol=5e-3, rtol=5e-3), \
        float(jnp.max(jnp.abs(feat - feat_ref)))
    assert jnp.allclose(pd, pd_ref, atol=5e-3, rtol=5e-3), \
        float(jnp.max(jnp.abs(pd - pd_ref)))

    print("KERNEL_OK")
</pallas_src>

<mosaic_0001>
module attributes {stable_mosaic.version = 11 : i64} {
  func.func @conv3x3_kernel(%arg0: i32, %arg1: i32, %arg2: memref<1x16x16x128xbf16, #tpu.memory_space<vmem>>, %arg3: memref<1x1x16x128xbf16, #tpu.memory_space<vmem>>, %arg4: memref<1x1x16x128xbf16, #tpu.memory_space<vmem>>, %arg5: memref<3x384x128xbf16, #tpu.memory_space<vmem>>, %arg6: memref<1x128xf32, #tpu.memory_space<vmem>>, %arg7: memref<1x16x16x128xf32, #tpu.memory_space<vmem>>, %arg8: memref<288x384xbf16, #tpu.memory_space<vmem>>, %arg9: memref<256x128xf32, #tpu.memory_space<vmem>>) attributes {dimension_semantics = [#tpu.dimension_semantics<parallel>, #tpu.dimension_semantics<parallel>], iteration_bounds = array<i64: 2, 1>, scalar_prefetch = 0 : i64, scratch_operands = 2 : i64, tpu.core_type = #tpu.core_type<tc>, window_params = [{transform_indices = @transform_0, window_bounds = array<i64: 1, 16, 16, 128>}, {transform_indices = @transform_1, window_bounds = array<i64: 1, 1, 16, 128>}, {transform_indices = @transform_2, window_bounds = array<i64: 1, 1, 16, 128>}, {pipeline_mode = #tpu.pipeline_mode<synchronous>, transform_indices = @transform_3, window_bounds = array<i64: 3, 384, 128>}, {pipeline_mode = #tpu.pipeline_mode<synchronous>, transform_indices = @transform_4, window_bounds = array<i64: 1, 128>}, {transform_indices = @transform_5, window_bounds = array<i64: 1, 16, 16, 128>}]} {
    %cst = arith.constant 0.000000e+00 : bf16
    %0 = vector.broadcast %cst : bf16 to vector<16x128xbf16>
    %c0 = arith.constant 0 : index
    %c0_0 = arith.constant 0 : index
    %c0_1 = arith.constant 0 : index
    %c0_2 = arith.constant 0 : index
    %1 = vector.load %arg2[%c0, %c0_0, %c0_1, %c0_2] : memref<1x16x16x128xbf16, #tpu.memory_space<vmem>>, vector<1x16x16x128xbf16>
    %2 = vector.shape_cast %1 : vector<1x16x16x128xbf16> to vector<16x16x128xbf16>
    %3 = vector.shape_cast %2 : vector<16x16x128xbf16> to vector<256x128xbf16>
    %c16 = arith.constant 16 : index
    %c128 = arith.constant 128 : index
    %4 = vector.load %arg8[%c16, %c128] : memref<288x384xbf16, #tpu.memory_space<vmem>>, vector<256x128xbf16>
    tpu.vector_store %arg8[%c16, %c128], %3 {strides = array<i32>} : memref<288x384xbf16, #tpu.memory_space<vmem>>, vector<256x128xbf16>,
    %c0_i32 = arith.constant 0 : i32
    %5 = arith.cmpi eq, %arg1, %c0_i32 : i32
    %6 = arith.extui %5 : i1 to i32
    %c0_i32_3 = arith.constant 0 : i32
    %7 = arith.cmpi ne, %6, %c0_i32_3 : i32
    scf.if %7 {
      %c0_51 = arith.constant 0 : index
      %c128_52 = arith.constant 128 : index
      %64 = vector.load %arg8[%c0_51, %c128_52] : memref<288x384xbf16, #tpu.memory_space<vmem>>, vector<16x128xbf16>
      tpu.vector_store %arg8[%c0_51, %c128_52], %0 {strides = array<i32>} : memref<288x384xbf16, #tpu.memory_space<vmem>>, vector<16x128xbf16>,
    } else {
    }
    %c0_i32_4 = arith.constant 0 : i32
    %8 = arith.cmpi sgt, %arg1, %c0_i32_4 : i32
    %9 = arith.extui %8 : i1 to i32
    %c0_i32_5 = arith.constant 0 : i32
    %10 = arith.cmpi ne, %9, %c0_i32_5 : i32
    scf.if %10 {
      %c0_51 = arith.constant 0 : index
      %c0_52 = arith.constant 0 : index
      %c0_53 = arith.constant 0 : index
      %c0_54 = arith.constant 0 : index
      %64 = vector.load %arg3[%c0_51, %c0_52, %c0_53, %c0_54] : memref<1x1x16x128xbf16, #tpu.memory_space<vmem>>, vector<1x1x16x128xbf16>
      %65 = vector.shape_cast %64 : vector<1x1x16x128xbf16> to vector<1x16x128xbf16>
      %66 = vector.shape_cast %65 : vector<1x16x128xbf16> to vector<16x128xbf16>
      %c0_55 = arith.constant 0 : index
      %c128_56 = arith.constant 128 : index
      %67 = vector.load %arg8[%c0_55, %c128_56] : memref<288x384xbf16, #tpu.memory_space<vmem>>, vector<16x128xbf16>
      tpu.vector_store %arg8[%c0_55, %c128_56], %66 {strides = array<i32>} : memref<288x384xbf16, #tpu.memory_space<vmem>>, vector<16x128xbf16>,
    } else {
    }
    %c0_i32_6 = arith.constant 0 : i32
    %11 = arith.cmpi eq, %arg1, %c0_i32_6 : i32
    %12 = arith.extui %11 : i1 to i32
    %c0_i32_7 = arith.constant 0 : i32
    %13 = arith.cmpi ne, %12, %c0_i32_7 : i32
    scf.if %13 {
      %c272 = arith.constant 272 : index
      %c128_51 = arith.constant 128 : index
      %64 = vector.load %arg8[%c272, %c128_51] : memref<288x384xbf16, #tpu.memory_space<vmem>>, vector<16x128xbf16>
      tpu.vector_store %arg8[%c272, %c128_51], %0 {strides = array<i32>} : memref<288x384xbf16, #tpu.memory_space<vmem>>, vector<16x128xbf16>,
    } else {
    }
    %c0_i32_8 = arith.constant 0 : i32
    %14 = arith.cmpi slt, %arg1, %c0_i32_8 : i32
    %15 = arith.extui %14 : i1 to i32
    %c0_i32_9 = arith.constant 0 : i32
    %16 = arith.cmpi ne, %15, %c0_i32_9 : i32
    scf.if %16 {
      %c0_51 = arith.constant 0 : index
      %c0_52 = arith.constant 0 : index
      %c0_53 = arith.constant 0 : index
      %c0_54 = arith.constant 0 : index
      %64 = vector.load %arg4[%c0_51, %c0_52, %c0_53, %c0_54] : memref<1x1x16x128xbf16, #tpu.memory_space<vmem>>, vector<1x1x16x128xbf16>
      %65 = vector.shape_cast %64 : vector<1x1x16x128xbf16> to vector<1x16x128xbf16>
      %66 = vector.shape_cast %65 : vector<1x16x128xbf16> to vector<16x128xbf16>
      %c272 = arith.constant 272 : index
      %c128_55 = arith.constant 128 : index
      %67 = vector.load %arg8[%c272, %c128_55] : memref<288x384xbf16, #tpu.memory_space<vmem>>, vector<16x128xbf16>
      tpu.vector_store %arg8[%c272, %c128_55], %66 {strides = array<i32>} : memref<288x384xbf16, #tpu.memory_space<vmem>>, vector<16x128xbf16>,
    } else {
    }
    %c0_10 = arith.constant 0 : index
    %c128_11 = arith.constant 128 : index
    %17 = vector.load %arg8[%c0_10, %c128_11] : memref<288x384xbf16, #tpu.memory_space<vmem>>, vector<288x128xbf16>
    %18 = arith.extf %17 : vector<288x128xbf16> to vector<288x128xf32>
    %19 = tpu.iota {dimensions = array<i32: 1>} : vector<18x16x1xi32>
    %20 = vector.shape_cast %19 : vector<18x16x1xi32> to vector<288x1xi32>
    %c0_i32_12 = arith.constant 0 : i32
    %21 = vector.broadcast %c0_i32_12 : i32 to vector<288x1xi32>
    %22 = arith.cmpi eq, %20, %21 : vector<288x1xi32>
    %c1_i32 = arith.constant 1 : i32
    %23 = tpu.dynamic_rotate %18 by %c1_i32 dim 0 : vector<288x128xf32>, i32 -> vector<288x128xf32>
    %cst_13 = arith.constant 0.000000e+00 : f32
    %24 = vector.shape_cast %22 : vector<288x1xi1> to vector<288x1xi1>
    %25 = vector.broadcast %24 : vector<288x1xi1> to vector<288x128xi1>
    %26 = vector.broadcast %cst_13 : f32 to vector<288x128xf32>
    %27 = arith.select %25, %26, %23 : vector<288x128xi1>, vector<288x128xf32>
    %c15_i32 = arith.constant 15 : i32
    %28 = vector.broadcast %c15_i32 : i32 to vector<288x1xi32>
    %29 = arith.cmpi eq, %20, %28 : vector<288x1xi32>
    %c287_i32 = arith.constant 287 : i32
    %30 = tpu.dynamic_rotate %18 by %c287_i32 dim 0 : vector<288x128xf32>, i32 -> vector<288x128xf32>
    %cst_14 = arith.constant 0.000000e+00 : f32
    %31 = vector.shape_cast %29 : vector<288x1xi1> to vector<288x1xi1>
    %32 = vector.broadcast %31 : vector<288x1xi1> to vector<288x128xi1>
    %33 = vector.broadcast %cst_14 : f32 to vector<288x128xf32>
    %34 = arith.select %32, %33, %30 : vector<288x128xi1>, vector<288x128xf32>
    %35 = arith.truncf %27 : vector<288x128xf32> to vector<288x128xbf16>
    %c0_15 = arith.constant 0 : index
    %c0_16 = arith.constant 0 : index
    %36 = vector.load %arg8[%c0_15, %c0_16] : memref<288x384xbf16, #tpu.memory_space<vmem>>, vector<288x128xbf16>
    tpu.vector_store %arg8[%c0_15, %c0_16], %35 {strides = array<i32>} : memref<288x384xbf16, #tpu.memory_space<vmem>>, vector<288x128xbf16>,
    %37 = arith.truncf %34 : vector<288x128xf32> to vector<288x128xbf16>
    %c0_17 = arith.constant 0 : index
    %c256 = arith.constant 256 : index
    %38 = vector.load %arg8[%c0_17, %c256] : memref<288x384xbf16, #tpu.memory_space<vmem>>, vector<288x128xbf16>
    tpu.vector_store %arg8[%c0_17, %c256], %37 {strides = array<i32>} : memref<288x384xbf16, #tpu.memory_space<vmem>>, vector<288x128xbf16>,
    %c0_18 = arith.constant 0 : index
    %c0_19 = arith.constant 0 : index
    %39 = vector.load %arg8[%c0_18, %c0_19] : memref<288x384xbf16, #tpu.memory_space<vmem>>, vector<256x384xbf16>
    %c0_20 = arith.constant 0 : index
    %c0_21 = arith.constant 0 : index
    %c0_22 = arith.constant 0 : index
    %40 = vector.load %arg5[%c0_20, %c0_21, %c0_22] : memref<3x384x128xbf16, #tpu.memory_space<vmem>>, vector<1x384x128xbf16>
    %41 = vector.shape_cast %40 : vector<1x384x128xbf16> to vector<384x128xbf16>
    %cst_23 = arith.constant dense<0.000000e+00> : vector<256x128xf32>
    %42 = tpu.matmul %39, %41, %cst_23 {dimension_numbers = #tpu.dot_dimension_numbers<[1], [0], [0], [1], [0, 0, 1, 1], [], []>} : vector<256x384xbf16>, vector<384x128xbf16>, vector<256x128xf32> -> vector<256x128xf32>
    %c0_24 = arith.constant 0 : index
    %c0_25 = arith.constant 0 : index
    %43 = vector.load %arg9[%c0_24, %c0_25] : memref<256x128xf32, #tpu.memory_space<vmem>>, vector<256x128xf32>
    tpu.vector_store %arg9[%c0_24, %c0_25], %42 {strides = array<i32>} : memref<256x128xf32, #tpu.memory_space<vmem>>, vector<256x128xf32>,
    %c16_26 = arith.constant 16 : index
    %c0_27 = arith.constant 0 : index
    %44 = vector.load %arg8[%c16_26, %c0_27] : memref<288x384xbf16, #tpu.memory_space<vmem>>, vector<256x384xbf16>
    %c1 = arith.constant 1 : index
    %c0_28 = arith.constant 0 : index
    %c0_29 = arith.constant 0 : index
    %45 = vector.load %arg5[%c1, %c0_28, %c0_29] : memref<3x384x128xbf16, #tpu.memory_space<vmem>>, vector<1x384x128xbf16>
    %46 = vector.shape_cast %45 : vector<1x384x128xbf16> to vector<384x128xbf16>
    %cst_30 = arith.constant dense<0.000000e+00> : vector<256x128xf32>
    %47 = tpu.matmul %44, %46, %cst_30 {dimension_numbers = #tpu.dot_dimension_numbers<[1], [0], [0], [1], [0, 0, 1, 1], [], []>} : vector<256x384xbf16>, vector<384x128xbf16>, vector<256x128xf32> -> vector<256x128xf32>
    %c0_31 = arith.constant 0 : index
    %c0_32 = arith.constant 0 : index
    %48 = vector.load %arg9[%c0_31, %c0_32] : memref<256x128xf32, #tpu.memory_space<vmem>>, vector<256x128xf32>
    %49 = arith.addf %48, %47 : vector<256x128xf32>
    %c0_33 = arith.constant 0 : index
    %c0_34 = arith.constant 0 : index
    %50 = vector.load %arg9[%c0_33, %c0_34] : memref<256x128xf32, #tpu.memory_space<vmem>>, vector<256x128xf32>
    tpu.vector_store %arg9[%c0_33, %c0_34], %49 {strides = array<i32>} : memref<256x128xf32, #tpu.memory_space<vmem>>, vector<256x128xf32>,
    %c32 = arith.constant 32 : index
    %c0_35 = arith.constant 0 : index
    %51 = vector.load %arg8[%c32, %c0_35] : memref<288x384xbf16, #tpu.memory_space<vmem>>, vector<256x384xbf16>
    %c2 = arith.constant 2 : index
    %c0_36 = arith.constant 0 : index
    %c0_37 = arith.constant 0 : index
    %52 = vector.load %arg5[%c2, %c0_36, %c0_37] : memref<3x384x128xbf16, #tpu.memory_space<vmem>>, vector<1x384x128xbf16>
    %53 = vector.shape_cast %52 : vector<1x384x128xbf16> to vector<384x128xbf16>
    %cst_38 = arith.constant dense<0.000000e+00> : vector<256x128xf32>
    %54 = tpu.matmul %51, %53, %cst_38 {dimension_numbers = #tpu.dot_dimension_numbers<[1], [0], [0], [1], [0, 0, 1, 1], [], []>} : vector<256x384xbf16>, vector<384x128xbf16>, vector<256x128xf32> -> vector<256x128xf32>
    %c0_39 = arith.constant 0 : index
    %c0_40 = arith.constant 0 : index
    %55 = vector.load %arg9[%c0_39, %c0_40] : memref<256x128xf32, #tpu.memory_space<vmem>>, vector<256x128xf32>
    %56 = arith.addf %55, %54 : vector<256x128xf32>
    %c0_41 = arith.constant 0 : index
    %c0_42 = arith.constant 0 : index
    %57 = vector.load %arg9[%c0_41, %c0_42] : memref<256x128xf32, #tpu.memory_space<vmem>>, vector<256x128xf32>
    tpu.vector_store %arg9[%c0_41, %c0_42], %56 {strides = array<i32>} : memref<256x128xf32, #tpu.memory_space<vmem>>, vector<256x128xf32>,
    %c0_43 = arith.constant 0 : index
    %c0_44 = arith.constant 0 : index
    %58 = vector.load %arg9[%c0_43, %c0_44] : memref<256x128xf32, #tpu.memory_space<vmem>>, vector<256x128xf32>
    %c0_45 = arith.constant 0 : index
    %c0_46 = arith.constant 0 : index
    %59 = vector.load %arg6[%c0_45, %c0_46] : memref<1x128xf32, #tpu.memory_space<vmem>>, vector<1x128xf32>
    %60 = vector.broadcast %59 : vector<1x128xf32> to vector<256x128xf32>
    %61 = arith.addf %58, %60 : vector<256x128xf32>
    %62 = vector.shape_cast %61 : vector<256x128xf32> to vector<1x16x16x128xf32>
    %c0_47 = arith.constant 0 : index
    %c0_48 = arith.constant 0 : index
    %c0_49 = arith.constant 0 : index
    %c0_50 = arith.constant 0 : index
    %63 = vector.load %arg7[%c0_47, %c0_48, %c0_49, %c0_50] : memref<1x16x16x128xf32, #tpu.memory_space<vmem>>, vector<1x16x16x128xf32>
    tpu.vector_store %arg7[%c0_47, %c0_48, %c0_49, %c0_50], %62 {strides = array<i32>} : memref<1x16x16x128xf32, #tpu.memory_space<vmem>>, vector<1x16x16x128xf32>,
    return
  }
  func.func @transform_0(%arg0: i32, %arg1: i32) -> (i32, i32, i32, i32) {
    %c0_i32 = arith.constant 0 : i32
    %c0_i32_0 = arith.constant 0 : i32
    %c0_i32_1 = arith.constant 0 : i32
    return %arg0, %arg1, %c0_i32, %c0_i32_0 : i32, i32, i32, i32
  }
  func.func @transform_1(%arg0: i32, %arg1: i32) -> (i32, i32, i32, i32) {
    %c16_i32 = arith.constant 16 : i32
    %0 = arith.muli %arg1, %c16_i32 : i32
    %c1_i32 = arith.constant 1 : i32
    %1 = arith.subi %0, %c1_i32 : i32
    %c0_i32 = arith.constant 0 : i32
    %2 = arith.maxsi %1, %c0_i32 : i32
    %c0_i32_0 = arith.constant 0 : i32
    %c0_i32_1 = arith.constant 0 : i32
    %c0_i32_2 = arith.constant 0 : i32
    return %arg0, %2, %c0_i32_0, %c0_i32_1 : i32, i32, i32, i32
  }
  func.func @transform_2(%arg0: i32, %arg1: i32) -> (i32, i32, i32, i32) {
    %c16_i32 = arith.constant 16 : i32
    %0 = arith.muli %arg1, %c16_i32 : i32
    %c16_i32_0 = arith.constant 16 : i32
    %1 = arith.addi %0, %c16_i32_0 : i32
    %c15_i32 = arith.constant 15 : i32
    %2 = arith.minsi %1, %c15_i32 : i32
    %c0_i32 = arith.constant 0 : i32
    %c0_i32_1 = arith.constant 0 : i32
    %c0_i32_2 = arith.constant 0 : i32
    return %arg0, %2, %c0_i32, %c0_i32_1 : i32, i32, i32, i32
  }
  func.func @transform_3(%arg0: i32, %arg1: i32) -> (i32, i32, i32) {
    %c0_i32 = arith.constant 0 : i32
    %c0_i32_0 = arith.constant 0 : i32
    %c0_i32_1 = arith.constant 0 : i32
    %c0_i32_2 = arith.constant 0 : i32
    return %c0_i32, %c0_i32_0, %c0_i32_1 : i32, i32, i32
  }
  func.func @transform_4(%arg0: i32, %arg1: i32) -> (i32, i32) {
    %c0_i32 = arith.constant 0 : i32
    %c0_i32_0 = arith.constant 0 : i32
    %c0_i32_1 = arith.constant 0 : i32
    return %c0_i32, %c0_i32_0 : i32, i32
  }
  func.func @transform_5(%arg0: i32, %arg1: i32) -> (i32, i32, i32, i32) {
    %c0_i32 = arith.constant 0 : i32
    %c0_i32_0 = arith.constant 0 : i32
    %c0_i32_1 = arith.constant 0 : i32
    return %arg0, %arg1, %c0_i32, %c0_i32_0 : i32, i32, i32, i32
  }
}

module attributes {stable_mosaic.version = 11 : i64} {
  func.func @classifier_kernel(%arg0: memref<2x256xbf16, #tpu.memory_space<vmem>>, %arg1: memref<256x128xbf16, #tpu.memory_space<vmem>>, %arg2: memref<3x128xf32, #tpu.memory_space<vmem>>, %arg3: memref<128x4xbf16, #tpu.memory_space<vmem>>, %arg4: memref<1x4xf32, #tpu.memory_space<vmem>>, %arg5: memref<2x4xf32, #tpu.memory_space<vmem>>) attributes {dimension_semantics = [], scalar_prefetch = 0 : i64, scratch_operands = 0 : i64, tpu.core_type = #tpu.core_type<tc>} {
    %c0 = arith.constant 0 : index
    %c0_0 = arith.constant 0 : index
    %0 = vector.load %arg0[%c0, %c0_0] : memref<2x256xbf16, #tpu.memory_space<vmem>>, vector<2x256xbf16>
    %c0_1 = arith.constant 0 : index
    %c0_2 = arith.constant 0 : index
    %1 = vector.load %arg1[%c0_1, %c0_2] : memref<256x128xbf16, #tpu.memory_space<vmem>>, vector<256x128xbf16>
    %cst = arith.constant dense<0.000000e+00> : vector<2x128xf32>
    %2 = tpu.matmul %0, %1, %cst {dimension_numbers = #tpu.dot_dimension_numbers<[1], [0], [0], [1], [0, 0, 1, 1], [], []>} : vector<2x256xbf16>, vector<256x128xbf16>, vector<2x128xf32> -> vector<2x128xf32>
    %c0_3 = arith.constant 0 : index
    %c0_4 = arith.constant 0 : index
    %3 = vector.load %arg2[%c0_3, %c0_4] : memref<3x128xf32, #tpu.memory_space<vmem>>, vector<1x128xf32>
    %4 = vector.broadcast %3 : vector<1x128xf32> to vector<2x128xf32>
    %5 = arith.addf %2, %4 : vector<2x128xf32>
    %cst_5 = arith.constant 0.000000e+00 : f32
    %6 = vector.broadcast %cst_5 : f32 to vector<2x128xf32>
    %7 = arith.maximumf %5, %6 : vector<2x128xf32>
    %cst_6 = arith.constant dense<0.000000e+00> : vector<128xf32>
    %8 = vector.multi_reduction <add>, %7, %cst_6 [0] : vector<2x128xf32> to vector<128xf32>
    %9 = vector.shape_cast %8 : vector<128xf32> to vector<1x128xf32>
    %cst_7 = arith.constant 2.000000e+00 : f32
    %10 = vector.broadcast %cst_7 : f32 to vector<1x128xf32>
    %11 = arith.divf %9, %10 : vector<1x128xf32>
    %12 = vector.broadcast %11 : vector<1x128xf32> to vector<2x128xf32>
    %13 = arith.subf %7, %12 : vector<2x128xf32>
    %14 = arith.mulf %13, %13 : vector<2x128xf32>
    %cst_8 = arith.constant dense<0.000000e+00> : vector<128xf32>
    %15 = vector.multi_reduction <add>, %14, %cst_8 [0] : vector<2x128xf32> to vector<128xf32>
    %16 = vector.shape_cast %15 : vector<128xf32> to vector<1x128xf32>
    %cst_9 = arith.constant 2.000000e+00 : f32
    %17 = vector.broadcast %cst_9 : f32 to vector<1x128xf32>
    %18 = arith.divf %16, %17 : vector<1x128xf32>
    %19 = vector.broadcast %11 : vector<1x128xf32> to vector<2x128xf32>
    %20 = arith.subf %7, %19 : vector<2x128xf32>
    %cst_10 = arith.constant 9.99999974E-6 : f32
    %21 = vector.broadcast %cst_10 : f32 to vector<1x128xf32>
    %22 = arith.addf %18, %21 : vector<1x128xf32>
    %23 = math.rsqrt %22 : vector<1x128xf32>
    %24 = vector.broadcast %23 : vector<1x128xf32> to vector<2x128xf32>
    %25 = arith.mulf %20, %24 : vector<2x128xf32>
    %c1 = arith.constant 1 : index
    %c0_11 = arith.constant 0 : index
    %26 = vector.load %arg2[%c1, %c0_11] : memref<3x128xf32, #tpu.memory_space<vmem>>, vector<1x128xf32>
    %27 = vector.broadcast %26 : vector<1x128xf32> to vector<2x128xf32>
    %28 = arith.mulf %25, %27 : vector<2x128xf32>
    %c2 = arith.constant 2 : index
    %c0_12 = arith.constant 0 : index
    %29 = vector.load %arg2[%c2, %c0_12] : memref<3x128xf32, #tpu.memory_space<vmem>>, vector<1x128xf32>
    %30 = vector.broadcast %29 : vector<1x128xf32> to vector<2x128xf32>
    %31 = arith.addf %28, %30 : vector<2x128xf32>
    %32 = arith.truncf %31 : vector<2x128xf32> to vector<2x128xbf16>
    %c0_13 = arith.constant 0 : index
    %c0_14 = arith.constant 0 : index
    %33 = vector.load %arg3[%c0_13, %c0_14] : memref<128x4xbf16, #tpu.memory_space<vmem>>, vector<128x4xbf16>
    %cst_15 = arith.constant dense<0.000000e+00> : vector<2x4xf32>
    %34 = tpu.matmul %32, %33, %cst_15 {dimension_numbers = #tpu.dot_dimension_numbers<[1], [0], [0], [1], [0, 0, 1, 1], [], []>} : vector<2x128xbf16>, vector<128x4xbf16>, vector<2x4xf32> -> vector<2x4xf32>
    %c0_16 = arith.constant 0 : index
    %c0_17 = arith.constant 0 : index
    %35 = vector.load %arg4[%c0_16, %c0_17] : memref<1x4xf32, #tpu.memory_space<vmem>>, vector<1x4xf32>
    %36 = vector.broadcast %35 : vector<1x4xf32> to vector<2x4xf32>
    %37 = arith.addf %34, %36 : vector<2x4xf32>
    %c0_18 = arith.constant 0 : index
    %c0_19 = arith.constant 0 : index
    %38 = vector.load %arg5[%c0_18, %c0_19] : memref<2x4xf32, #tpu.memory_space<vmem>>, vector<2x4xf32>
    tpu.vector_store %arg5[%c0_18, %c0_19], %37 {strides = array<i32>} : memref<2x4xf32, #tpu.memory_space<vmem>>, vector<2x4xf32>,
    return
  }
}

</mosaic_0001>

<llo_original>
// kernel: adv_net_forward.3
$region0: #{adv_net_forward.3}
  #allocation0 [shape = 'u32[]', space=smem, size = 0x4, offset = 0x4, fixed_abs, tag = 'smem constant byte address 0x4 - core index']
  #allocation1 [shape = 'u32[144,128]{1,0:T(1,128)}', space=vmem, size = 0x12000, scoped, tag = 'internal scratch']
  %s0 = inlined_call_operand.vmem [shape: bf16[2,256], index: 0, kind: input, shape index: {}]
  %s1 = inlined_call_operand.vmem [shape: bf16[256,128], index: 1, kind: input, shape index: {}]
  %s2 = inlined_call_operand.vmem [shape: f32[3,128], index: 2, kind: input, shape index: {}]
  %s3 = inlined_call_operand.vmem [shape: bf16[128,4], index: 3, kind: input, shape index: {}]
  %s4 = inlined_call_operand.vmem [shape: f32[1,4], index: 4, kind: input, shape index: {}]
  %s5 = inlined_call_operand.hbm [shape: f32[2,4], index: 5, kind: output, shape index: {}]
  %s6 = sld [smem:[#allocation0]]
  $region30: #{adv_net_forward.3} parent=0
    _
  %s8 = ssub.s32 1, %s6
  %s9 = scalar_select 0, %s8, %s6
  $region1: #{adv_net_forward.3} parent=0
    #allocation2 [shape = 'u8[1024]{0}', space=vmem, size = 0x400, scoped, tag = 'output window, operand 0, single buffered']
    #allocation3 [shape = 's32[1]{0}', space=sflag, size = 0x4, scoped, tag = 'scoped memory for adv_net_forward.3']
    %10 = vsyncpa [#allocation3], 0
    // Predicated region
    $region2: #{adv_net_forward.3} parent=1 // pred_check
      _
    $region3: #{adv_net_forward.3} parent=1 // pred_check_branch
      %12 = sbr.rel (0) target = $region5
    $region4: #{adv_net_forward.3} parent=1 // pred_region
      _
    $region5: #{adv_net_forward.3} parent=1 // pred_fallthru
      _
    // Predicated region
    $region6: #{adv_net_forward.3} parent=1 // pred_check
      _
    $region7: #{adv_net_forward.3} parent=1 // pred_check_branch
      %14 = sbr.rel (0) target = $region9
    $region8: #{adv_net_forward.3} parent=1 // pred_region
      _
    $region9: #{adv_net_forward.3} parent=1 // pred_fallthru
      _
    // Predicated region
    $region10: #{adv_net_forward.3} parent=1 // pred_check
      _
    $region11: #{adv_net_forward.3} parent=1 // pred_check_branch
      %16 = sbr.rel (0) target = $region13
    $region12: #{adv_net_forward.3} parent=1 // pred_region
      _
    $region13: #{adv_net_forward.3} parent=1 // pred_fallthru
      _
    // Predicated region
    $region14: #{adv_net_forward.3} parent=1 // pred_check
      _
    $region15: #{adv_net_forward.3} parent=1 // pred_check_branch
      %18 = sbr.rel (0) target = $region17
    $region16: #{adv_net_forward.3} parent=1 // pred_region
      _
    $region17: #{adv_net_forward.3} parent=1 // pred_fallthru
      _
    // Predicated region
    $region18: #{adv_net_forward.3} parent=1 // pred_check
      _
    $region19: #{adv_net_forward.3} parent=1 // pred_check_branch
      %20 = sbr.rel (0) target = $region21
    $region20: #{adv_net_forward.3} parent=1 // pred_region
      _
    $region21: #{adv_net_forward.3} parent=1 // pred_fallthru
      _
    %v22 = vld [vmem:[%s0] sm:$0x3]
    %v23 = vld [vmem:[%s1] sm:$0xf]
    %v24 = vld [vmem:[%s1 + $0x4] sm:$0xf]
    %v25 = vld [vmem:[%s1 + $0x8] sm:$0xf]
    %v26 = vld [vmem:[%s1 + $0xc] sm:$0xf]
    %v27 = vld [vmem:[%s1 + $0x10] sm:$0xf]
    %v28 = vld [vmem:[%s1 + $0x14] sm:$0xf]
    %v29 = vld [vmem:[%s1 + $0x18] sm:$0xf]
    %v30 = vld [vmem:[%s1 + $0x1c] sm:$0xf]
    %v31 = vld [vmem:[%s1 + $0x20] sm:$0xf]
    %v32 = vld [vmem:[%s1 + $0x24] sm:$0xf]
    %v33 = vld [vmem:[%s1 + $0x28] sm:$0xf]
    %v34 = vld [vmem:[%s1 + $0x2c] sm:$0xf]
    %v35 = vld [vmem:[%s1 + $0x30] sm:$0xf]
    %v36 = vld [vmem:[%s1 + $0x34] sm:$0xf]
    %v37 = vld [vmem:[%s1 + $0x38] sm:$0xf]
    %v38 = vld [vmem:[%s1 + $0x3c] sm:$0xf]
    %v39 = vld [vmem:[%s1 + $0x40] sm:$0xf]
    %v40 = vld [vmem:[%s1 + $0x44] sm:$0xf]
    %v41 = vld [vmem:[%s1 + $0x48] sm:$0xf]
    %v42 = vld [vmem:[%s1 + $0x4c] sm:$0xf]
    %v43 = vld [vmem:[%s1 + $0x50] sm:$0xf]
    %v44 = vld [vmem:[%s1 + $0x54] sm:$0xf]
    %v45 = vld [vmem:[%s1 + $0x58] sm:$0xf]
    %v46 = vld [vmem:[%s1 + $0x5c] sm:$0xf]
    %v47 = vld [vmem:[%s1 + $0x60] sm:$0xf]
    %v48 = vld [vmem:[%s1 + $0x64] sm:$0xf]
    %v49 = vld [vmem:[%s1 + $0x68] sm:$0xf]
    %v50 = vld [vmem:[%s1 + $0x6c] sm:$0xf]
    %v51 = vld [vmem:[%s1 + $0x70] sm:$0xf]
    %v52 = vld [vmem:[%s1 + $0x74] sm:$0xf]
    %v53 = vld [vmem:[%s1 + $0x78] sm:$0xf]
    %v54 = vld [vmem:[%s1 + $0x7c] sm:$0xf]
    %v55 = vld [vmem:[%s2] sm:$0x1]
    %v56 = vlaneseq
    %v57 = vshrl.u32 %v56, 7
    %v58 = vsub.s32 0, %v57
    %v59 = vrot.slane %v55, %v58
    %v62 = vunpack.c.l.s4 1966171168
    %v63 = vunpack.c.0.s8 %v62
    %v64 = vlaneseq
    %v65 = vshrl.u32 %v64, 7
    %v66 = vsub.s32 %v63, %v65
    %v67 = vrot.slane %v22, %v66
    %v68 = vcombine.high %v67, %v67
    %v70 = vunpack.c.l.s4 1966171168
    %v71 = vunpack.c.0.s8 %v70
    %v72 = vlaneseq
    %v73 = vshrl.u32 %v72, 7
    %v74 = vsub.s32 %v71, %v73
    %v75 = vrot.slane %v67, %v74
    %v77 = vunpack.c.l.s4 1966171168
    %v78 = vunpack.c.0.s8 %v77
    %v79 = vlaneseq
    %v80 = vshrl.u32 %v79, 7
    %v81 = vsub.s32 %v78, %v80
    %v82 = vrot.slane %v68, %v81
    %v117 = vunpack.c.l.b16 %v23
    %v118 = vunpack.c.l.b16 %v24
    %v119 = vunpack.c.l.b16 %v25
    %v120 = vunpack.c.l.b16 %v26
    %v121 = vunpack.c.l.b16 %v27
    %v122 = vunpack.c.l.b16 %v28
    %v123 = vunpack.c.l.b16 %v29
    %v124 = vunpack.c.l.b16 %v30
    %v125 = vunpack.c.l.b16 %v31
    %v126 = vunpack.c.l.b16 %v32
    %v127 = vunpack.c.l.b16 %v33
    %v128 = vunpack.c.l.b16 %v34
    %v129 = vunpack.c.l.b16 %v35
    %v130 = vunpack.c.l.b16 %v36
    %v131 = vunpack.c.l.b16 %v37
    %v132 = vunpack.c.l.b16 %v38
    %v133 = vunpack.c.l.b16 %v39
    %v134 = vunpack.c.l.b16 %v40
    %v135 = vunpack.c.l.b16 %v41
    %v136 = vunpack.c.l.b16 %v42
    %v137 = vunpack.c.l.b16 %v43
    %v138 = vunpack.c.l.b16 %v44
    %v139 = vunpack.c.l.b16 %v45
    %v140 = vunpack.c.l.b16 %v46
    %v141 = vunpack.c.l.b16 %v47
    %v142 = vunpack.c.l.b16 %v48
    %v143 = vunpack.c.l.b16 %v49
    %v144 = vunpack.c.l.b16 %v50
    %v145 = vunpack.c.l.b16 %v51
    %v146 = vunpack.c.l.b16 %v52
    %v147 = vunpack.c.l.b16 %v53
    %v148 = vunpack.c.l.b16 %v54
    %v149 = vpack.c.b16 %v118, %v117
    %v150 = vpack.c.b16 %v120, %v119
    %v151 = vpack.c.b16 %v122, %v121
    %v152 = vpack.c.b16 %v124, %v123
    %v153 = vpack.c.b16 %v126, %v125
    %v154 = vpack.c.b16 %v128, %v127
    %v155 = vpack.c.b16 %v130, %v129
    %v156 = vpack.c.b16 %v132, %v131
    %v157 = vpack.c.b16 %v134, %v133
    %v158 = vpack.c.b16 %v136, %v135
    %v159 = vpack.c.b16 %v138, %v137
    %v160 = vpack.c.b16 %v140, %v139
    %v161 = vpack.c.b16 %v142, %v141
    %v162 = vpack.c.b16 %v144, %v143
    %v163 = vpack.c.b16 %v146, %v145
    %v164 = vpack.c.b16 %v148, %v147
    %181 = vmatprep.subr.bf16.mxu0 0
    %182 = vmatpush1.bf16.msra.mxu0 %v149
    %183 = vmatprep.subr.bf16.mxu0 0
    %184 = vmatpush1.bf16.msra.mxu0 %v150
    %185 = vmatprep.subr.bf16.mxu0 0
    %186 = vmatpush1.bf16.msra.mxu0 %v151
    %187 = vmatprep.subr.bf16.mxu0 0
    %188 = vmatpush1.bf16.msra.mxu0 %v152
    %189 = vmatprep.subr.bf16.mxu0 0
    %190 = vmatpush1.bf16.msra.mxu0 %v153
    %191 = vmatprep.subr.bf16.mxu0 0
    %192 = vmatpush1.bf16.msra.mxu0 %v154
    %193 = vmatprep.subr.bf16.mxu0 0
    %194 = vmatpush1.bf16.msra.mxu0 %v155
    %195 = vmatprep.subr.bf16.mxu0 0
    %196 = vmatpush1.bf16.msra.mxu0 %v156
    %197 = vmatprep.subr.bf16.mxu0 0
    %198 = vmatpush1.bf16.msra.mxu0 %v157
    %199 = vmatprep.subr.bf16.mxu0 0
    %200 = vmatpush1.bf16.msra.mxu0 %v158
    %201 = vmatprep.subr.bf16.mxu0 0
    %202 = vmatpush1.bf16.msra.mxu0 %v159
    %203 = vmatprep.subr.bf16.mxu0 0
    %204 = vmatpush1.bf16.msra.mxu0 %v160
    %205 = vmatprep.subr.bf16.mxu0 0
    %206 = vmatpush1.bf16.msra.mxu0 %v161
    %207 = vmatprep.subr.bf16.mxu0 0
    %208 = vmatpush1.bf16.msra.mxu0 %v162
    %209 = vmatprep.subr.bf16.mxu0 0
    %210 = vmatpush1.bf16.msra.mxu0 %v163
    %211 = vmatprep.subr.bf16.mxu0 0
    %212 = vmatpush1.bf16.msra.mxu0 %v164
    %213 = vmatprep.mubr.bf16.mxu0 %v82
    %214 = vmatmul.mubr.bf16.gmra.mrb[0].mxu0 %v75
    %v215 = vpop.f32.mrb[0].mxu0
    %v216 = vadd.f32 %v59, %v215
    %v217 = vpop.f32.mrb[0].mxu0
    %v218 = vpop.f32.mrb[0].mxu0
    %v219 = vpop.f32.mrb[0].mxu0
    %220 = vdwg.mxu0
    %v221 = vmax.f32 %v216, 0.0
    %vm222 = vcmask 1041408
    %v223 = vsel %vm222, %v221, 0.0
    %v224 = vrot.slane %v223, 4
    %v225 = vadd.f32 %v223, %v224
    %v226 = vrot.slane %v225, 2
    %v227 = vadd.f32 %v225, %v226
    %v228 = vrot.slane %v227, 1
    %v229 = vadd.f32 %v227, %v228
    %v230 = vrcp.pop 2.0
    %v231 = vmul.f32 %v229, %v230
    %v232 = vsub.f32 %v221, %v231
    %v233 = vmul.f32 %v232, %v232
    %v234 = vsel %vm222, %v233, 0.0
    %v235 = vrot.slane %v234, 4
    %v236 = vadd.f32 %v234, %v235
    %v237 = vrot.slane %v236, 2
    %v238 = vadd.f32 %v236, %v237
    %v239 = vrot.slane %v238, 1
    %v240 = vadd.f32 %v238, %v239
    %v241 = vmul.f32 %v240, %v230
    %v242 = vadd.f32 %v241, 1e-05
    %v243 = vrsqrt.pop %v242
    %v244 = vmul.f32 %v232, %v243
    %v245 = vld [vmem:[%s2 + $0x1] sm:$0x1]
    %v246 = vlaneseq
    %v247 = vshrl.u32 %v246, 7
    %v248 = vsub.s32 0, %v247
    %v249 = vrot.slane %v245, %v248
    %v250 = vmul.f32 %v244, %v249
    %v251 = vld [vmem:[%s2 + $0x2] sm:$0x1]
    %v252 = vlaneseq
    %v253 = vshrl.u32 %v252, 7
    %v254 = vsub.s32 0, %v253
    %v255 = vrot.slane %v251, %v254
    %v256 = vadd.f32 %v250, %v255
    %v257 = vpack.c.bf16 %v256, %v256
    %v258 = vld [vmem:[%s3] sm:$0xf]
    %v259 = vld [vmem:[%s3 + $0x4] sm:$0xf]
    %v260 = vld [vmem:[%s3 + $0x8] sm:$0xf]
    %v261 = vld [vmem:[%s3 + $0xc] sm:$0xf]
    %v262 = vld [vmem:[%s3 + $0x10] sm:$0xf]
    %v263 = vld [vmem:[%s3 + $0x14] sm:$0xf]
    %v264 = vld [vmem:[%s3 + $0x18] sm:$0xf]
    %v265 = vld [vmem:[%s3 + $0x1c] sm:$0xf]
    %v266 = vld [vmem:[%s3 + $0x20] sm:$0xf]
    %v267 = vld [vmem:[%s3 + $0x24] sm:$0xf]
    %v268 = vld [vmem:[%s3 + $0x28] sm:$0xf]
    %v269 = vld [vmem:[%s3 + $0x2c] sm:$0xf]
    %v270 = vld [vmem:[%s3 + $0x30] sm:$0xf]
    %v271 = vld [vmem:[%s3 + $0x34] sm:$0xf]
    %v272 = vld [vmem:[%s3 + $0x38] sm:$0xf]
    %v273 = vld [vmem:[%s3 + $0x3c] sm:$0xf]
    %v274 = vld [vmem:[%s4] sm:$0x1]
    %v276 = vlaneseq
    %v277 = vshrl.u32 %v276, 7
    %v278 = vsub.s32 0, %v277
    %v279 = vrot.slane %v274, %v278
    %v297 = vunpack.c.l.b16 %v258
    %v298 = vunpack.c.l.b16 %v259
    %v299 = vunpack.c.l.b16 %v260
    %v300 = vunpack.c.l.b16 %v261
    %v301 = vunpack.c.l.b16 %v262
    %v302 = vunpack.c.l.b16 %v263
    %v303 = vunpack.c.l.b16 %v264
    %v304 = vunpack.c.l.b16 %v265
    %v305 = vunpack.c.l.b16 %v266
    %v306 = vunpack.c.l.b16 %v267
    %v307 = vunpack.c.l.b16 %v268
    %v308 = vunpack.c.l.b16 %v269
    %v309 = vunpack.c.l.b16 %v270
    %v310 = vunpack.c.l.b16 %v271
    %v311 = vunpack.c.l.b16 %v272
    %v312 = vunpack.c.l.b16 %v273
    %v313 = vpack.c.b16 %v298, %v297
    %v314 = vpack.c.b16 %v300, %v299
    %v315 = vpack.c.b16 %v302, %v301
    %v316 = vpack.c.b16 %v304, %v303
    %v317 = vpack.c.b16 %v306, %v305
    %v318 = vpack.c.b16 %v308, %v307
    %v319 = vpack.c.b16 %v310, %v309
    %v320 = vpack.c.b16 %v312, %v311
    %329 = vmatprep.subr.bf16.mxu0 0
    %330 = vmatpush1.bf16.msra.mxu0 %v313
    %331 = vmatprep.subr.bf16.mxu0 0
    %332 = vmatpush1.bf16.msra.mxu0 %v314
    %333 = vmatprep.subr.bf16.mxu0 0
    %334 = vmatpush1.bf16.msra.mxu0 %v315
    %335 = vmatprep.subr.bf16.mxu0 0
    %336 = vmatpush1.bf16.msra.mxu0 %v316
    %337 = vmatprep.subr.bf16.mxu0 0
    %338 = vmatpush1.bf16.msra.mxu0 %v317
    %339 = vmatprep.subr.bf16.mxu0 0
    %340 = vmatpush1.bf16.msra.mxu0 %v318
    %341 = vmatprep.subr.bf16.mxu0 0
    %342 = vmatpush1.bf16.msra.mxu0 %v319
    %343 = vmatprep.subr.bf16.mxu0 0
    %344 = vmatpush1.bf16.msra.mxu0 %v320
    %345 = vmatprep.subr.bf16.mxu0 0
    %346 = vmatpush1.bf16.msra.mxu0 0
    %347 = vmatprep.subr.bf16.mxu0 0
    %348 = vmatpush1.bf16.msra.mxu0 0
    %349 = vmatprep.subr.bf16.mxu0 0
    %350 = vmatpush1.bf16.msra.mxu0 0
    %351 = vmatprep.subr.bf16.mxu0 0
    %352 = vmatpush1.bf16.msra.mxu0 0
    %353 = vmatprep.subr.bf16.mxu0 0
    %354 = vmatpush1.bf16.msra.mxu0 0
    %355 = vmatprep.subr.bf16.mxu0 0
    %356 = vmatpush1.bf16.msra.mxu0 0
    %357 = vmatprep.subr.bf16.mxu0 0
    %358 = vmatpush1.bf16.msra.mxu0 0
    %359 = vmatprep.subr.bf16.mxu0 0
    %360 = vmatpush1.bf16.msra.mxu0 0
    %361 = vmatprep.mubr.bf16.mxu0 0
    %362 = vmatmul.mubr.bf16.gmra.mrb[0].mxu0 %v257
    %v363 = vpop.f32.mrb[0].mxu0
    %v364 = vadd.f32 %v279, %v363
    %v365 = vpop.f32.mrb[0].mxu0
    %v366 = vpop.f32.mrb[0].mxu0
    %v367 = vpop.f32.mrb[0].mxu0
    %368 = vdwg.mxu0
    %vm369 = vcmask 25600
    %370 = vst.msk [vmem:[#allocation2] sm:$0x3] %vm369, %v364
    // Predicated region
    $region22: #{adv_net_forward.3} parent=1 // pred_check
      _
    $region23: #{adv_net_forward.3} parent=1 // pred_check_branch
      %372 = sbr.rel (0) target = $region25
    $region24: #{adv_net_forward.3} parent=1 // pred_region
      %s374 = ssub.s32 32, 32
      %375 = vsyncadd [#allocation3], %s374
      %s377 = sshll.u32 [#allocation2], 4
      %s378 = int_to_ptr.vmem [resolvable:$true] %s377
      %380 = dma.vmem_to_hbm [thread:$0]  %s378, 32, %s5, [#allocation3]
    $region25: #{adv_net_forward.3} parent=1 // pred_fallthru
      _
    // Predicated region
    $region26: #{adv_net_forward.3} parent=1 // pred_check
      _
    $region27: #{adv_net_forward.3} parent=1 // pred_check_branch
      %382 = sbr.rel (0) target = $region29
    $region28: #{adv_net_forward.3} parent=1 // pred_region
      %383 = dma.done [#allocation3], 32
    $region29: #{adv_net_forward.3} parent=1 // pred_fallthru
      _
    %384 = vsyncpa [#allocation3], 1

// kernel: adv_net_forward.2
$region0: #{adv_net_forward.2}
  #allocation0 [shape = 'u32[]', space=smem, size = 0x4, offset = 0x4, fixed_abs, tag = 'smem constant byte address 0x4 - core index']
  #allocation1 [shape = 'u32[144,128]{1,0:T(1,128)}', space=vmem, size = 0x12000, scoped, tag = 'internal scratch']
  #allocation2 [shape = 'bf16[288,384]{1,0:T(16,128)(2,1)}', space=vmem, size = 0x36000, scoped, tag = 'scratch operand']
  #allocation3 [shape = 'f32[256,128]{1,0:T(8,128)}', space=vmem, size = 0x20000, scoped, tag = 'scratch operand']
  %s0 = inlined_call_operand.vmem [shape: bf16[2,16,16,128], index: 0, kind: input, shape index: {}, may-alias: {0,1,2}]
  %s1 = inlined_call_operand.vmem [shape: bf16[2,16,16,128], index: 1, kind: input, shape index: {}, may-alias: {0,1,2}]
  %s2 = inlined_call_operand.vmem [shape: bf16[2,16,16,128], index: 2, kind: input, shape index: {}, may-alias: {0,1,2}]
  %s3 = inlined_call_operand.vmem [shape: bf16[3,384,128], index: 3, kind: input, shape index: {}]
  %s4 = inlined_call_operand.vmem [shape: f32[1,128], index: 4, kind: input, shape index: {}]
  %s5 = inlined_call_operand.hbm [shape: f32[2,16,16,128], index: 5, kind: output, shape index: {}]
  %s6 = sld [smem:[#allocation0]]
  $region69: #{adv_net_forward.2} parent=0
    _
  %s8 = ssub.s32 1, %s6
  %s9 = scalar_select 0, %s8, %s6
  $region1: #{adv_net_forward.2} parent=0
    #allocation4 [shape = 'u8[262144]{0}', space=vmem, size = 0x40000, scoped, tag = 'output window, operand 0']
    #allocation5 [shape = 's32[2]{0}', space=sflag, size = 0x8, scoped, tag = 'scoped memory for adv_net_forward.2']
    %10 = vsyncpa [#allocation5], 0
    %s11 = scalar_lea.sflag [#allocation5], 1
    %12 = vsyncpa %s11, 0
    loop: start=0, step=1, limit=4
    $region2: #{adv_net_forward.2} parent=1 // loop_pre_header
      _
    $region3: #{adv_net_forward.2} parent=1 // loop_header
      %s14 = sphi 0, %s18
      %p15 = scmp.ge.s32.totalorder %s14, 4
      %s21 = sphi 0, %s33
      %s22 = sphi 0, %s29
      %s23 = sphi 0, %s21
      %s24 = sphi 0, %s22
      %s25 = sphi 0, %s23
      %s26 = sphi 0, %s24
      %s38 = sphi 0, %s40
      %s41 = sphi 0, %s38
      %s42 = sphi 0, %s41
      %s58 = sphi 0, %s42
      %s74 = sphi 0, %s76
      %s77 = sphi 0, %s74
      %s78 = sphi 0, %s77
      %s94 = sphi 0, %s78
      %s110 = sphi 0, %s112
      %s113 = sphi 0, %s110
      %s114 = sphi 0, %s113
      %s130 = sphi 0, %s114
      %s134 = sphi 0, %s134
      %s136 = sphi 0, %s134
      %s137 = sphi 0, %s136
      %s151 = sphi 0, %s137
      %s155 = sphi 0, %s155
      %s157 = sphi 0, %s155
      %s158 = sphi 0, %s157
      %s172 = sphi 0, %s158
      %s180 = sphi 0, %s182
      %s183 = sphi 0, %s180
      %s184 = sphi 0, %s183
      %s200 = sphi 0, %s184
    $region4: #{adv_net_forward.2} parent=1 // loop_header_branch
      %17 = sbr.rel (%p15) target = $region8
    $region5: #{adv_net_forward.2} parent=1 // loop_body
      %s19 = ssub.s32 %s14, 1
      %s20 = ssub.s32 %s14, 2
      %s27 = sadd.s32 1, %s22
      %p28 = scmp.ge.s32.totalorder %s27, 1
      %s29 = scalar_select %p28, 0, %s27
      %s30 = sadd.s32 1, %s21
      %s31 = scalar_select %p28, %s30, %s21
      %p32 = scmp.ge.s32.totalorder %s31, 2
      %s33 = scalar_select %p32, 0, %s31
      %s34 = ssub.s32 %s21, %s33
      %s35 = ssub.s32 %s22, %s29
      %s36 = sor.u32 %s34, %s35
      %p37 = scmp.eq.s32.totalorder %s36, 0
      %s39 = sadd.s32 %s38, 1
      %s40 = scalar_select %p37, %s38, %s39
      %p43 = pneg %p37
      %p44 = scmp.eq.s32.totalorder %s14, 1
      %p45 = por %p43, %p44
      %p46 = scmp.ne.s32.totalorder %s38, %s41
      %p47 = scmp.eq.s32.totalorder %s14, 0
      %p48 = por %p46, %p47
      %p49 = scmp.ne.s32.totalorder %s38, %s41
      %p50 = scmp.eq.s32.totalorder %s19, 1
      %p51 = por %p49, %p50
      %p52 = scmp.ne.s32.totalorder %s41, %s42
      %p53 = scmp.eq.s32.totalorder %s19, 0
      %p54 = por %p52, %p53
      %p55 = scmp.ne.s32.totalorder %s41, %s42
      %p56 = scmp.eq.s32.totalorder %s20, 1
      %p57 = por %p55, %p56
      %p59 = scmp.ne.s32.totalorder %s42, %s58
      %p60 = scmp.eq.s32.totalorder %s20, 0
      %p61 = por %p59, %p60
      %s62 = smul.u32 %s22, 16
      %s63 = ssub.s32 %s62, 1
      %p64 = scmp.gt.s32.totalorder %s63, 0
      %s65 = scalar_select %p64, %s63, 0
      %s66 = smul.u32 %s29, 16
      %s67 = ssub.s32 %s66, 1
      %p68 = scmp.gt.s32.totalorder %s67, 0
      %s69 = scalar_select %p68, %s67, 0
      %s70 = ssub.s32 %s21, %s33
      %s71 = ssub.s32 %s65, %s69
      %s72 = sor.u32 %s70, %s71
      %p73 = scmp.eq.s32.totalorder %s72, 0
      %s75 = sadd.s32 %s74, 1
      %s76 = scalar_select %p73, %s74, %s75
      %p79 = pneg %p73
      %p80 = scmp.eq.s32.totalorder %s14, 1
      %p81 = por %p79, %p80
      %p82 = scmp.ne.s32.totalorder %s74, %s77
      %p83 = scmp.eq.s32.totalorder %s14, 0
      %p84 = por %p82, %p83
      %p85 = scmp.ne.s32.totalorder %s74, %s77
      %p86 = scmp.eq.s32.totalorder %s19, 1
      %p87 = por %p85, %p86
      %p88 = scmp.ne.s32.totalorder %s77, %s78
      %p89 = scmp.eq.s32.totalorder %s19, 0
      %p90 = por %p88, %p89
      %p91 = scmp.ne.s32.totalorder %s77, %s78
      %p92 = scmp.eq.s32.totalorder %s20, 1
      %p93 = por %p91, %p92
      %p95 = scmp.ne.s32.totalorder %s78, %s94
      %p96 = scmp.eq.s32.totalorder %s20, 0
      %p97 = por %p95, %p96
      %s98 = smul.u32 %s22, 16
      %s99 = sadd.s32 %s98, 16
      %p100 = scmp.lt.s32.totalorder %s99, 15
      %s101 = scalar_select %p100, %s99, 15
      %s102 = smul.u32 %s29, 16
      %s103 = sadd.s32 %s102, 16
      %p104 = scmp.lt.s32.totalorder %s103, 15
      %s105 = scalar_select %p104, %s103, 15
      %s106 = ssub.s32 %s21, %s33
      %s107 = ssub.s32 %s101, %s105
      %s108 = sor.u32 %s106, %s107
      %p109 = scmp.eq.s32.totalorder %s108, 0
      %s111 = sadd.s32 %s110, 1
      %s112 = scalar_select %p109, %s110, %s111
      %p115 = pneg %p109
      %p116 = scmp.eq.s32.totalorder %s14, 1
      %p117 = por %p115, %p116
      %p118 = scmp.ne.s32.totalorder %s110, %s113
      %p119 = scmp.eq.s32.totalorder %s14, 0
      %p120 = por %p118, %p119
      %p121 = scmp.ne.s32.totalorder %s110, %s113
      %p122 = scmp.eq.s32.totalorder %s19, 1
      %p123 = por %p121, %p122
      %p124 = scmp.ne.s32.totalorder %s113, %s114
      %p125 = scmp.eq.s32.totalorder %s19, 0
      %p126 = por %p124, %p125
      %p127 = scmp.ne.s32.totalorder %s113, %s114
      %p128 = scmp.eq.s32.totalorder %s20, 1
      %p129 = por %p127, %p128
      %p131 = scmp.ne.s32.totalorder %s114, %s130
      %p132 = scmp.eq.s32.totalorder %s20, 0
      %p133 = por %p131, %p132
      %s135 = sadd.s32 %s134, 1
      %p138 = scmp.eq.s32.totalorder %s14, 1
      %p139 = scmp.ne.s32.totalorder %s134, %s136
      %p140 = scmp.eq.s32.totalorder %s14, 0
      %p141 = por %p139, %p140
      %p142 = scmp.ne.s32.totalorder %s134, %s136
      %p143 = scmp.eq.s32.totalorder %s19, 1
      %p144 = por %p142, %p143
      %p145 = scmp.ne.s32.totalorder %s136, %s137
      %p146 = scmp.eq.s32.totalorder %s19, 0
      %p147 = por %p145, %p146
      %p148 = scmp.ne.s32.totalorder %s136, %s137
      %p149 = scmp.eq.s32.totalorder %s20, 1
      %p150 = por %p148, %p149
      %p152 = scmp.ne.s32.totalorder %s137, %s151
      %p153 = scmp.eq.s32.totalorder %s20, 0
      %p154 = por %p152, %p153
      %s156 = sadd.s32 %s155, 1
      %p159 = scmp.eq.s32.totalorder %s14, 1
      %p160 = scmp.ne.s32.totalorder %s155, %s157
      %p161 = scmp.eq.s32.totalorder %s14, 0
      %p162 = por %p160, %p161
      %p163 = scmp.ne.s32.totalorder %s155, %s157
      %p164 = scmp.eq.s32.totalorder %s19, 1
      %p165 = por %p163, %p164
      %p166 = scmp.ne.s32.totalorder %s157, %s158
      %p167 = scmp.eq.s32.totalorder %s19, 0
      %p168 = por %p166, %p167
      %p169 = scmp.ne.s32.totalorder %s157, %s158
      %p170 = scmp.eq.s32.totalorder %s20, 1
      %p171 = por %p169, %p170
      %p173 = scmp.ne.s32.totalorder %s158, %s172
      %p174 = scmp.eq.s32.totalorder %s20, 0
      %p175 = por %p173, %p174
      %s176 = ssub.s32 %s21, %s33
      %s177 = ssub.s32 %s22, %s29
      %s178 = sor.u32 %s176, %s177
      %p179 = scmp.eq.s32.totalorder %s178, 0
      %s181 = sadd.s32 %s180, 1
      %s182 = scalar_select %p179, %s180, %s181
      %p185 = pneg %p179
      %p186 = scmp.eq.s32.totalorder %s14, 1
      %p187 = por %p185, %p186
      %p188 = scmp.ne.s32.totalorder %s180, %s183
      %p189 = scmp.eq.s32.totalorder %s14, 0
      %p190 = por %p188, %p189
      %p191 = scmp.ne.s32.totalorder %s180, %s183
      %p192 = scmp.eq.s32.totalorder %s19, 1
      %p193 = por %p191, %p192
      %p194 = scmp.ne.s32.totalorder %s183, %s184
      %p195 = scmp.eq.s32.totalorder %s19, 0
      %p196 = por %p194, %p195
      %p197 = scmp.ne.s32.totalorder %s183, %s184
      %p198 = scmp.eq.s32.totalorder %s20, 1
      %p199 = por %p197, %p198
      %p201 = scmp.ne.s32.totalorder %s184, %s200
      %p202 = scmp.eq.s32.totalorder %s20, 0
      %p203 = por %p201, %p202
      %p204 = scmp.le.s32.totalorder 1, %s14
      %p205 = scmp.lt.s32.totalorder %s14, 3
      %p206 = pnand %p204, %p205
      %p207 = pneg %p206
      // Predicated region
      $region9: #{adv_net_forward.2} parent=5 // pred_check
        _
      $region10: #{adv_net_forward.2} parent=5 // pred_check_branch
        %209 = sbr.rel (%p206) target = $region12
      $region11: #{adv_net_forward.2} parent=5 // pred_region
        %s210 = ssub.s32 %s14, 1
        // Predicated region
        $region13: #{adv_net_forward.2} parent=11 // pred_check
          %p211 = pneg %p147
        $region14: #{adv_net_forward.2} parent=11 // pred_check_branch
          %213 = sbr.rel (%p211) target = $region16
        $region15: #{adv_net_forward.2} parent=11 // pred_region
          _
        $region16: #{adv_net_forward.2} parent=11 // pred_fallthru
          _
        // Predicated region
        $region17: #{adv_net_forward.2} parent=11 // pred_check
          %p214 = pneg %p168
        $region18: #{adv_net_forward.2} parent=11 // pred_check_branch
          %216 = sbr.rel (%p214) target = $region20
        $region19: #{adv_net_forward.2} parent=11 // pred_region
          _
        $region20: #{adv_net_forward.2} parent=11 // pred_fallthru
          _
      $region12: #{adv_net_forward.2} parent=5 // pred_fallthru
        _
      %p217 = scmp.lt.s32.totalorder %s14, 2
      // Predicated region
      $region21: #{adv_net_forward.2} parent=5 // pred_check
        %p218 = pneg %p217
      $region22: #{adv_net_forward.2} parent=5 // pred_check_branch
        %220 = sbr.rel (%p218) target = $region24
      $region23: #{adv_net_forward.2} parent=5 // pred_region
        // Predicated region
        $region25: #{adv_net_forward.2} parent=23 // pred_check
          %p221 = pneg %p48
        $region26: #{adv_net_forward.2} parent=23 // pred_check_branch
          %223 = sbr.rel (%p221) target = $region28
        $region27: #{adv_net_forward.2} parent=23 // pred_region
          %s224 = smul.u32 16, %s22
          %p225 = scmp.lt.s32.totalorder %s21, 1
          %s226 = scalar_select %p225, %s21, 1
          %p227 = scmp.lt.s32.totalorder %s224, 15
          %s228 = scalar_select %p227, %s224, 15
          %s229 = smul.addr %s228, 2
          %s230 = smul.addr %s226, 32
          %s231 = sadd.s32 %s229, %s230
          %s232 = smul.addr %s231, 4
          %s233 = scalar_lea.vmem %s0, %s232
          %s234 = smul.u32 16, %s22
        $region28: #{adv_net_forward.2} parent=23 // pred_fallthru
          _
        // Predicated region
        $region29: #{adv_net_forward.2} parent=23 // pred_check
          %p235 = pneg %p84
        $region30: #{adv_net_forward.2} parent=23 // pred_check_branch
          %237 = sbr.rel (%p235) target = $region32
        $region31: #{adv_net_forward.2} parent=23 // pred_region
          %s238 = smul.u32 %s22, 16
          %s239 = ssub.s32 %s238, 1
          %p240 = scmp.gt.s32.totalorder %s239, 0
          %s241 = scalar_select %p240, %s239, 0
          %p242 = scmp.lt.s32.totalorder %s21, 1
          %s243 = scalar_select %p242, %s21, 1
          %p244 = scmp.lt.s32.totalorder %s241, 15
          %s245 = scalar_select %p244, %s241, 15
          %s246 = smul.addr %s245, 2
          %s247 = smul.addr %s243, 32
          %s248 = sadd.s32 %s246, %s247
          %s249 = smul.addr %s248, 4
          %s250 = scalar_lea.vmem %s1, %s249
          %s251 = smul.u32 %s22, 16
          %s252 = ssub.s32 %s251, 1
          %p253 = scmp.gt.s32.totalorder %s252, 0
          %s254 = scalar_select %p253, %s252, 0
        $region32: #{adv_net_forward.2} parent=23 // pred_fallthru
          _
        // Predicated region
        $region33: #{adv_net_forward.2} parent=23 // pred_check
          %p255 = pneg %p120
        $region34: #{adv_net_forward.2} parent=23 // pred_check_branch
          %257 = sbr.rel (%p255) target = $region36
        $region35: #{adv_net_forward.2} parent=23 // pred_region
          %s258 = smul.u32 %s22, 16
          %s259 = sadd.s32 %s258, 16
          %p260 = scmp.lt.s32.totalorder %s259, 15
          %s261 = scalar_select %p260, %s259, 15
          %p262 = scmp.lt.s32.totalorder %s21, 1
          %s263 = scalar_select %p262, %s21, 1
          %p264 = scmp.lt.s32.totalorder %s261, 15
          %s265 = scalar_select %p264, %s261, 15
          %s266 = smul.addr %s265, 2
          %s267 = smul.addr %s263, 32
          %s268 = sadd.s32 %s266, %s267
          %s269 = smul.addr %s268, 4
          %s270 = scalar_lea.vmem %s2, %s269
          %s271 = smul.u32 %s22, 16
          %s272 = sadd.s32 %s271, 16
          %p273 = scmp.lt.s32.totalorder %s272, 15
          %s274 = scalar_select %p273, %s272, 15
        $region36: #{adv_net_forward.2} parent=23 // pred_fallthru
          _
      $region24: #{adv_net_forward.2} parent=5 // pred_fallthru
        _
      %p275 = scmp.le.s32.totalorder 1, %s14
      %p276 = scmp.lt.s32.totalorder %s14, 3
      %p277 = pnand %p275, %p276
      %p278 = pneg %p277
      // Predicated region
      $region37: #{adv_net_forward.2} parent=5 // pred_check
        _
      $region38: #{adv_net_forward.2} parent=5 // pred_check_branch
        %280 = sbr.rel (%p277) target = $region40
      $region39: #{adv_net_forward.2} parent=5 // pred_region
        %s281 = ssub.s32 %s14, 1
        %s282 = smul.u32 16, %s24
        %p283 = scmp.lt.s32.totalorder %s23, 1
        %s284 = scalar_select %p283, %s23, 1
        %p285 = scmp.lt.s32.totalorder %s282, 15
        %s286 = scalar_select %p285, %s282, 15
        %s287 = smul.addr %s286, 2
        %s288 = smul.addr %s284, 32
        %s289 = sadd.s32 %s287, %s288
        %s290 = smul.addr %s289, 4
        %s291 = scalar_lea.vmem %s0, %s290
        %p292 = pneg %p54
        %p293 = pneg %p51
        %s294 = smul.u32 %s24, 16
        %s295 = ssub.s32 %s294, 1
        %p296 = scmp.gt.s32.totalorder %s295, 0
        %s297 = scalar_select %p296, %s295, 0
        %p298 = scmp.lt.s32.totalorder %s23, 1
        %s299 = scalar_select %p298, %s23, 1
        %p300 = scmp.lt.s32.totalorder %s297, 15
        %s301 = scalar_select %p300, %s297, 15
        %s302 = smul.addr %s301, 2
        %s303 = smul.addr %s299, 32
        %s304 = sadd.s32 %s302, %s303
        %s305 = smul.addr %s304, 4
        %s306 = scalar_lea.vmem %s1, %s305
        %p307 = pneg %p90
        %p308 = pneg %p87
        %s309 = smul.u32 %s24, 16
        %s310 = sadd.s32 %s309, 16
        %p311 = scmp.lt.s32.totalorder %s310, 15
        %s312 = scalar_select %p311, %s310, 15
        %p313 = scmp.lt.s32.totalorder %s23, 1
        %s314 = scalar_select %p313, %s23, 1
        %p315 = scmp.lt.s32.totalorder %s312, 15
        %s316 = scalar_select %p315, %s312, 15
        %s317 = smul.addr %s316, 2
        %s318 = smul.addr %s314, 32
        %s319 = sadd.s32 %s317, %s318
        %s320 = smul.addr %s319, 4
        %s321 = scalar_lea.vmem %s2, %s320
        %p322 = pneg %p126
        %p323 = pneg %p123
        %p324 = pneg %p147
        %p325 = pneg %p144
        %p326 = pneg %p168
        %p327 = pneg %p165
        %p328 = pneg %p196
        %p329 = pneg %p193
        %s330 = sand.u32 %s183, 1
        %s331 = scalar_lea.sflag [#allocation5], %s330
        %s332 = sand.u32 %s183, 1
        %s333 = smul.addr %s332, 256
        %s334 = scalar_lea.vmem [#allocation4], %s333
        %s335 = smul.u32 16, %s24
        %p336 = scmp.lt.s32.totalorder %s23, 1
        %s337 = scalar_select %p336, %s23, 1
        %p338 = scmp.lt.s32.totalorder %s335, 15
        %s339 = scalar_select %p338, %s335, 15
        %s340 = smul.addr %s339, 2
        %s341 = smul.addr %s337, 32
        %s342 = sadd.s32 %s340, %s341
        %s343 = smul.addr %s342, 4
        %s344 = scalar_lea.vmem %s0, %s343
        %s345 = smul.u32 16, %s24
        %s346 = smul.u32 %s24, 16
        %s347 = ssub.s32 %s346, 1
        %p348 = scmp.gt.s32.totalorder %s347, 0
        %s349 = scalar_select %p348, %s347, 0
        %p350 = scmp.lt.s32.totalorder %s23, 1
        %s351 = scalar_select %p350, %s23, 1
        %p352 = scmp.lt.s32.totalorder %s349, 15
        %s353 = scalar_select %p352, %s349, 15
        %s354 = smul.addr %s353, 2
        %s355 = smul.addr %s351, 32
        %s356 = sadd.s32 %s354, %s355
        %s357 = smul.addr %s356, 4
        %s358 = scalar_lea.vmem %s1, %s357
        %s359 = smul.u32 %s24, 16
        %s360 = ssub.s32 %s359, 1
        %p361 = scmp.gt.s32.totalorder %s360, 0
        %s362 = scalar_select %p361, %s360, 0
        %s363 = smul.u32 %s24, 16
        %s364 = sadd.s32 %s363, 16
        %p365 = scmp.lt.s32.totalorder %s364, 15
        %s366 = scalar_select %p365, %s364, 15
        %p367 = scmp.lt.s32.totalorder %s23, 1
        %s368 = scalar_select %p367, %s23, 1
        %p369 = scmp.lt.s32.totalorder %s366, 15
        %s370 = scalar_select %p369, %s366, 15
        %s371 = smul.addr %s370, 2
        %s372 = smul.addr %s368, 32
        %s373 = sadd.s32 %s371, %s372
        %s374 = smul.addr %s373, 4
        %s375 = scalar_lea.vmem %s2, %s374
        %s376 = smul.u32 %s24, 16
        %s377 = sadd.s32 %s376, 16
        %p378 = scmp.lt.s32.totalorder %s377, 15
        %s379 = scalar_select %p378, %s377, 15
        %s380 = smul.u32 16, %s24
        %v382 = vld [vmem:[%s344] sm:$0xf]
        %v383 = vld [vmem:[%s344 + $0x4] sm:$0xf]
        %v384 = vld [vmem:[%s344 + $0x8] sm:$0xf]
        %v385 = vld [vmem:[%s344 + $0xc] sm:$0xf]
        %v386 = vld [vmem:[%s344 + $0x10] sm:$0xf]
        %v387 = vld [vmem:[%s344 + $0x14] sm:$0xf]
        %v388 = vld [vmem:[%s344 + $0x18] sm:$0xf]
        %v389 = vld [vmem:[%s344 + $0x1c] sm:$0xf]
        %v390 = vld [vmem:[%s344 + $0x20] sm:$0xf]
        %v391 = vld [vmem:[%s344 + $0x24] sm:$0xf]
        %v392 = vld [vmem:[%s344 + $0x28] sm:$0xf]
        %v393 = vld [vmem:[%s344 + $0x2c] sm:$0xf]
        %v394 = vld [vmem:[%s344 + $0x30] sm:$0xf]
        %v395 = vld [vmem:[%s344 + $0x34] sm:$0xf]
        %v396 = vld [vmem:[%s344 + $0x38] sm:$0xf]
        %v397 = vld [vmem:[%s344 + $0x3c] sm:$0xf]
        %v398 = vld [vmem:[%s344 + $0x40] sm:$0xf]
        %v399 = vld [vmem:[%s344 + $0x44] sm:$0xf]
        %v400 = vld [vmem:[%s344 + $0x48] sm:$0xf]
        %v401 = vld [vmem:[%s344 + $0x4c] sm:$0xf]
        %v402 = vld [vmem:[%s344 + $0x50] sm:$0xf]
        %v403 = vld [vmem:[%s344 + $0x54] sm:$0xf]
        %v404 = vld [vmem:[%s344 + $0x58] sm:$0xf]
        %v405 = vld [vmem:[%s344 + $0x5c] sm:$0xf]
        %v406 = vld [vmem:[%s344 + $0x60] sm:$0xf]
        %v407 = vld [vmem:[%s344 + $0x64] sm:$0xf]
        %v408 = vld [vmem:[%s344 + $0x68] sm:$0xf]
        %v409 = vld [vmem:[%s344 + $0x6c] sm:$0xf]
        %v410 = vld [vmem:[%s344 + $0x70] sm:$0xf]
        %v411 = vld [vmem:[%s344 + $0x74] sm:$0xf]
        %v412 = vld [vmem:[%s344 + $0x78] sm:$0xf]
        %v413 = vld [vmem:[%s344 + $0x7c] sm:$0xf]
        %v446 = vunpack.c.l.b16 %v382
        %v447 = vunpack.c.l.b16 %v383
        %v448 = vunpack.c.l.b16 %v384
        %v449 = vunpack.c.l.b16 %v385
        %v450 = vunpack.c.l.b16 %v386
        %v451 = vunpack.c.l.b16 %v387
        %v452 = vunpack.c.l.b16 %v388
        %v453 = vunpack.c.l.b16 %v389
        %v454 = vunpack.c.l.b16 %v390
        %v455 = vunpack.c.l.b16 %v391
        %v456 = vunpack.c.l.b16 %v392
        %v457 = vunpack.c.l.b16 %v393
        %v458 = vunpack.c.l.b16 %v394
        %v459 = vunpack.c.l.b16 %v395
        %v460 = vunpack.c.l.b16 %v396
        %v461 = vunpack.c.l.b16 %v397
        %v462 = vunpack.c.l.b16 %v398
        %v463 = vunpack.c.l.b16 %v399
        %v464 = vunpack.c.l.b16 %v400
        %v465 = vunpack.c.l.b16 %v401
        %v466 = vunpack.c.l.b16 %v402
        %v467 = vunpack.c.l.b16 %v403
        %v468 = vunpack.c.l.b16 %v404
        %v469 = vunpack.c.l.b16 %v405
        %v470 = vunpack.c.l.b16 %v406
        %v471 = vunpack.c.l.b16 %v407
        %v472 = vunpack.c.l.b16 %v408
        %v473 = vunpack.c.l.b16 %v409
        %v474 = vunpack.c.l.b16 %v410
        %v475 = vunpack.c.l.b16 %v411
        %v476 = vunpack.c.l.b16 %v412
        %v477 = vunpack.c.l.b16 %v413
        %v478 = vpack.c.b16 %v447, %v446
        %v479 = vpack.c.b16 %v449, %v448
        %v480 = vpack.c.b16 %v451, %v450
        %v481 = vpack.c.b16 %v453, %v452
        %v482 = vpack.c.b16 %v455, %v454
        %v483 = vpack.c.b16 %v457, %v456
        %v484 = vpack.c.b16 %v459, %v458
        %v485 = vpack.c.b16 %v461, %v460
        %v486 = vpack.c.b16 %v463, %v462
        %v487 = vpack.c.b16 %v465, %v464
        %v488 = vpack.c.b16 %v467, %v466
        %v489 = vpack.c.b16 %v469, %v468
        %v490 = vpack.c.b16 %v471, %v470
        %v491 = vpack.c.b16 %v473, %v472
        %v492 = vpack.c.b16 %v475, %v474
        %v493 = vpack.c.b16 %v477, %v476
        %510 = vst [vmem:[#allocation2 + $0x20] sm:$0xff] %v478
        %511 = vst [vmem:[#allocation2 + $0x38] sm:$0xff] %v479
        %512 = vst [vmem:[#allocation2 + $0x50] sm:$0xff] %v480
        %513 = vst [vmem:[#allocation2 + $0x68] sm:$0xff] %v481
        %514 = vst [vmem:[#allocation2 + $0x80] sm:$0xff] %v482
        %515 = vst [vmem:[#allocation2 + $0x98] sm:$0xff] %v483
        %516 = vst [vmem:[#allocation2 + $0xb0] sm:$0xff] %v484
        %517 = vst [vmem:[#allocation2 + $0xc8] sm:$0xff] %v485
        %518 = vst [vmem:[#allocation2 + $0xe0] sm:$0xff] %v486
        %519 = vst [vmem:[#allocation2 + $0xf8] sm:$0xff] %v487
        %520 = vst [vmem:[#allocation2 + $0x110] sm:$0xff] %v488
        %521 = vst [vmem:[#allocation2 + $0x128] sm:$0xff] %v489
        %522 = vst [vmem:[#allocation2 + $0x140] sm:$0xff] %v490
        %523 = vst [vmem:[#allocation2 + $0x158] sm:$0xff] %v491
        %524 = vst [vmem:[#allocation2 + $0x170] sm:$0xff] %v492
        %525 = vst [vmem:[#allocation2 + $0x188] sm:$0xff] %v493
        %p526 = scmp.eq.s32.totalorder %s24, 0
        // Predicated region
        $region41: #{adv_net_forward.2} parent=39 // pred_check
          %p527 = pneg %p526
        $region42: #{adv_net_forward.2} parent=39 // pred_check_branch
          %529 = sbr.rel (%p527) target = $region44
        $region43: #{adv_net_forward.2} parent=39 // pred_region
          %530 = vst [vmem:[#allocation2 + $0x8] sm:$0xff] 0
        $region44: #{adv_net_forward.2} parent=39 // pred_fallthru
          _
        %p531 = scmp.gt.s32.totalorder %s24, 0
        // Predicated region
        $region45: #{adv_net_forward.2} parent=39 // pred_check
          %p532 = pneg %p531
        $region46: #{adv_net_forward.2} parent=39 // pred_check_branch
          %534 = sbr.rel (%p532) target = $region48
        $region47: #{adv_net_forward.2} parent=39 // pred_region
          %v535 = vld [vmem:[%s358] sm:$0xf]
          %v536 = vld [vmem:[%s358 + $0x4] sm:$0xf]
          %v539 = vunpack.c.l.b16 %v535
          %v540 = vunpack.c.l.b16 %v536
          %v541 = vpack.c.b16 %v540, %v539
          %543 = vst [vmem:[#allocation2 + $0x8] sm:$0xff] %v541
        $region48: #{adv_net_forward.2} parent=39 // pred_fallthru
          _
        // Predicated region
        $region49: #{adv_net_forward.2} parent=39 // pred_check
          %p544 = pneg %p526
        $region50: #{adv_net_forward.2} parent=39 // pred_check_branch
          %546 = sbr.rel (%p544) target = $region52
        $region51: #{adv_net_forward.2} parent=39 // pred_region
          %547 = vst [vmem:[#allocation2 + $0x1a0] sm:$0xff] 0
        $region52: #{adv_net_forward.2} parent=39 // pred_fallthru
          _
        %p548 = scmp.lt.s32.totalorder %s24, 0
        // Predicated region
        $region53: #{adv_net_forward.2} parent=39 // pred_check
          %p549 = pneg %p548
        $region54: #{adv_net_forward.2} parent=39 // pred_check_branch
          %551 = sbr.rel (%p549) target = $region56
        $region55: #{adv_net_forward.2} parent=39 // pred_region
          %v552 = vld [vmem:[%s375] sm:$0xf]
          %v553 = vld [vmem:[%s375 + $0x4] sm:$0xf]
          %v556 = vunpack.c.l.b16 %v552
          %v557 = vunpack.c.l.b16 %v553
          %v558 = vpack.c.b16 %v557, %v556
          %560 = vst [vmem:[#allocation2 + $0x1a0] sm:$0xff] %v558
        $region56: #{adv_net_forward.2} parent=39 // pred_fallthru
          _
        %v561 = vld [vmem:[#allocation2 + $0x8] sm:$0xff]
        %v562 = vld [vmem:[#allocation2 + $0x20] sm:$0xff]
        %v563 = vld [vmem:[#allocation2 + $0x38] sm:$0xff]
        %v564 = vld [vmem:[#allocation2 + $0x50] sm:$0xff]
        %v565 = vld [vmem:[#allocation2 + $0x68] sm:$0xff]
        %v566 = vld [vmem:[#allocation2 + $0x80] sm:$0xff]
        %v567 = vld [vmem:[#allocation2 + $0x98] sm:$0xff]
        %v568 = vld [vmem:[#allocation2 + $0xb0] sm:$0xff]
        %v569 = vld [vmem:[#allocation2 + $0xc8] sm:$0xff]
        %v570 = vld [vmem:[#allocation2 + $0xe0] sm:$0xff]
        %v571 = vld [vmem:[#allocation2 + $0xf8] sm:$0xff]
        %v572 = vld [vmem:[#allocation2 + $0x110] sm:$0xff]
        %v573 = vld [vmem:[#allocation2 + $0x128] sm:$0xff]
        %v574 = vld [vmem:[#allocation2 + $0x140] sm:$0xff]
        %v575 = vld [vmem:[#allocation2 + $0x158] sm:$0xff]
        %v576 = vld [vmem:[#allocation2 + $0x170] sm:$0xff]
        %v577 = vld [vmem:[#allocation2 + $0x188] sm:$0xff]
        %v578 = vld [vmem:[#allocation2 + $0x1a0] sm:$0xff]
        %v579 = vunpack.c.l.bf16 %v561
        %v580 = vunpack.c.h.bf16 %v561
        %v581 = vunpack.c.l.bf16 %v562
        %v582 = vunpack.c.h.bf16 %v562
        %v583 = vunpack.c.l.bf16 %v563
        %v584 = vunpack.c.h.bf16 %v563
        %v585 = vunpack.c.l.bf16 %v564
        %v586 = vunpack.c.h.bf16 %v564
        %v587 = vunpack.c.l.bf16 %v565
        %v588 = vunpack.c.h.bf16 %v565
        %v589 = vunpack.c.l.bf16 %v566
        %v590 = vunpack.c.h.bf16 %v566
        %v591 = vunpack.c.l.bf16 %v567
        %v592 = vunpack.c.h.bf16 %v567
        %v593 = vunpack.c.l.bf16 %v568
        %v594 = vunpack.c.h.bf16 %v568
        %v595 = vunpack.c.l.bf16 %v569
        %v596 = vunpack.c.h.bf16 %v569
        %v597 = vunpack.c.l.bf16 %v570
        %v598 = vunpack.c.h.bf16 %v570
        %v599 = vunpack.c.l.bf16 %v571
        %v600 = vunpack.c.h.bf16 %v571
        %v601 = vunpack.c.l.bf16 %v572
        %v602 = vunpack.c.h.bf16 %v572
        %v603 = vunpack.c.l.bf16 %v573
        %v604 = vunpack.c.h.bf16 %v573
        %v605 = vunpack.c.l.bf16 %v574
        %v606 = vunpack.c.h.bf16 %v574
        %v607 = vunpack.c.l.bf16 %v575
        %v608 = vunpack.c.h.bf16 %v575
        %v609 = vunpack.c.l.bf16 %v576
        %v610 = vunpack.c.h.bf16 %v576
        %v611 = vunpack.c.l.bf16 %v577
        %v612 = vunpack.c.h.bf16 %v577
        %v613 = vunpack.c.l.bf16 %v578
        %v614 = vunpack.c.h.bf16 %v578
        %v615 = vlaneseq
        %v616 = vshrl.u32 %v615, 7
        %v617 = vadd.s32 %v616, 8
        %vm618 = vcmp.eq.s32.totalorder %v616, 0
        %vm619 = vcmp.eq.s32.totalorder %v617, 0
        %v620 = vrot.slane %v579, 7
        %v621 = vrot.slane %v580, 7
        %v622 = vrot.slane %v581, 7
        %v623 = vrot.slane %v582, 7
        %v624 = vrot.slane %v583, 7
        %v625 = vrot.slane %v584, 7
        %v626 = vrot.slane %v585, 7
        %v627 = vrot.slane %v586, 7
        %v628 = vrot.slane %v587, 7
        %v629 = vrot.slane %v588, 7
        %v630 = vrot.slane %v589, 7
        %v631 = vrot.slane %v590, 7
        %v632 = vrot.slane %v591, 7
        %v633 = vrot.slane %v592, 7
        %v634 = vrot.slane %v593, 7
        %v635 = vrot.slane %v594, 7
        %v636 = vrot.slane %v595, 7
        %v637 = vrot.slane %v596, 7
        %v638 = vrot.slane %v597, 7
        %v639 = vrot.slane %v598, 7
        %v640 = vrot.slane %v599, 7
        %v641 = vrot.slane %v600, 7
        %v642 = vrot.slane %v601, 7
        %v643 = vrot.slane %v602, 7
        %v644 = vrot.slane %v603, 7
        %v645 = vrot.slane %v604, 7
        %v646 = vrot.slane %v605, 7
        %v647 = vrot.slane %v606, 7
        %v648 = vrot.slane %v607, 7
        %v649 = vrot.slane %v608, 7
        %v650 = vrot.slane %v609, 7
        %v651 = vrot.slane %v610, 7
        %v652 = vrot.slane %v611, 7
        %v653 = vrot.slane %v612, 7
        %v654 = vrot.slane %v613, 7
        %v655 = vrot.slane %v614, 7
        %vm656 = vcmp.lt.s32.totalorder %v616, 1
        %v657 = vsel %vm656, %v654, %v655
        %v658 = vsel %vm656, %v653, %v654
        %v659 = vsel %vm656, %v652, %v653
        %v660 = vsel %vm656, %v651, %v652
        %v661 = vsel %vm656, %v650, %v651
        %v662 = vsel %vm656, %v649, %v650
        %v663 = vsel %vm656, %v648, %v649
        %v664 = vsel %vm656, %v647, %v648
        %v665 = vsel %vm656, %v646, %v647
        %v666 = vsel %vm656, %v645, %v646
        %v667 = vsel %vm656, %v644, %v645
        %v668 = vsel %vm656, %v643, %v644
        %v669 = vsel %vm656, %v642, %v643
        %v670 = vsel %vm656, %v641, %v642
        %v671 = vsel %vm656, %v640, %v641
        %v672 = vsel %vm656, %v639, %v640
        %v673 = vsel %vm656, %v638, %v639
        %v674 = vsel %vm656, %v637, %v638
        %v675 = vsel %vm656, %v636, %v637
        %v676 = vsel %vm656, %v635, %v636
        %v677 = vsel %vm656, %v634, %v635
        %v678 = vsel %vm656, %v633, %v634
        %v679 = vsel %vm656, %v632, %v633
        %v680 = vsel %vm656, %v631, %v632
        %v681 = vsel %vm656, %v630, %v631
        %v682 = vsel %vm656, %v629, %v630
        %v683 = vsel %vm656, %v628, %v629
        %v684 = vsel %vm656, %v627, %v628
        %v685 = vsel %vm656, %v626, %v627
        %v686 = vsel %vm656, %v625, %v626
        %v687 = vsel %vm656, %v624, %v625
        %v688 = vsel %vm656, %v623, %v624
        %v689 = vsel %vm656, %v622, %v623
        %v690 = vsel %vm656, %v621, %v622
        %v691 = vsel %vm656, %v620, %v621
        %v692 = vsel %vm656, %v655, %v620
        %v693 = vsel %vm618, 1, 0
        %v694 = vsel %vm619, 1, 0
        %vm695 = vcmp.eq.s32.totalorder %v693, 1
        %vm696 = vcmp.eq.s32.totalorder %v694, 1
        %v697 = vsel %vm695, 0.0, %v692
        %v698 = vsel %vm696, 0.0, %v691
        %v699 = vsel %vm695, 0.0, %v690
        %v700 = vsel %vm696, 0.0, %v689
        %v701 = vsel %vm695, 0.0, %v688
        %v702 = vsel %vm696, 0.0, %v687
        %v703 = vsel %vm695, 0.0, %v686
        %v704 = vsel %vm696, 0.0, %v685
        %v705 = vsel %vm695, 0.0, %v684
        %v706 = vsel %vm696, 0.0, %v683
        %v707 = vsel %vm695, 0.0, %v682
        %v708 = vsel %vm696, 0.0, %v681
        %v709 = vsel %vm695, 0.0, %v680
        %v710 = vsel %vm696, 0.0, %v679
        %v711 = vsel %vm695, 0.0, %v678
        %v712 = vsel %vm696, 0.0, %v677
        %v713 = vsel %vm695, 0.0, %v676
        %v714 = vsel %vm696, 0.0, %v675
        %v715 = vsel %vm695, 0.0, %v674
        %v716 = vsel %vm696, 0.0, %v673
        %v717 = vsel %vm695, 0.0, %v672
        %v718 = vsel %vm696, 0.0, %v671
        %v719 = vsel %vm695, 0.0, %v670
        %v720 = vsel %vm696, 0.0, %v669
        %v721 = vsel %vm695, 0.0, %v668
        %v722 = vsel %vm696, 0.0, %v667
        %v723 = vsel %vm695, 0.0, %v666
        %v724 = vsel %vm696, 0.0, %v665
        %v725 = vsel %vm695, 0.0, %v664
        %v726 = vsel %vm696, 0.0, %v663
        %v727 = vsel %vm695, 0.0, %v662
        %v728 = vsel %vm696, 0.0, %v661
        %v729 = vsel %vm695, 0.0, %v660
        %v730 = vsel %vm696, 0.0, %v659
        %v731 = vsel %vm695, 0.0, %v658
        %v732 = vsel %vm696, 0.0, %v657
        %vm733 = vcmp.eq.s32.totalorder %v616, 15
        %vm734 = vcmp.eq.s32.totalorder %v617, 15
        %v735 = vrot.slane %v579, 1
        %v736 = vrot.slane %v580, 1
        %v737 = vrot.slane %v581, 1
        %v738 = vrot.slane %v582, 1
        %v739 = vrot.slane %v583, 1
        %v740 = vrot.slane %v584, 1
        %v741 = vrot.slane %v585, 1
        %v742 = vrot.slane %v586, 1
        %v743 = vrot.slane %v587, 1
        %v744 = vrot.slane %v588, 1
        %v745 = vrot.slane %v589, 1
        %v746 = vrot.slane %v590, 1
        %v747 = vrot.slane %v591, 1
        %v748 = vrot.slane %v592, 1
        %v749 = vrot.slane %v593, 1
        %v750 = vrot.slane %v594, 1
        %v751 = vrot.slane %v595, 1
        %v752 = vrot.slane %v596, 1
        %v753 = vrot.slane %v597, 1
        %v754 = vrot.slane %v598, 1
        %v755 = vrot.slane %v599, 1
        %v756 = vrot.slane %v600, 1
        %v757 = vrot.slane %v601, 1
        %v758 = vrot.slane %v602, 1
        %v759 = vrot.slane %v603, 1
        %v760 = vrot.slane %v604, 1
        %v761 = vrot.slane %v605, 1
        %v762 = vrot.slane %v606, 1
        %v763 = vrot.slane %v607, 1
        %v764 = vrot.slane %v608, 1
        %v765 = vrot.slane %v609, 1
        %v766 = vrot.slane %v610, 1
        %v767 = vrot.slane %v611, 1
        %v768 = vrot.slane %v612, 1
        %v769 = vrot.slane %v613, 1
        %v770 = vrot.slane %v614, 1
        %vm771 = vcmp.lt.s32.totalorder %v616, 7
        %v772 = vsel %vm771, %v769, %v770
        %v773 = vsel %vm771, %v768, %v769
        %v774 = vsel %vm771, %v767, %v768
        %v775 = vsel %vm771, %v766, %v767
        %v776 = vsel %vm771, %v765, %v766
        %v777 = vsel %vm771, %v764, %v765
        %v778 = vsel %vm771, %v763, %v764
        %v779 = vsel %vm771, %v762, %v763
        %v780 = vsel %vm771, %v761, %v762
        %v781 = vsel %vm771, %v760, %v761
        %v782 = vsel %vm771, %v759, %v760
        %v783 = vsel %vm771, %v758, %v759
        %v784 = vsel %vm771, %v757, %v758
        %v785 = vsel %vm771, %v756, %v757
        %v786 = vsel %vm771, %v755, %v756
        %v787 = vsel %vm771, %v754, %v755
        %v788 = vsel %vm771, %v753, %v754
        %v789 = vsel %vm771, %v752, %v753
        %v790 = vsel %vm771, %v751, %v752
        %v791 = vsel %vm771, %v750, %v751
        %v792 = vsel %vm771, %v749, %v750
        %v793 = vsel %vm771, %v748, %v749
        %v794 = vsel %vm771, %v747, %v748
        %v795 = vsel %vm771, %v746, %v747
        %v796 = vsel %vm771, %v745, %v746
        %v797 = vsel %vm771, %v744, %v745
        %v798 = vsel %vm771, %v743, %v744
        %v799 = vsel %vm771, %v742, %v743
        %v800 = vsel %vm771, %v741, %v742
        %v801 = vsel %vm771, %v740, %v741
        %v802 = vsel %vm771, %v739, %v740
        %v803 = vsel %vm771, %v738, %v739
        %v804 = vsel %vm771, %v737, %v738
        %v805 = vsel %vm771, %v736, %v737
        %v806 = vsel %vm771, %v735, %v736
        %v807 = vsel %vm771, %v770, %v735
        %v808 = vsel %vm733, 1, 0
        %v809 = vsel %vm734, 1, 0
        %vm810 = vcmp.eq.s32.totalorder %v808, 1
        %vm811 = vcmp.eq.s32.totalorder %v809, 1
        %v812 = vsel %vm810, 0.0, %v806
        %v813 = vsel %vm811, 0.0, %v805
        %v814 = vsel %vm810, 0.0, %v804
        %v815 = vsel %vm811, 0.0, %v803
        %v816 = vsel %vm810, 0.0, %v802
        %v817 = vsel %vm811, 0.0, %v801
        %v818 = vsel %vm810, 0.0, %v800
        %v819 = vsel %vm811, 0.0, %v799
        %v820 = vsel %vm810, 0.0, %v798
        %v821 = vsel %vm811, 0.0, %v797
        %v822 = vsel %vm810, 0.0, %v796
        %v823 = vsel %vm811, 0.0, %v795
        %v824 = vsel %vm810, 0.0, %v794
        %v825 = vsel %vm811, 0.0, %v793
        %v826 = vsel %vm810, 0.0, %v792
        %v827 = vsel %vm811, 0.0, %v791
        %v828 = vsel %vm810, 0.0, %v790
        %v829 = vsel %vm811, 0.0, %v789
        %v830 = vsel %vm810, 0.0, %v788
        %v831 = vsel %vm811, 0.0, %v787
        %v832 = vsel %vm810, 0.0, %v786
        %v833 = vsel %vm811, 0.0, %v785
        %v834 = vsel %vm810, 0.0, %v784
        %v835 = vsel %vm811, 0.0, %v783
        %v836 = vsel %vm810, 0.0, %v782
        %v837 = vsel %vm811, 0.0, %v781
        %v838 = vsel %vm810, 0.0, %v780
        %v839 = vsel %vm811, 0.0, %v779
        %v840 = vsel %vm810, 0.0, %v778
        %v841 = vsel %vm811, 0.0, %v777
        %v842 = vsel %vm810, 0.0, %v776
        %v843 = vsel %vm811, 0.0, %v775
        %v844 = vsel %vm810, 0.0, %v774
        %v845 = vsel %vm811, 0.0, %v773
        %v846 = vsel %vm810, 0.0, %v772
        %v847 = vsel %vm811, 0.0, %v807
        %v848 = vpack.c.bf16 %v698, %v697
        %v849 = vpack.c.bf16 %v700, %v699
        %v850 = vpack.c.bf16 %v702, %v701
        %v851 = vpack.c.bf16 %v704, %v703
        %v852 = vpack.c.bf16 %v706, %v705
        %v853 = vpack.c.bf16 %v708, %v707
        %v854 = vpack.c.bf16 %v710, %v709
        %v855 = vpack.c.bf16 %v712, %v711
        %v856 = vpack.c.bf16 %v714, %v713
        %v857 = vpack.c.bf16 %v716, %v715
        %v858 = vpack.c.bf16 %v718, %v717
        %v859 = vpack.c.bf16 %v720, %v719
        %v860 = vpack.c.bf16 %v722, %v721
        %v861 = vpack.c.bf16 %v724, %v723
        %v862 = vpack.c.bf16 %v726, %v725
        %v863 = vpack.c.bf16 %v728, %v727
        %v864 = vpack.c.bf16 %v730, %v729
        %v865 = vpack.c.bf16 %v732, %v731
        %866 = vst [vmem:[#allocation2] sm:$0xff] %v848
        %867 = vst [vmem:[#allocation2 + $0x18] sm:$0xff] %v849
        %868 = vst [vmem:[#allocation2 + $0x30] sm:$0xff] %v850
        %869 = vst [vmem:[#allocation2 + $0x48] sm:$0xff] %v851
        %870 = vst [vmem:[#allocation2 + $0x60] sm:$0xff] %v852
        %871 = vst [vmem:[#allocation2 + $0x78] sm:$0xff] %v853
        %872 = vst [vmem:[#allocation2 + $0x90] sm:$0xff] %v854
        %873 = vst [vmem:[#allocation2 + $0xa8] sm:$0xff] %v855
        %874 = vst [vmem:[#allocation2 + $0xc0] sm:$0xff] %v856
        %875 = vst [vmem:[#allocation2 + $0xd8] sm:$0xff] %v857
        %876 = vst [vmem:[#allocation2 + $0xf0] sm:$0xff] %v858
        %877 = vst [vmem:[#allocation2 + $0x108] sm:$0xff] %v859
        %878 = vst [vmem:[#allocation2 + $0x120] sm:$0xff] %v860
        %879 = vst [vmem:[#allocation2 + $0x138] sm:$0xff] %v861
        %880 = vst [vmem:[#allocation2 + $0x150] sm:$0xff] %v862
        %881 = vst [vmem:[#allocation2 + $0x168] sm:$0xff] %v863
        %882 = vst [vmem:[#allocation2 + $0x180] sm:$0xff] %v864
        %883 = vst [vmem:[#allocation2 + $0x198] sm:$0xff] %v865
        %v884 = vpack.c.bf16 %v813, %v812
        %v885 = vpack.c.bf16 %v815, %v814
        %v886 = vpack.c.bf16 %v817, %v816
        %v887 = vpack.c.bf16 %v819, %v818
        %v888 = vpack.c.bf16 %v821, %v820
        %v889 = vpack.c.bf16 %v823, %v822
        %v890 = vpack.c.bf16 %v825, %v824
        %v891 = vpack.c.bf16 %v827, %v826
        %v892 = vpack.c.bf16 %v829, %v828
        %v893 = vpack.c.bf16 %v831, %v830
        %v894 = vpack.c.bf16 %v833, %v832
        %v895 = vpack.c.bf16 %v835, %v834
        %v896 = vpack.c.bf16 %v837, %v836
        %v897 = vpack.c.bf16 %v839, %v838
        %v898 = vpack.c.bf16 %v841, %v840
        %v899 = vpack.c.bf16 %v843, %v842
        %v900 = vpack.c.bf16 %v845, %v844
        %v901 = vpack.c.bf16 %v847, %v846
        %902 = vst [vmem:[#allocation2 + $0x10] sm:$0xff] %v884
        %903 = vst [vmem:[#allocation2 + $0x28] sm:$0xff] %v885
        %904 = vst [vmem:[#allocation2 + $0x40] sm:$0xff] %v886
        %905 = vst [vmem:[#allocation2 + $0x58] sm:$0xff] %v887
        %906 = vst [vmem:[#allocation2 + $0x70] sm:$0xff] %v888
        %907 = vst [vmem:[#allocation2 + $0x88] sm:$0xff] %v889
        %908 = vst [vmem:[#allocation2 + $0xa0] sm:$0xff] %v890
        %909 = vst [vmem:[#allocation2 + $0xb8] sm:$0xff] %v891
        %910 = vst [vmem:[#allocation2 + $0xd0] sm:$0xff] %v892
        %911 = vst [vmem:[#allocation2 + $0xe8] sm:$0xff] %v893
        %912 = vst [vmem:[#allocation2 + $0x100] sm:$0xff] %v894
        %913 = vst [vmem:[#allocation2 + $0x118] sm:$0xff] %v895
        %914 = vst [vmem:[#allocation2 + $0x130] sm:$0xff] %v896
        %915 = vst [vmem:[#allocation2 + $0x148] sm:$0xff] %v897
        %916 = vst [vmem:[#allocation2 + $0x160] sm:$0xff] %v898
        %917 = vst [vmem:[#allocation2 + $0x178] sm:$0xff] %v899
        %918 = vst [vmem:[#allocation2 + $0x190] sm:$0xff] %v900
        %919 = vst [vmem:[#allocation2 + $0x1a8] sm:$0xff] %v901
        %v920 = vld [vmem:[#allocation2] sm:$0xff]
        %v921 = vld [vmem:[#allocation2 + $0x8] sm:$0xff]
        %v922 = vld [vmem:[#allocation2 + $0x10] sm:$0xff]
        %v923 = vld [vmem:[#allocation2 + $0x18] sm:$0xff]
        %v924 = vld [vmem:[#allocation2 + $0x20] sm:$0xff]
        %v925 = vld [vmem:[#allocation2 + $0x28] sm:$0xff]
        %v926 = vld [vmem:[#allocation2 + $0x30] sm:$0xff]
        %v927 = vld [vmem:[#allocation2 + $0x38] sm:$0xff]
        %v928 = vld [vmem:[#allocation2 + $0x40] sm:$0xff]
        %v929 = vld [vmem:[#allocation2 + $0x48] sm:$0xff]
        %v930 = vld [vmem:[#allocation2 + $0x50] sm:$0xff]
        %v931 = vld [vmem:[#allocation2 + $0x58] sm:$0xff]
        %v932 = vld [vmem:[#allocation2 + $0x60] sm:$0xff]
        %v933 = vld [vmem:[#allocation2 + $0x68] sm:$0xff]
        %v934 = vld [vmem:[#allocation2 + $0x70] sm:$0xff]
        %v935 = vld [vmem:[#allocation2 + $0x78] sm:$0xff]
        %v936 = vld [vmem:[#allocation2 + $0x80] sm:$0xff]
        %v937 = vld [vmem:[#allocation2 + $0x88] sm:$0xff]
        %v938 = vld [vmem:[#allocation2 + $0x90] sm:$0xff]
        %v939 = vld [vmem:[#allocation2 + $0x98] sm:$0xff]
        %v940 = vld [vmem:[#allocation2 + $0xa0] sm:$0xff]
        %v941 = vld [vmem:[#allocation2 + $0xa8] sm:$0xff]
        %v942 = vld [vmem:[#allocation2 + $0xb0] sm:$0xff]
        %v943 = vld [vmem:[#allocation2 + $0xb8] sm:$0xff]
        %v944 = vld [vmem:[#allocation2 + $0xc0] sm:$0xff]
        %v945 = vld [vmem:[#allocation2 + $0xc8] sm:$0xff]
        %v946 = vld [vmem:[#allocation2 + $0xd0] sm:$0xff]
        %v947 = vld [vmem:[#allocation2 + $0xd8] sm:$0xff]
        %v948 = vld [vmem:[#allocation2 + $0xe0] sm:$0xff]
        %v949 = vld [vmem:[#allocation2 + $0xe8] sm:$0xff]
        %v950 = vld [vmem:[#allocation2 + $0xf0] sm:$0xff]
        %v951 = vld [vmem:[#allocation2 + $0xf8] sm:$0xff]
        %v952 = vld [vmem:[#allocation2 + $0x100] sm:$0xff]
        %v953 = vld [vmem:[#allocation2 + $0x108] sm:$0xff]
        %v954 = vld [vmem:[#allocation2 + $0x110] sm:$0xff]
        %v955 = vld [vmem:[#allocation2 + $0x118] sm:$0xff]
        %v956 = vld [vmem:[#allocation2 + $0x120] sm:$0xff]
        %v957 = vld [vmem:[#allocation2 + $0x128] sm:$0xff]
        %v958 = vld [vmem:[#allocation2 + $0x130] sm:$0xff]
        %v959 = vld [vmem:[#allocation2 + $0x138] sm:$0xff]
        %v960 = vld [vmem:[#allocation2 + $0x140] sm:$0xff]
        %v961 = vld [vmem:[#allocation2 + $0x148] sm:$0xff]
        %v962 = vld [vmem:[#allocation2 + $0x150] sm:$0xff]
        %v963 = vld [vmem:[#allocation2 + $0x158] sm:$0xff]
        %v964 = vld [vmem:[#allocation2 + $0x160] sm:$0xff]
        %v965 = vld [vmem:[#allocation2 + $0x168] sm:$0xff]
        %v966 = vld [vmem:[#allocation2 + $0x170] sm:$0xff]
        %v967 = vld [vmem:[#allocation2 + $0x178] sm:$0xff]
        %v968 = vld [vmem:[%s3] sm:$0xf]
        %v969 = vld [vmem:[%s3 + $0x4] sm:$0xf]
        %v970 = vld [vmem:[%s3 + $0x8] sm:$0xf]
        %v971 = vld [vmem:[%s3 + $0xc] sm:$0xf]
        %v972 = vld [vmem:[%s3 + $0x10] sm:$0xf]
        %v973 = vld [vmem:[%s3 + $0x14] sm:$0xf]
        %v974 = vld [vmem:[%s3 + $0x18] sm:$0xf]
        %v975 = vld [vmem:[%s3 + $0x1c] sm:$0xf]
        %v976 = vld [vmem:[%s3 + $0x20] sm:$0xf]
        %v977 = vld [vmem:[%s3 + $0x24] sm:$0xf]
        %v978 = vld [vmem:[%s3 + $0x28] sm:$0xf]
        %v979 = vld [vmem:[%s3 + $0x2c] sm:$0xf]
        %v980 = vld [vmem:[%s3 + $0x30] sm:$0xf]
        %v981 = vld [vmem:[%s3 + $0x34] sm:$0xf]
        %v982 = vld [vmem:[%s3 + $0x38] sm:$0xf]
        %v983 = vld [vmem:[%s3 + $0x3c] sm:$0xf]
        %v984 = vld [vmem:[%s3 + $0x40] sm:$0xf]
        %v985 = vld [vmem:[%s3 + $0x44] sm:$0xf]
        %v986 = vld [vmem:[%s3 + $0x48] sm:$0xf]
        %v987 = vld [vmem:[%s3 + $0x4c] sm:$0xf]
        %v988 = vld [vmem:[%s3 + $0x50] sm:$0xf]
        %v989 = vld [vmem:[%s3 + $0x54] sm:$0xf]
        %v990 = vld [vmem:[%s3 + $0x58] sm:$0xf]
        %v991 = vld [vmem:[%s3 + $0x5c] sm:$0xf]
        %v992 = vld [vmem:[%s3 + $0x60] sm:$0xf]
        %v993 = vld [vmem:[%s3 + $0x64] sm:$0xf]
        %v994 = vld [vmem:[%s3 + $0x68] sm:$0xf]
        %v995 = vld [vmem:[%s3 + $0x6c] sm:$0xf]
        %v996 = vld [vmem:[%s3 + $0x70] sm:$0xf]
        %v997 = vld [vmem:[%s3 + $0x74] sm:$0xf]
        %v998 = vld [vmem:[%s3 + $0x78] sm:$0xf]
        %v999 = vld [vmem:[%s3 + $0x7c] sm:$0xf]
        %v1000 = vld [vmem:[%s3 + $0x80] sm:$0xf]
        %v1001 = vld [vmem:[%s3 + $0x84] sm:$0xf]
        %v1002 = vld [vmem:[%s3 + $0x88] sm:$0xf]
        %v1003 = vld [vmem:[%s3 + $0x8c] sm:$0xf]
        %v1004 = vld [vmem:[%s3 + $0x90] sm:$0xf]
        %v1005 = vld [vmem:[%s3 + $0x94] sm:$0xf]
        %v1006 = vld [vmem:[%s3 + $0x98] sm:$0xf]
        %v1007 = vld [vmem:[%s3 + $0x9c] sm:$0xf]
        %v1008 = vld [vmem:[%s3 + $0xa0] sm:$0xf]
        %v1009 = vld [vmem:[%s3 + $0xa4] sm:$0xf]
        %v1010 = vld [vmem:[%s3 + $0xa8] sm:$0xf]
        %v1011 = vld [vmem:[%s3 + $0xac] sm:$0xf]
        %v1012 = vld [vmem:[%s3 + $0xb0] sm:$0xf]
        %v1013 = vld [vmem:[%s3 + $0xb4] sm:$0xf]
        %v1014 = vld [vmem:[%s3 + $0xb8] sm:$0xf]
        %v1015 = vld [vmem:[%s3 + $0xbc] sm:$0xf]
        %v1064 = vunpack.c.l.b16 %v968
        %v1065 = vunpack.c.l.b16 %v969
        %v1066 = vunpack.c.l.b16 %v970
        %v1067 = vunpack.c.l.b16 %v971
        %v1068 = vunpack.c.l.b16 %v972
        %v1069 = vunpack.c.l.b16 %v973
        %v1070 = vunpack.c.l.b16 %v974
        %v1071 = vunpack.c.l.b16 %v975
        %v1072 = vunpack.c.l.b16 %v976
        %v1073 = vunpack.c.l.b16 %v977
        %v1074 = vunpack.c.l.b16 %v978
        %v1075 = vunpack.c.l.b16 %v979
        %v1076 = vunpack.c.l.b16 %v980
        %v1077 = vunpack.c.l.b16 %v981
        %v1078 = vunpack.c.l.b16 %v982
        %v1079 = vunpack.c.l.b16 %v983
        %v1080 = vunpack.c.l.b16 %v984
        %v1081 = vunpack.c.l.b16 %v985
        %v1082 = vunpack.c.l.b16 %v986
        %v1083 = vunpack.c.l.b16 %v987
        %v1084 = vunpack.c.l.b16 %v988
        %v1085 = vunpack.c.l.b16 %v989
        %v1086 = vunpack.c.l.b16 %v990
        %v1087 = vunpack.c.l.b16 %v991
        %v1088 = vunpack.c.l.b16 %v992
        %v1089 = vunpack.c.l.b16 %v993
        %v1090 = vunpack.c.l.b16 %v994
        %v1091 = vunpack.c.l.b16 %v995
        %v1092 = vunpack.c.l.b16 %v996
        %v1093 = vunpack.c.l.b16 %v997
        %v1094 = vunpack.c.l.b16 %v998
        %v1095 = vunpack.c.l.b16 %v999
        %v1096 = vunpack.c.l.b16 %v1000
        %v1097 = vunpack.c.l.b16 %v1001
        %v1098 = vunpack.c.l.b16 %v1002
        %v1099 = vunpack.c.l.b16 %v1003
        %v1100 = vunpack.c.l.b16 %v1004
        %v1101 = vunpack.c.l.b16 %v1005
        %v1102 = vunpack.c.l.b16 %v1006
        %v1103 = vunpack.c.l.b16 %v1007
        %v1104 = vunpack.c.l.b16 %v1008
        %v1105 = vunpack.c.l.b16 %v1009
        %v1106 = vunpack.c.l.b16 %v1010
        %v1107 = vunpack.c.l.b16 %v1011
        %v1108 = vunpack.c.l.b16 %v1012
        %v1109 = vunpack.c.l.b16 %v1013
        %v1110 = vunpack.c.l.b16 %v1014
        %v1111 = vunpack.c.l.b16 %v1015
        %v1112 = vpack.c.b16 %v1065, %v1064
        %v1113 = vpack.c.b16 %v1067, %v1066
        %v1114 = vpack.c.b16 %v1069, %v1068
        %v1115 = vpack.c.b16 %v1071, %v1070
        %v1116 = vpack.c.b16 %v1073, %v1072
        %v1117 = vpack.c.b16 %v1075, %v1074
        %v1118 = vpack.c.b16 %v1077, %v1076
        %v1119 = vpack.c.b16 %v1079, %v1078
        %v1120 = vpack.c.b16 %v1081, %v1080
        %v1121 = vpack.c.b16 %v1083, %v1082
        %v1122 = vpack.c.b16 %v1085, %v1084
        %v1123 = vpack.c.b16 %v1087, %v1086
        %v1124 = vpack.c.b16 %v1089, %v1088
        %v1125 = vpack.c.b16 %v1091, %v1090
        %v1126 = vpack.c.b16 %v1093, %v1092
        %v1127 = vpack.c.b16 %v1095, %v1094
        %v1128 = vpack.c.b16 %v1097, %v1096
        %v1129 = vpack.c.b16 %v1099, %v1098
        %v1130 = vpack.c.b16 %v1101, %v1100
        %v1131 = vpack.c.b16 %v1103, %v1102
        %v1132 = vpack.c.b16 %v1105, %v1104
        %v1133 = vpack.c.b16 %v1107, %v1106
        %v1134 = vpack.c.b16 %v1109, %v1108
        %v1135 = vpack.c.b16 %v1111, %v1110
        %1160 = vmatprep.subr.bf16.mxu0 0
        %1161 = vmatpush1.bf16.msra.mxu0 %v1112
        %1162 = vmatprep.subr.bf16.mxu0 0
        %1163 = vmatpush1.bf16.msra.mxu0 %v1113
        %1164 = vmatprep.subr.bf16.mxu0 0
        %1165 = vmatpush1.bf16.msra.mxu0 %v1114
        %1166 = vmatprep.subr.bf16.mxu0 0
        %1167 = vmatpush1.bf16.msra.mxu0 %v1115
        %1168 = vmatprep.subr.bf16.mxu0 0
        %1169 = vmatpush1.bf16.msra.mxu0 %v1116
        %1170 = vmatprep.subr.bf16.mxu0 0
        %1171 = vmatpush1.bf16.msra.mxu0 %v1117
        %1172 = vmatprep.subr.bf16.mxu0 0
        %1173 = vmatpush1.bf16.msra.mxu0 %v1118
        %1174 = vmatprep.subr.bf16.mxu0 0
        %1175 = vmatpush1.bf16.msra.mxu0 %v1119
        %1176 = vmatprep.subr.bf16.mxu0 0
        %1177 = vmatpush1.bf16.msra.mxu0 %v1120
        %1178 = vmatprep.subr.bf16.mxu0 0
        %1179 = vmatpush1.bf16.msra.mxu0 %v1121
        %1180 = vmatprep.subr.bf16.mxu0 0
        %1181 = vmatpush1.bf16.msra.mxu0 %v1122
        %1182 = vmatprep.subr.bf16.mxu0 0
        %1183 = vmatpush1.bf16.msra.mxu0 %v1123
        %1184 = vmatprep.subr.bf16.mxu0 0
        %1185 = vmatpush1.bf16.msra.mxu0 %v1124
        %1186 = vmatprep.subr.bf16.mxu0 0
        %1187 = vmatpush1.bf16.msra.mxu0 %v1125
        %1188 = vmatprep.subr.bf16.mxu0 0
        %1189 = vmatpush1.bf16.msra.mxu0 %v1126
        %1190 = vmatprep.subr.bf16.mxu0 0
        %1191 = vmatpush1.bf16.msra.mxu0 %v1127
        %1192 = vmatprep.mubr.bf16.mxu0 %v921
        %1193 = vmatmul.mubr.bf16.gmra.mrb[0].mxu0 %v920
        %v1194 = vpop.f32.mrb[0].mxu0
        %v1195 = vadd.f32 0.0, %v1194
        %v1196 = vpop.f32.mrb[0].mxu0
        %v1197 = vpop.f32.mrb[0].mxu0
        %v1198 = vadd.f32 0.0, %v1197
        %v1199 = vpop.f32.mrb[0].mxu0
        %1200 = vmatprep.mubr.bf16.mxu0 %v924
        %1201 = vmatmul.mubr.bf16.gmra.mrb[0].mxu0 %v923
        %v1202 = vpop.f32.mrb[0].mxu0
        %v1203 = vadd.f32 0.0, %v1202
        %v1204 = vpop.f32.mrb[0].mxu0
        %v1205 = vpop.f32.mrb[0].mxu0
        %v1206 = vadd.f32 0.0, %v1205
        %v1207 = vpop.f32.mrb[0].mxu0
        %1208 = vmatprep.mubr.bf16.mxu0 %v927
        %1209 = vmatmul.mubr.bf16.gmra.mrb[0].mxu0 %v926
        %v1210 = vpop.f32.mrb[0].mxu0
        %v1211 = vadd.f32 0.0, %v1210
        %v1212 = vpop.f32.mrb[0].mxu0
        %v1213 = vpop.f32.mrb[0].mxu0
        %v1214 = vadd.f32 0.0, %v1213
        %v1215 = vpop.f32.mrb[0].mxu0
        %1216 = vmatprep.mubr.bf16.mxu0 %v930
        %1217 = vmatmul.mubr.bf16.gmra.mrb[0].mxu0 %v929
        %v1218 = vpop.f32.mrb[0].mxu0
        %v1219 = vadd.f32 0.0, %v1218
        %v1220 = vpop.f32.mrb[0].mxu0
        %v1221 = vpop.f32.mrb[0].mxu0
        %v1222 = vadd.f32 0.0, %v1221
        %v1223 = vpop.f32.mrb[0].mxu0
        %1224 = vmatprep.mubr.bf16.mxu0 %v933
        %1225 = vmatmul.mubr.bf16.gmra.mrb[0].mxu0 %v932
        %v1226 = vpop.f32.mrb[0].mxu0
        %v1227 = vadd.f32 0.0, %v1226
        %v1228 = vpop.f32.mrb[0].mxu0
        %v1229 = vpop.f32.mrb[0].mxu0
        %v1230 = vadd.f32 0.0, %v1229
        %v1231 = vpop.f32.mrb[0].mxu0
        %1232 = vmatprep.mubr.bf16.mxu0 %v936
        %1233 = vmatmul.mubr.bf16.gmra.mrb[0].mxu0 %v935
        %v1234 = vpop.f32.mrb[0].mxu0
        %v1235 = vadd.f32 0.0, %v1234
        %v1236 = vpop.f32.mrb[0].mxu0
        %v1237 = vpop.f32.mrb[0].mxu0
        %v1238 = vadd.f32 0.0, %v1237
        %v1239 = vpop.f32.mrb[0].mxu0
        %1240 = vmatprep.mubr.bf16.mxu0 %v939
        %1241 = vmatmul.mubr.bf16.gmra.mrb[0].mxu0 %v938
        %v1242 = vpop.f32.mrb[0].mxu0
        %v1243 = vadd.f32 0.0, %v1242
        %v1244 = vpop.f32.mrb[0].mxu0
        %v1245 = vpop.f32.mrb[0].mxu0
        %v1246 = vadd.f32 0.0, %v1245
        %v1247 = vpop.f32.mrb[0].mxu0
        %1248 = vmatprep.mubr.bf16.mxu0 %v942
        %1249 = vmatmul.mubr.bf16.gmra.mrb[0].mxu0 %v941
        %v1250 = vpop.f32.mrb[0].mxu0
        %v1251 = vadd.f32 0.0, %v1250
        %v1252 = vpop.f32.mrb[0].mxu0
        %v1253 = vpop.f32.mrb[0].mxu0
        %v1254 = vadd.f32 0.0, %v1253
        %v1255 = vpop.f32.mrb[0].mxu0
        %1256 = vmatprep.mubr.bf16.mxu0 %v945
        %1257 = vmatmul.mubr.bf16.gmra.mrb[0].mxu0 %v944
        %v1258 = vpop.f32.mrb[0].mxu0
        %v1259 = vadd.f32 0.0, %v1258
        %v1260 = vpop.f32.mrb[0].mxu0
        %v1261 = vpop.f32.mrb[0].mxu0
        %v1262 = vadd.f32 0.0, %v1261
        %v1263 = vpop.f32.mrb[0].mxu0
        %1264 = vmatprep.mubr.bf16.mxu0 %v948
        %1265 = vmatmul.mubr.bf16.gmra.mrb[0].mxu0 %v947
        %v1266 = vpop.f32.mrb[0].mxu0
        %v1267 = vadd.f32 0.0, %v1266
        %v1268 = vpop.f32.mrb[0].mxu0
        %v1269 = vpop.f32.mrb[0].mxu0
        %v1270 = vadd.f32 0.0, %v1269
        %v1271 = vpop.f32.mrb[0].mxu0
        %1272 = vmatprep.mubr.bf16.mxu0 %v951
        %1273 = vmatmul.mubr.bf16.gmra.mrb[0].mxu0 %v950
        %v1274 = vpop.f32.mrb[0].mxu0
        %v1275 = vadd.f32 0.0, %v1274
        %v1276 = vpop.f32.mrb[0].mxu0
        %v1277 = vpop.f32.mrb[0].mxu0
        %v1278 = vadd.f32 0.0, %v1277
        %v1279 = vpop.f32.mrb[0].mxu0
        %1280 = vmatprep.mubr.bf16.mxu0 %v954
        %1281 = vmatmul.mubr.bf16.gmra.mrb[0].mxu0 %v953
        %v1282 = vpop.f32.mrb[0].mxu0
        %v1283 = vadd.f32 0.0, %v1282
        %v1284 = vpop.f32.mrb[0].mxu0
        %v1285 = vpop.f32.mrb[0].mxu0
        %v1286 = vadd.f32 0.0, %v1285
        %v1287 = vpop.f32.mrb[0].mxu0
        %1288 = vmatprep.mubr.bf16.mxu0 %v957
        %1289 = vmatmul.mubr.bf16.gmra.mrb[0].mxu0 %v956
        %v1290 = vpop.f32.mrb[0].mxu0
        %v1291 = vadd.f32 0.0, %v1290
        %v1292 = vpop.f32.mrb[0].mxu0
        %v1293 = vpop.f32.mrb[0].mxu0
        %v1294 = vadd.f32 0.0, %v1293
        %v1295 = vpop.f32.mrb[0].mxu0
        %1296 = vmatprep.mubr.bf16.mxu0 %v960
        %1297 = vmatmul.mubr.bf16.gmra.mrb[0].mxu0 %v959
        %v1298 = vpop.f32.mrb[0].mxu0
        %v1299 = vadd.f32 0.0, %v1298
        %v1300 = vpop.f32.mrb[0].mxu0
        %v1301 = vpop.f32.mrb[0].mxu0
        %v1302 = vadd.f32 0.0, %v1301
        %v1303 = vpop.f32.mrb[0].mxu0
        %1304 = vmatprep.mubr.bf16.mxu0 %v963
        %1305 = vmatmul.mubr.bf16.gmra.mrb[0].mxu0 %v962
        %v1306 = vpop.f32.mrb[0].mxu0
        %v1307 = vadd.f32 0.0, %v1306
        %v1308 = vpop.f32.mrb[0].mxu0
        %v1309 = vpop.f32.mrb[0].mxu0
        %v1310 = vadd.f32 0.0, %v1309
        %v1311 = vpop.f32.mrb[0].mxu0
        %1312 = vmatprep.mubr.bf16.mxu0 %v966
        %1313 = vmatmul.mubr.bf16.gmra.mrb[0].mxu0 %v965
        %v1314 = vpop.f32.mrb[0].mxu0
        %v1315 = vadd.f32 0.0, %v1314
        %v1316 = vpop.f32.mrb[0].mxu0
        %v1317 = vpop.f32.mrb[0].mxu0
        %v1318 = vadd.f32 0.0, %v1317
        %v1319 = vpop.f32.mrb[0].mxu0
        %1320 = vdwg.mxu0
        %1321 = vmatprep.subr.bf16.mxu0 0
        %1322 = vmatpush1.bf16.msra.mxu0 %v1128
        %1323 = vmatprep.subr.bf16.mxu0 0
        %1324 = vmatpush1.bf16.msra.mxu0 %v1129
        %1325 = vmatprep.subr.bf16.mxu0 0
        %1326 = vmatpush1.bf16.msra.mxu0 %v1130
        %1327 = vmatprep.subr.bf16.mxu0 0
        %1328 = vmatpush1.bf16.msra.mxu0 %v1131
        %1329 = vmatprep.subr.bf16.mxu0 0
        %1330 = vmatpush1.bf16.msra.mxu0 %v1132
        %1331 = vmatprep.subr.bf16.mxu0 0
        %1332 = vmatpush1.bf16.msra.mxu0 %v1133
        %1333 = vmatprep.subr.bf16.mxu0 0
        %1334 = vmatpush1.bf16.msra.mxu0 %v1134
        %1335 = vmatprep.subr.bf16.mxu0 0
        %1336 = vmatpush1.bf16.msra.mxu0 %v1135
        %1337 = vmatprep.subr.bf16.mxu0 0
        %1338 = vmatpush1.bf16.msra.mxu0 0
        %1339 = vmatprep.subr.bf16.mxu0 0
        %1340 = vmatpush1.bf16.msra.mxu0 0
        %1341 = vmatprep.subr.bf16.mxu0 0
        %1342 = vmatpush1.bf16.msra.mxu0 0
        %1343 = vmatprep.subr.bf16.mxu0 0
        %1344 = vmatpush1.bf16.msra.mxu0 0
        %1345 = vmatprep.subr.bf16.mxu0 0
        %1346 = vmatpush1.bf16.msra.mxu0 0
        %1347 = vmatprep.subr.bf16.mxu0 0
        %1348 = vmatpush1.bf16.msra.mxu0 0
        %1349 = vmatprep.subr.bf16.mxu0 0
        %1350 = vmatpush1.bf16.msra.mxu0 0
        %1351 = vmatprep.subr.bf16.mxu0 0
        %1352 = vmatpush1.bf16.msra.mxu0 0
        %1353 = vmatprep.mubr.bf16.mxu0 0
        %1354 = vmatmul.mubr.bf16.gmra.mrb[0].mxu0 %v922
        %v1355 = vpop.f32.mrb[0].mxu0
        %v1356 = vadd.f32 %v1195, %v1355
        %v1357 = vpop.f32.mrb[0].mxu0
        %v1358 = vpop.f32.mrb[0].mxu0
        %v1359 = vadd.f32 %v1198, %v1358
        %v1360 = vpop.f32.mrb[0].mxu0
        %1361 = vmatprep.mubr.bf16.mxu0 0
        %1362 = vmatmul.mubr.bf16.gmra.mrb[0].mxu0 %v925
        %v1363 = vpop.f32.mrb[0].mxu0
        %v1364 = vadd.f32 %v1203, %v1363
        %v1365 = vpop.f32.mrb[0].mxu0
        %v1366 = vpop.f32.mrb[0].mxu0
        %v1367 = vadd.f32 %v1206, %v1366
        %v1368 = vpop.f32.mrb[0].mxu0
        %1369 = vmatprep.mubr.bf16.mxu0 0
        %1370 = vmatmul.mubr.bf16.gmra.mrb[0].mxu0 %v928
        %v1371 = vpop.f32.mrb[0].mxu0
        %v1372 = vadd.f32 %v1211, %v1371
        %v1373 = vpop.f32.mrb[0].mxu0
        %v1374 = vpop.f32.mrb[0].mxu0
        %v1375 = vadd.f32 %v1214, %v1374
        %v1376 = vpop.f32.mrb[0].mxu0
        %1377 = vmatprep.mubr.bf16.mxu0 0
        %1378 = vmatmul.mubr.bf16.gmra.mrb[0].mxu0 %v931
        %v1379 = vpop.f32.mrb[0].mxu0
        %v1380 = vadd.f32 %v1219, %v1379
        %v1381 = vpop.f32.mrb[0].mxu0
        %v1382 = vpop.f32.mrb[0].mxu0
        %v1383 = vadd.f32 %v1222, %v1382
        %v1384 = vpop.f32.mrb[0].mxu0
        %1385 = vmatprep.mubr.bf16.mxu0 0
        %1386 = vmatmul.mubr.bf16.gmra.mrb[0].mxu0 %v934
        %v1387 = vpop.f32.mrb[0].mxu0
        %v1388 = vadd.f32 %v1227, %v1387
        %v1389 = vpop.f32.mrb[0].mxu0
        %v1390 = vpop.f32.mrb[0].mxu0
        %v1391 = vadd.f32 %v1230, %v1390
        %v1392 = vpop.f32.mrb[0].mxu0
        %1393 = vmatprep.mubr.bf16.mxu0 0
        %1394 = vmatmul.mubr.bf16.gmra.mrb[0].mxu0 %v937
        %v1395 = vpop.f32.mrb[0].mxu0
        %v1396 = vadd.f32 %v1235, %v1395
        %v1397 = vpop.f32.mrb[0].mxu0
        %v1398 = vpop.f32.mrb[0].mxu0
        %v1399 = vadd.f32 %v1238, %v1398
        %v1400 = vpop.f32.mrb[0].mxu0
        %1401 = vmatprep.mubr.bf16.mxu0 0
        %1402 = vmatmul.mubr.bf16.gmra.mrb[0].mxu0 %v940
        %v1403 = vpop.f32.mrb[0].mxu0
        %v1404 = vadd.f32 %v1243, %v1403
        %v1405 = vpop.f32.mrb[0].mxu0
        %v1406 = vpop.f32.mrb[0].mxu0
        %v1407 = vadd.f32 %v1246, %v1406
        %v1408 = vpop.f32.mrb[0].mxu0
        %1409 = vmatprep.mubr.bf16.mxu0 0
        %1410 = vmatmul.mubr.bf16.gmra.mrb[0].mxu0 %v943
        %v1411 = vpop.f32.mrb[0].mxu0
        %v1412 = vadd.f32 %v1251, %v1411
        %v1413 = vpop.f32.mrb[0].mxu0
        %v1414 = vpop.f32.mrb[0].mxu0
        %v1415 = vadd.f32 %v1254, %v1414
        %v1416 = vpop.f32.mrb[0].mxu0
        %1417 = vmatprep.mubr.bf16.mxu0 0
        %1418 = vmatmul.mubr.bf16.gmra.mrb[0].mxu0 %v946
        %v1419 = vpop.f32.mrb[0].mxu0
        %v1420 = vadd.f32 %v1259, %v1419
        %v1421 = vpop.f32.mrb[0].mxu0
        %v1422 = vpop.f32.mrb[0].mxu0
        %v1423 = vadd.f32 %v1262, %v1422
        %v1424 = vpop.f32.mrb[0].mxu0
        %1425 = vmatprep.mubr.bf16.mxu0 0
        %1426 = vmatmul.mubr.bf16.gmra.mrb[0].mxu0 %v949
        %v1427 = vpop.f32.mrb[0].mxu0
        %v1428 = vadd.f32 %v1267, %v1427
        %v1429 = vpop.f32.mrb[0].mxu0
        %v1430 = vpop.f32.mrb[0].mxu0
        %v1431 = vadd.f32 %v1270, %v1430
        %v1432 = vpop.f32.mrb[0].mxu0
        %1433 = vmatprep.mubr.bf16.mxu0 0
        %1434 = vmatmul.mubr.bf16.gmra.mrb[0].mxu0 %v952
        %v1435 = vpop.f32.mrb[0].mxu0
        %v1436 = vadd.f32 %v1275, %v1435
        %v1437 = vpop.f32.mrb[0].mxu0
        %v1438 = vpop.f32.mrb[0].mxu0
        %v1439 = vadd.f32 %v1278, %v1438
        %v1440 = vpop.f32.mrb[0].mxu0
        %1441 = vmatprep.mubr.bf16.mxu0 0
        %1442 = vmatmul.mubr.bf16.gmra.mrb[0].mxu0 %v955
        %v1443 = vpop.f32.mrb[0].mxu0
        %v1444 = vadd.f32 %v1283, %v1443
        %v1445 = vpop.f32.mrb[0].mxu0
        %v1446 = vpop.f32.mrb[0].mxu0
        %v1447 = vadd.f32 %v1286, %v1446
        %v1448 = vpop.f32.mrb[0].mxu0
        %1449 = vmatprep.mubr.bf16.mxu0 0
        %1450 = vmatmul.mubr.bf16.gmra.mrb[0].mxu0 %v958
        %v1451 = vpop.f32.mrb[0].mxu0
        %v1452 = vadd.f32 %v1291, %v1451
        %v1453 = vpop.f32.mrb[0].mxu0
        %v1454 = vpop.f32.mrb[0].mxu0
        %v1455 = vadd.f32 %v1294, %v1454
        %v1456 = vpop.f32.mrb[0].mxu0
        %1457 = vmatprep.mubr.bf16.mxu0 0
        %1458 = vmatmul.mubr.bf16.gmra.mrb[0].mxu0 %v961
        %v1459 = vpop.f32.mrb[0].mxu0
        %v1460 = vadd.f32 %v1299, %v1459
        %v1461 = vpop.f32.mrb[0].mxu0
        %v1462 = vpop.f32.mrb[0].mxu0
        %v1463 = vadd.f32 %v1302, %v1462
        %v1464 = vpop.f32.mrb[0].mxu0
        %1465 = vmatprep.mubr.bf16.mxu0 0
        %1466 = vmatmul.mubr.bf16.gmra.mrb[0].mxu0 %v964
        %v1467 = vpop.f32.mrb[0].mxu0
        %v1468 = vadd.f32 %v1307, %v1467
        %v1469 = vpop.f32.mrb[0].mxu0
        %v1470 = vpop.f32.mrb[0].mxu0
        %v1471 = vadd.f32 %v1310, %v1470
        %v1472 = vpop.f32.mrb[0].mxu0
        %1473 = vmatprep.mubr.bf16.mxu0 0
        %1474 = vmatmul.mubr.bf16.gmra.mrb[0].mxu0 %v967
        %v1475 = vpop.f32.mrb[0].mxu0
        %v1476 = vadd.f32 %v1315, %v1475
        %v1477 = vpop.f32.mrb[0].mxu0
        %v1478 = vpop.f32.mrb[0].mxu0
        %v1479 = vadd.f32 %v1318, %v1478
        %v1480 = vpop.f32.mrb[0].mxu0
        %1481 = vdwg.mxu0
        %1482 = vst [vmem:[#allocation3] sm:$0xff] %v1356
        %1483 = vst [vmem:[#allocation3 + $0x8] sm:$0xff] %v1359
        %1484 = vst [vmem:[#allocation3 + $0x10] sm:$0xff] %v1364
        %1485 = vst [vmem:[#allocation3 + $0x18] sm:$0xff] %v1367
        %1486 = vst [vmem:[#allocation3 + $0x20] sm:$0xff] %v1372
        %1487 = vst [vmem:[#allocation3 + $0x28] sm:$0xff] %v1375
        %1488 = vst [vmem:[#allocation3 + $0x30] sm:$0xff] %v1380
        %1489 = vst [vmem:[#allocation3 + $0x38] sm:$0xff] %v1383
        %1490 = vst [vmem:[#allocation3 + $0x40] sm:$0xff] %v1388
        %1491 = vst [vmem:[#allocation3 + $0x48] sm:$0xff] %v1391
        %1492 = vst [vmem:[#allocation3 + $0x50] sm:$0xff] %v1396
        %1493 = vst [vmem:[#allocation3 + $0x58] sm:$0xff] %v1399
        %1494 = vst [vmem:[#allocation3 + $0x60] sm:$0xff] %v1404
        %1495 = vst [vmem:[#allocation3 + $0x68] sm:$0xff] %v1407
        %1496 = vst [vmem:[#allocation3 + $0x70] sm:$0xff] %v1412
        %1497 = vst [vmem:[#allocation3 + $0x78] sm:$0xff] %v1415
        %1498 = vst [vmem:[#allocation3 + $0x80] sm:$0xff] %v1420
        %1499 = vst [vmem:[#allocation3 + $0x88] sm:$0xff] %v1423
        %1500 = vst [vmem:[#allocation3 + $0x90] sm:$0xff] %v1428
        %1501 = vst [vmem:[#allocation3 + $0x98] sm:$0xff] %v1431
        %1502 = vst [vmem:[#allocation3 + $0xa0] sm:$0xff] %v1436
        %1503 = vst [vmem:[#allocation3 + $0xa8] sm:$0xff] %v1439
        %1504 = vst [vmem:[#allocation3 + $0xb0] sm:$0xff] %v1444
        %1505 = vst [vmem:[#allocation3 + $0xb8] sm:$0xff] %v1447
        %1506 = vst [vmem:[#allocation3 + $0xc0] sm:$0xff] %v1452
        %1507 = vst [vmem:[#allocation3 + $0xc8] sm:$0xff] %v1455
        %1508 = vst [vmem:[#allocation3 + $0xd0] sm:$0xff] %v1460
        %1509 = vst [vmem:[#allocation3 + $0xd8] sm:$0xff] %v1463
        %1510 = vst [vmem:[#allocation3 + $0xe0] sm:$0xff] %v1468
        %1511 = vst [vmem:[#allocation3 + $0xe8] sm:$0xff] %v1471
        %1512 = vst [vmem:[#allocation3 + $0xf0] sm:$0xff] %v1476
        %1513 = vst [vmem:[#allocation3 + $0xf8] sm:$0xff] %v1479
        %v1514 = vld [vmem:[#allocation2 + $0x18] sm:$0xff]
        %v1515 = vld [vmem:[#allocation2 + $0x20] sm:$0xff]
        %v1516 = vld [vmem:[#allocation2 + $0x28] sm:$0xff]
        %v1517 = vld [vmem:[#allocation2 + $0x30] sm:$0xff]
        %v1518 = vld [vmem:[#allocation2 + $0x38] sm:$0xff]
        %v1519 = vld [vmem:[#allocation2 + $0x40] sm:$0xff]
        %v1520 = vld [vmem:[#allocation2 + $0x48] sm:$0xff]
        %v1521 = vld [vmem:[#allocation2 + $0x50] sm:$0xff]
        %v1522 = vld [vmem:[#allocation2 + $0x58] sm:$0xff]
        %v1523 = vld [vmem:[#allocation2 + $0x60] sm:$0xff]
        %v1524 = vld [vmem:[#allocation2 + $0x68] sm:$0xff]
        %v1525 = vld [vmem:[#allocation2 + $0x70] sm:$0xff]
        %v1526 = vld [vmem:[#allocation2 + $0x78] sm:$0xff]
        %v1527 = vld [vmem:[#allocation2 + $0x80] sm:$0xff]
        %v1528 = vld [vmem:[#allocation2 + $0x88] sm:$0xff]
        %v1529 = vld [vmem:[#allocation2 + $0x90] sm:$0xff]
        %v1530 = vld [vmem:[#allocation2 + $0x98] sm:$0xff]
        %v1531 = vld [vmem:[#allocation2 + $0xa0] sm:$0xff]
        %v1532 = vld [vmem:[#allocation2 + $0xa8] sm:$0xff]
        %v1533 = vld [vmem:[#allocation2 + $0xb0] sm:$0xff]
        %v1534 = vld [vmem:[#allocation2 + $0xb8] sm:$0xff]
        %v1535 = vld [vmem:[#allocation2 + $0xc0] sm:$0xff]
        %v1536 = vld [vmem:[#allocation2 + $0xc8] sm:$0xff]
        %v1537 = vld [vmem:[#allocation2 + $0xd0] sm:$0xff]
        %v1538 = vld [vmem:[#allocation2 + $0xd8] sm:$0xff]
        %v1539 = vld [vmem:[#allocation2 + $0xe0] sm:$0xff]
        %v1540 = vld [vmem:[#allocation2 + $0xe8] sm:$0xff]
        %v1541 = vld [vmem:[#allocation2 + $0xf0] sm:$0xff]
        %v1542 = vld [vmem:[#allocation2 + $0xf8] sm:$0xff]
        %v1543 = vld [vmem:[#allocation2 + $0x100] sm:$0xff]
        %v1544 = vld [vmem:[#allocation2 + $0x108] sm:$0xff]
        %v1545 = vld [vmem:[#allocation2 + $0x110] sm:$0xff]
        %v1546 = vld [vmem:[#allocation2 + $0x118] sm:$0xff]
        %v1547 = vld [vmem:[#allocation2 + $0x120] sm:$0xff]
        %v1548 = vld [vmem:[#allocation2 + $0x128] sm:$0xff]
        %v1549 = vld [vmem:[#allocation2 + $0x130] sm:$0xff]
        %v1550 = vld [vmem:[#allocation2 + $0x138] sm:$0xff]
        %v1551 = vld [vmem:[#allocation2 + $0x140] sm:$0xff]
        %v1552 = vld [vmem:[#allocation2 + $0x148] sm:$0xff]
        %v1553 = vld [vmem:[#allocation2 + $0x150] sm:$0xff]
        %v1554 = vld [vmem:[#allocation2 + $0x158] sm:$0xff]
        %v1555 = vld [vmem:[#allocation2 + $0x160] sm:$0xff]
        %v1556 = vld [vmem:[#allocation2 + $0x168] sm:$0xff]
        %v1557 = vld [vmem:[#allocation2 + $0x170] sm:$0xff]
        %v1558 = vld [vmem:[#allocation2 + $0x178] sm:$0xff]
        %v1559 = vld [vmem:[#allocation2 + $0x180] sm:$0xff]
        %v1560 = vld [vmem:[#allocation2 + $0x188] sm:$0xff]
        %v1561 = vld [vmem:[#allocation2 + $0x190] sm:$0xff]
        %s1562 = scalar_lea.vmem %s3, 192
        %v1563 = vld [vmem:[%s1562] sm:$0xf]
        %v1564 = vld [vmem:[%s1562 + $0x4] sm:$0xf]
        %v1565 = vld [vmem:[%s1562 + $0x8] sm:$0xf]
        %v1566 = vld [vmem:[%s1562 + $0xc] sm:$0xf]
        %v1567 = vld [vmem:[%s1562 + $0x10] sm:$0xf]
        %v1568 = vld [vmem:[%s1562 + $0x14] sm:$0xf]
        %v1569 = vld [vmem:[%s1562 + $0x18] sm:$0xf]
        %v1570 = vld [vmem:[%s1562 + $0x1c] sm:$0xf]
        %v1571 = vld [vmem:[%s1562 + $0x20] sm:$0xf]
        %v1572 = vld [vmem:[%s1562 + $0x24] sm:$0xf]
        %v1573 = vld [vmem:[%s1562 + $0x28] sm:$0xf]
        %v1574 = vld [vmem:[%s1562 + $0x2c] sm:$0xf]
        %v1575 = vld [vmem:[%s1562 + $0x30] sm:$0xf]
        %v1576 = vld [vmem:[%s1562 + $0x34] sm:$0xf]
        %v1577 = vld [vmem:[%s1562 + $0x38] sm:$0xf]
        %v1578 = vld [vmem:[%s1562 + $0x3c] sm:$0xf]
        %v1579 = vld [vmem:[%s1562 + $0x40] sm:$0xf]
        %v1580 = vld [vmem:[%s1562 + $0x44] sm:$0xf]
        %v1581 = vld [vmem:[%s1562 + $0x48] sm:$0xf]
        %v1582 = vld [vmem:[%s1562 + $0x4c] sm:$0xf]
        %v1583 = vld [vmem:[%s1562 + $0x50] sm:$0xf]
        %v1584 = vld [vmem:[%s1562 + $0x54] sm:$0xf]
        %v1585 = vld [vmem:[%s1562 + $0x58] sm:$0xf]
        %v1586 = vld [vmem:[%s1562 + $0x5c] sm:$0xf]
        %v1587 = vld [vmem:[%s1562 + $0x60] sm:$0xf]
        %v1588 = vld [vmem:[%s1562 + $0x64] sm:$0xf]
        %v1589 = vld [vmem:[%s1562 + $0x68] sm:$0xf]
        %v1590 = vld [vmem:[%s1562 + $0x6c] sm:$0xf]
        %v1591 = vld [vmem:[%s1562 + $0x70] sm:$0xf]
        %v1592 = vld [vmem:[%s1562 + $0x74] sm:$0xf]
        %v1593 = vld [vmem:[%s1562 + $0x78] sm:$0xf]
        %v1594 = vld [vmem:[%s1562 + $0x7c] sm:$0xf]
        %v1595 = vld [vmem:[%s1562 + $0x80] sm:$0xf]
        %v1596 = vld [vmem:[%s1562 + $0x84] sm:$0xf]
        %v1597 = vld [vmem:[%s1562 + $0x88] sm:$0xf]
        %v1598 = vld [vmem:[%s1562 + $0x8c] sm:$0xf]
        %v1599 = vld [vmem:[%s1562 + $0x90] sm:$0xf]
        %v1600 = vld [vmem:[%s1562 + $0x94] sm:$0xf]
        %v1601 = vld [vmem:[%s1562 + $0x98] sm:$0xf]
        %v1602 = vld [vmem:[%s1562 + $0x9c] sm:$0xf]
        %v1603 = vld [vmem:[%s1562 + $0xa0] sm:$0xf]
        %v1604 = vld [vmem:[%s1562 + $0xa4] sm:$0xf]
        %v1605 = vld [vmem:[%s1562 + $0xa8] sm:$0xf]
        %v1606 = vld [vmem:[%s1562 + $0xac] sm:$0xf]
        %v1607 = vld [vmem:[%s1562 + $0xb0] sm:$0xf]
        %v1608 = vld [vmem:[%s1562 + $0xb4] sm:$0xf]
        %v1609 = vld [vmem:[%s1562 + $0xb8] sm:$0xf]
        %v1610 = vld [vmem:[%s1562 + $0xbc] sm:$0xf]
        %v1659 = vunpack.c.l.b16 %v1563
        %v1660 = vunpack.c.l.b16 %v1564
        %v1661 = vunpack.c.l.b16 %v1565
        %v1662 = vunpack.c.l.b16 %v1566
        %v1663 = vunpack.c.l.b16 %v1567
        %v1664 = vunpack.c.l.b16 %v1568
        %v1665 = vunpack.c.l.b16 %v1569
        %v1666 = vunpack.c.l.b16 %v1570
        %v1667 = vunpack.c.l.b16 %v1571
        %v1668 = vunpack.c.l.b16 %v1572
        %v1669 = vunpack.c.l.b16 %v1573
        %v1670 = vunpack.c.l.b16 %v1574
        %v1671 = vunpack.c.l.b16 %v1575
        %v1672 = vunpack.c.l.b16 %v1576
        %v1673 = vunpack.c.l.b16 %v1577
        %v1674 = vunpack.c.l.b16 %v1578
        %v1675 = vunpack.c.l.b16 %v1579
        %v1676 = vunpack.c.l.b16 %v1580
        %v1677 = vunpack.c.l.b16 %v1581
        %v1678 = vunpack.c.l.b16 %v1582
        %v1679 = vunpack.c.l.b16 %v1583
        %v1680 = vunpack.c.l.b16 %v1584
        %v1681 = vunpack.c.l.b16 %v1585
        %v1682 = vunpack.c.l.b16 %v1586
        %v1683 = vunpack.c.l.b16 %v1587
        %v1684 = vunpack.c.l.b16 %v1588
        %v1685 = vunpack.c.l.b16 %v1589
        %v1686 = vunpack.c.l.b16 %v1590
        %v1687 = vunpack.c.l.b16 %v1591
        %v1688 = vunpack.c.l.b16 %v1592
        %v1689 = vunpack.c.l.b16 %v1593
        %v1690 = vunpack.c.l.b16 %v1594
        %v1691 = vunpack.c.l.b16 %v1595
        %v1692 = vunpack.c.l.b16 %v1596
        %v1693 = vunpack.c.l.b16 %v1597
        %v1694 = vunpack.c.l.b16 %v1598
        %v1695 = vunpack.c.l.b16 %v1599
        %v1696 = vunpack.c.l.b16 %v1600
        %v1697 = vunpack.c.l.b16 %v1601
        %v1698 = vunpack.c.l.b16 %v1602
        %v1699 = vunpack.c.l.b16 %v1603
        %v1700 = vunpack.c.l.b16 %v1604
        %v1701 = vunpack.c.l.b16 %v1605
        %v1702 = vunpack.c.l.b16 %v1606
        %v1703 = vunpack.c.l.b16 %v1607
        %v1704 = vunpack.c.l.b16 %v1608
        %v1705 = vunpack.c.l.b16 %v1609
        %v1706 = vunpack.c.l.b16 %v1610
        %v1707 = vpack.c.b16 %v1660, %v1659
        %v1708 = vpack.c.b16 %v1662, %v1661
        %v1709 = vpack.c.b16 %v1664, %v1663
        %v1710 = vpack.c.b16 %v1666, %v1665
        %v1711 = vpack.c.b16 %v1668, %v1667
        %v1712 = vpack.c.b16 %v1670, %v1669
        %v1713 = vpack.c.b16 %v1672, %v1671
        %v1714 = vpack.c.b16 %v1674, %v1673
        %v1715 = vpack.c.b16 %v1676, %v1675
        %v1716 = vpack.c.b16 %v1678, %v1677
        %v1717 = vpack.c.b16 %v1680, %v1679
        %v1718 = vpack.c.b16 %v1682, %v1681
        %v1719 = vpack.c.b16 %v1684, %v1683
        %v1720 = vpack.c.b16 %v1686, %v1685
        %v1721 = vpack.c.b16 %v1688, %v1687
        %v1722 = vpack.c.b16 %v1690, %v1689
        %v1723 = vpack.c.b16 %v1692, %v1691
        %v1724 = vpack.c.b16 %v1694, %v1693
        %v1725 = vpack.c.b16 %v1696, %v1695
        %v1726 = vpack.c.b16 %v1698, %v1697
        %v1727 = vpack.c.b16 %v1700, %v1699
        %v1728 = vpack.c.b16 %v1702, %v1701
        %v1729 = vpack.c.b16 %v1704, %v1703
        %v1730 = vpack.c.b16 %v1706, %v1705
        %1755 = vmatprep.subr.bf16.mxu0 0
        %1756 = vmatpush1.bf16.msra.mxu0 %v1707
        %1757 = vmatprep.subr.bf16.mxu0 0
        %1758 = vmatpush1.bf16.msra.mxu0 %v1708
        %1759 = vmatprep.subr.bf16.mxu0 0
        %1760 = vmatpush1.bf16.msra.mxu0 %v1709
        %1761 = vmatprep.subr.bf16.mxu0 0
        %1762 = vmatpush1.bf16.msra.mxu0 %v1710
        %1763 = vmatprep.subr.bf16.mxu0 0
        %1764 = vmatpush1.bf16.msra.mxu0 %v1711
        %1765 = vmatprep.subr.bf16.mxu0 0
        %1766 = vmatpush1.bf16.msra.mxu0 %v1712
        %1767 = vmatprep.subr.bf16.mxu0 0
        %1768 = vmatpush1.bf16.msra.mxu0 %v1713
        %1769 = vmatprep.subr.bf16.mxu0 0
        %1770 = vmatpush1.bf16.msra.mxu0 %v1714
        %1771 = vmatprep.subr.bf16.mxu0 0
        %1772 = vmatpush1.bf16.msra.mxu0 %v1715
        %1773 = vmatprep.subr.bf16.mxu0 0
        %1774 = vmatpush1.bf16.msra.mxu0 %v1716
        %1775 = vmatprep.subr.bf16.mxu0 0
        %1776 = vmatpush1.bf16.msra.mxu0 %v1717
        %1777 = vmatprep.subr.bf16.mxu0 0
        %1778 = vmatpush1.bf16.msra.mxu0 %v1718
        %1779 = vmatprep.subr.bf16.mxu0 0
        %1780 = vmatpush1.bf16.msra.mxu0 %v1719
        %1781 = vmatprep.subr.bf16.mxu0 0
        %1782 = vmatpush1.bf16.msra.mxu0 %v1720
        %1783 = vmatprep.subr.bf16.mxu0 0
        %1784 = vmatpush1.bf16.msra.mxu0 %v1721
        %1785 = vmatprep.subr.bf16.mxu0 0
        %1786 = vmatpush1.bf16.msra.mxu0 %v1722
        %1787 = vmatprep.mubr.bf16.mxu0 %v1515
        %1788 = vmatmul.mubr.bf16.gmra.mrb[0].mxu0 %v1514
        %v1789 = vpop.f32.mrb[0].mxu0
        %v1790 = vadd.f32 0.0, %v1789
        %v1791 = vpop.f32.mrb[0].mxu0
        %v1792 = vpop.f32.mrb[0].mxu0
        %v1793 = vadd.f32 0.0, %v1792
        %v1794 = vpop.f32.mrb[0].mxu0
        %1795 = vmatprep.mubr.bf16.mxu0 %v1518
        %1796 = vmatmul.mubr.bf16.gmra.mrb[0].mxu0 %v1517
        %v1797 = vpop.f32.mrb[0].mxu0
        %v1798 = vadd.f32 0.0, %v1797
        %v1799 = vpop.f32.mrb[0].mxu0
        %v1800 = vpop.f32.mrb[0].mxu0
        %v1801 = vadd.f32 0.0, %v1800
        %v1802 = vpop.f32.mrb[0].mxu0
        %1803 = vmatprep.mubr.bf16.mxu0 %v1521
        %1804 = vmatmul.mubr.bf16.gmra.mrb[0].mxu0 %v1520
        %v1805 = vpop.f32.mrb[0].mxu0
        %v1806 = vadd.f32 0.0, %v1805
        %v1807 = vpop.f32.mrb[0].mxu0
        %v1808 = vpop.f32.mrb[0].mxu0
        %v1809 = vadd.f32 0.0, %v1808
        %v1810 = vpop.f32.mrb[0].mxu0
        %1811 = vmatprep.mubr.bf16.mxu0 %v1524
        %1812 = vmatmul.mubr.bf16.gmra.mrb[0].mxu0 %v1523
        %v1813 = vpop.f32.mrb[0].mxu0
        %v1814 = vadd.f32 0.0, %v1813
        %v1815 = vpop.f32.mrb[0].mxu0
        %v1816 = vpop.f32.mrb[0].mxu0
        %v1817 = vadd.f32 0.0, %v1816
        %v1818 = vpop.f32.mrb[0].mxu0
        %1819 = vmatprep.mubr.bf16.mxu0 %v1527
        %1820 = vmatmul.mubr.bf16.gmra.mrb[0].mxu0 %v1526
        %v1821 = vpop.f32.mrb[0].mxu0
        %v1822 = vadd.f32 0.0, %v1821
        %v1823 = vpop.f32.mrb[0].mxu0
        %v1824 = vpop.f32.mrb[0].mxu0
        %v1825 = vadd.f32 0.0, %v1824
        %v1826 = vpop.f32.mrb[0].mxu0
        %1827 = vmatprep.mubr.bf16.mxu0 %v1530
        %1828 = vmatmul.mubr.bf16.gmra.mrb[0].mxu0 %v1529
        %v1829 = vpop.f32.mrb[0].mxu0
        %v1830 = vadd.f32 0.0, %v1829
        %v1831 = vpop.f32.mrb[0].mxu0
        %v1832 = vpop.f32.mrb[0].mxu0
        %v1833 = vadd.f32 0.0, %v1832
        %v1834 = vpop.f32.mrb[0].mxu0
        %1835 = vmatprep.mubr.bf16.mxu0 %v1533
        %1836 = vmatmul.mubr.bf16.gmra.mrb[0].mxu0 %v1532
        %v1837 = vpop.f32.mrb[0].mxu0
        %v1838 = vadd.f32 0.0, %v1837
        %v1839 = vpop.f32.mrb[0].mxu0
        %v1840 = vpop.f32.mrb[0].mxu0
        %v1841 = vadd.f32 0.0, %v1840
        %v1842 = vpop.f32.mrb[0].mxu0
        %1843 = vmatprep.mubr.bf16.mxu0 %v1536
        %1844 = vmatmul.mubr.bf16.gmra.mrb[0].mxu0 %v1535
        %v1845 = vpop.f32.mrb[0].mxu0
        %v1846 = vadd.f32 0.0, %v1845
        %v1847 = vpop.f32.mrb[0].mxu0
        %v1848 = vpop.f32.mrb[0].mxu0
        %v1849 = vadd.f32 0.0, %v1848
        %v1850 = vpop.f32.mrb[0].mxu0
        %1851 = vmatprep.mubr.bf16.mxu0 %v1539
        %1852 = vmatmul.mubr.bf16.gmra.mrb[0].mxu0 %v1538
        %v1853 = vpop.f32.mrb[0].mxu0
        %v1854 = vadd.f32 0.0, %v1853
        %v1855 = vpop.f32.mrb[0].mxu0
        %v1856 = vpop.f32.mrb[0].mxu0
        %v1857 = vadd.f32 0.0, %v1856
        %v1858 = vpop.f32.mrb[0].mxu0
        %1859 = vmatprep.mubr.bf16.mxu0 %v1542
        %1860 = vmatmul.mubr.bf16.gmra.mrb[0].mxu0 %v1541
        %v1861 = vpop.f32.mrb[0].mxu0
        %v1862 = vadd.f32 0.0, %v1861
        %v1863 = vpop.f32.mrb[0].mxu0
        %v1864 = vpop.f32.mrb[0].mxu0
        %v1865 = vadd.f32 0.0, %v1864
        %v1866 = vpop.f32.mrb[0].mxu0
        %1867 = vmatprep.mubr.bf16.mxu0 %v1545
        %1868 = vmatmul.mubr.bf16.gmra.mrb[0].mxu0 %v1544
        %v1869 = vpop.f32.mrb[0].mxu0
        %v1870 = vadd.f32 0.0, %v1869
        %v1871 = vpop.f32.mrb[0].mxu0
        %v1872 = vpop.f32.mrb[0].mxu0
        %v1873 = vadd.f32 0.0, %v1872
        %v1874 = vpop.f32.mrb[0].mxu0
        %1875 = vmatprep.mubr.bf16.mxu0 %v1548
        %1876 = vmatmul.mubr.bf16.gmra.mrb[0].mxu0 %v1547
        %v1877 = vpop.f32.mrb[0].mxu0
        %v1878 = vadd.f32 0.0, %v1877
        %v1879 = vpop.f32.mrb[0].mxu0
        %v1880 = vpop.f32.mrb[0].mxu0
        %v1881 = vadd.f32 0.0, %v1880
        %v1882 = vpop.f32.mrb[0].mxu0
        %1883 = vmatprep.mubr.bf16.mxu0 %v1551
        %1884 = vmatmul.mubr.bf16.gmra.mrb[0].mxu0 %v1550
        %v1885 = vpop.f32.mrb[0].mxu0
        %v1886 = vadd.f32 0.0, %v1885
        %v1887 = vpop.f32.mrb[0].mxu0
        %v1888 = vpop.f32.mrb[0].mxu0
        %v1889 = vadd.f32 0.0, %v1888
        %v1890 = vpop.f32.mrb[0].mxu0
        %1891 = vmatprep.mubr.bf16.mxu0 %v1554
        %1892 = vmatmul.mubr.bf16.gmra.mrb[0].mxu0 %v1553
        %v1893 = vpop.f32.mrb[0].mxu0
        %v1894 = vadd.f32 0.0, %v1893
        %v1895 = vpop.f32.mrb[0].mxu0
        %v1896 = vpop.f32.mrb[0].mxu0
        %v1897 = vadd.f32 0.0, %v1896
        %v1898 = vpop.f32.mrb[0].mxu0
        %1899 = vmatprep.mubr.bf16.mxu0 %v1557
        %1900 = vmatmul.mubr.bf16.gmra.mrb[0].mxu0 %v1556
        %v1901 = vpop.f32.mrb[0].mxu0
        %v1902 = vadd.f32 0.0, %v1901
        %v1903 = vpop.f32.mrb[0].mxu0
        %v1904 = vpop.f32.mrb[0].mxu0
        %v1905 = vadd.f32 0.0, %v1904
        %v1906 = vpop.f32.mrb[0].mxu0
        %1907 = vmatprep.mubr.bf16.mxu0 %v1560
        %1908 = vmatmul.mubr.bf16.gmra.mrb[0].mxu0 %v1559
        %v1909 = vpop.f32.mrb[0].mxu0
        %v1910 = vadd.f32 0.0, %v1909
        %v1911 = vpop.f32.mrb[0].mxu0
        %v1912 = vpop.f32.mrb[0].mxu0
        %v1913 = vadd.f32 0.0, %v1912
        %v1914 = vpop.f32.mrb[0].mxu0
        %1915 = vdwg.mxu0
        %1916 = vmatprep.subr.bf16.mxu0 0
        %1917 = vmatpush1.bf16.msra.mxu0 %v1723
        %1918 = vmatprep.subr.bf16.mxu0 0
        %1919 = vmatpush1.bf16.msra.mxu0 %v1724
        %1920 = vmatprep.subr.bf16.mxu0 0
        %1921 = vmatpush1.bf16.msra.mxu0 %v1725
        %1922 = vmatprep.subr.bf16.mxu0 0
        %1923 = vmatpush1.bf16.msra.mxu0 %v1726
        %1924 = vmatprep.subr.bf16.mxu0 0
        %1925 = vmatpush1.bf16.msra.mxu0 %v1727
        %1926 = vmatprep.subr.bf16.mxu0 0
        %1927 = vmatpush1.bf16.msra.mxu0 %v1728
        %1928 = vmatprep.subr.bf16.mxu0 0
        %1929 = vmatpush1.bf16.msra.mxu0 %v1729
        %1930 = vmatprep.subr.bf16.mxu0 0
        %1931 = vmatpush1.bf16.msra.mxu0 %v1730
        %1932 = vmatprep.subr.bf16.mxu0 0
        %1933 = vmatpush1.bf16.msra.mxu0 0
        %1934 = vmatprep.subr.bf16.mxu0 0
        %1935 = vmatpush1.bf16.msra.mxu0 0
        %1936 = vmatprep.subr.bf16.mxu0 0
        %1937 = vmatpush1.bf16.msra.mxu0 0
        %1938 = vmatprep.subr.bf16.mxu0 0
        %1939 = vmatpush1.bf16.msra.mxu0 0
        %1940 = vmatprep.subr.bf16.mxu0 0
        %1941 = vmatpush1.bf16.msra.mxu0 0
        %1942 = vmatprep.subr.bf16.mxu0 0
        %1943 = vmatpush1.bf16.msra.mxu0 0
        %1944 = vmatprep.subr.bf16.mxu0 0
        %1945 = vmatpush1.bf16.msra.mxu0 0
        %1946 = vmatprep.subr.bf16.mxu0 0
        %1947 = vmatpush1.bf16.msra.mxu0 0
        %1948 = vmatprep.mubr.bf16.mxu0 0
        %1949 = vmatmul.mubr.bf16.gmra.mrb[0].mxu0 %v1516
        %v1950 = vpop.f32.mrb[0].mxu0
        %v1951 = vadd.f32 %v1790, %v1950
        %v1952 = vpop.f32.mrb[0].mxu0
        %v1953 = vpop.f32.mrb[0].mxu0
        %v1954 = vadd.f32 %v1793, %v1953
        %v1955 = vpop.f32.mrb[0].mxu0
        %1956 = vmatprep.mubr.bf16.mxu0 0
        %1957 = vmatmul.mubr.bf16.gmra.mrb[0].mxu0 %v1519
        %v1958 = vpop.f32.mrb[0].mxu0
        %v1959 = vadd.f32 %v1798, %v1958
        %v1960 = vpop.f32.mrb[0].mxu0
        %v1961 = vpop.f32.mrb[0].mxu0
        %v1962 = vadd.f32 %v1801, %v1961
        %v1963 = vpop.f32.mrb[0].mxu0
        %1964 = vmatprep.mubr.bf16.mxu0 0
        %1965 = vmatmul.mubr.bf16.gmra.mrb[0].mxu0 %v1522
        %v1966 = vpop.f32.mrb[0].mxu0
        %v1967 = vadd.f32 %v1806, %v1966
        %v1968 = vpop.f32.mrb[0].mxu0
        %v1969 = vpop.f32.mrb[0].mxu0
        %v1970 = vadd.f32 %v1809, %v1969
        %v1971 = vpop.f32.mrb[0].mxu0
        %1972 = vmatprep.mubr.bf16.mxu0 0
        %1973 = vmatmul.mubr.bf16.gmra.mrb[0].mxu0 %v1525
        %v1974 = vpop.f32.mrb[0].mxu0
        %v1975 = vadd.f32 %v1814, %v1974
        %v1976 = vpop.f32.mrb[0].mxu0
        %v1977 = vpop.f32.mrb[0].mxu0
        %v1978 = vadd.f32 %v1817, %v1977
        %v1979 = vpop.f32.mrb[0].mxu0
        %1980 = vmatprep.mubr.bf16.mxu0 0
        %1981 = vmatmul.mubr.bf16.gmra.mrb[0].mxu0 %v1528
        %v1982 = vpop.f32.mrb[0].mxu0
        %v1983 = vadd.f32 %v1822, %v1982
        %v1984 = vpop.f32.mrb[0].mxu0
        %v1985 = vpop.f32.mrb[0].mxu0
        %v1986 = vadd.f32 %v1825, %v1985
        %v1987 = vpop.f32.mrb[0].mxu0
        %1988 = vmatprep.mubr.bf16.mxu0 0
        %1989 = vmatmul.mubr.bf16.gmra.mrb[0].mxu0 %v1531
        %v1990 = vpop.f32.mrb[0].mxu0
        %v1991 = vadd.f32 %v1830, %v1990
        %v1992 = vpop.f32.mrb[0].mxu0
        %v1993 = vpop.f32.mrb[0].mxu0
        %v1994 = vadd.f32 %v1833, %v1993
        %v1995 = vpop.f32.mrb[0].mxu0
        %1996 = vmatprep.mubr.bf16.mxu0 0
        %1997 = vmatmul.mubr.bf16.gmra.mrb[0].mxu0 %v1534
        %v1998 = vpop.f32.mrb[0].mxu0
        %v1999 = vadd.f32 %v1838, %v1998
        %v2000 = vpop.f32.mrb[0].mxu0
        %v2001 = vpop.f32.mrb[0].mxu0
        %v2002 = vadd.f32 %v1841, %v2001
        %v2003 = vpop.f32.mrb[0].mxu0
        %2004 = vmatprep.mubr.bf16.mxu0 0
        %2005 = vmatmul.mubr.bf16.gmra.mrb[0].mxu0 %v1537
        %v2006 = vpop.f32.mrb[0].mxu0
        %v2007 = vadd.f32 %v1846, %v2006
        %v2008 = vpop.f32.mrb[0].mxu0
        %v2009 = vpop.f32.mrb[0].mxu0
        %v2010 = vadd.f32 %v1849, %v2009
        %v2011 = vpop.f32.mrb[0].mxu0
        %2012 = vmatprep.mubr.bf16.mxu0 0
        %2013 = vmatmul.mubr.bf16.gmra.mrb[0].mxu0 %v1540
        %v2014 = vpop.f32.mrb[0].mxu0
        %v2015 = vadd.f32 %v1854, %v2014
        %v2016 = vpop.f32.mrb[0].mxu0
        %v2017 = vpop.f32.mrb[0].mxu0
        %v2018 = vadd.f32 %v1857, %v2017
        %v2019 = vpop.f32.mrb[0].mxu0
        %2020 = vmatprep.mubr.bf16.mxu0 0
        %2021 = vmatmul.mubr.bf16.gmra.mrb[0].mxu0 %v1543
        %v2022 = vpop.f32.mrb[0].mxu0
        %v2023 = vadd.f32 %v1862, %v2022
        %v2024 = vpop.f32.mrb[0].mxu0
        %v2025 = vpop.f32.mrb[0].mxu0
        %v2026 = vadd.f32 %v1865, %v2025
        %v2027 = vpop.f32.mrb[0].mxu0
        %2028 = vmatprep.mubr.bf16.mxu0 0
        %2029 = vmatmul.mubr.bf16.gmra.mrb[0].mxu0 %v1546
        %v2030 = vpop.f32.mrb[0].mxu0
        %v2031 = vadd.f32 %v1870, %v2030
        %v2032 = vpop.f32.mrb[0].mxu0
        %v2033 = vpop.f32.mrb[0].mxu0
        %v2034 = vadd.f32 %v1873, %v2033
        %v2035 = vpop.f32.mrb[0].mxu0
        %2036 = vmatprep.mubr.bf16.mxu0 0
        %2037 = vmatmul.mubr.bf16.gmra.mrb[0].mxu0 %v1549
        %v2038 = vpop.f32.mrb[0].mxu0
        %v2039 = vadd.f32 %v1878, %v2038
        %v2040 = vpop.f32.mrb[0].mxu0
        %v2041 = vpop.f32.mrb[0].mxu0
        %v2042 = vadd.f32 %v1881, %v2041
        %v2043 = vpop.f32.mrb[0].mxu0
        %2044 = vmatprep.mubr.bf16.mxu0 0
        %2045 = vmatmul.mubr.bf16.gmra.mrb[0].mxu0 %v1552
        %v2046 = vpop.f32.mrb[0].mxu0
        %v2047 = vadd.f32 %v1886, %v2046
        %v2048 = vpop.f32.mrb[0].mxu0
        %v2049 = vpop.f32.mrb[0].mxu0
        %v2050 = vadd.f32 %v1889, %v2049
        %v2051 = vpop.f32.mrb[0].mxu0
        %2052 = vmatprep.mubr.bf16.mxu0 0
        %2053 = vmatmul.mubr.bf16.gmra.mrb[0].mxu0 %v1555
        %v2054 = vpop.f32.mrb[0].mxu0
        %v2055 = vadd.f32 %v1894, %v2054
        %v2056 = vpop.f32.mrb[0].mxu0
        %v2057 = vpop.f32.mrb[0].mxu0
        %v2058 = vadd.f32 %v1897, %v2057
        %v2059 = vpop.f32.mrb[0].mxu0
        %2060 = vmatprep.mubr.bf16.mxu0 0
        %2061 = vmatmul.mubr.bf16.gmra.mrb[0].mxu0 %v1558
        %v2062 = vpop.f32.mrb[0].mxu0
        %v2063 = vadd.f32 %v1902, %v2062
        %v2064 = vpop.f32.mrb[0].mxu0
        %v2065 = vpop.f32.mrb[0].mxu0
        %v2066 = vadd.f32 %v1905, %v2065
        %v2067 = vpop.f32.mrb[0].mxu0
        %2068 = vmatprep.mubr.bf16.mxu0 0
        %2069 = vmatmul.mubr.bf16.gmra.mrb[0].mxu0 %v1561
        %v2070 = vpop.f32.mrb[0].mxu0
        %v2071 = vadd.f32 %v1910, %v2070
        %v2072 = vpop.f32.mrb[0].mxu0
        %v2073 = vpop.f32.mrb[0].mxu0
        %v2074 = vadd.f32 %v1913, %v2073
        %v2075 = vpop.f32.mrb[0].mxu0
        %2076 = vdwg.mxu0
        %v2077 = vld [vmem:[#allocation3] sm:$0xff]
        %v2078 = vld [vmem:[#allocation3 + $0x8] sm:$0xff]
        %v2079 = vld [vmem:[#allocation3 + $0x10] sm:$0xff]
        %v2080 = vld [vmem:[#allocation3 + $0x18] sm:$0xff]
        %v2081 = vld [vmem:[#allocation3 + $0x20] sm:$0xff]
        %v2082 = vld [vmem:[#allocation3 + $0x28] sm:$0xff]
        %v2083 = vld [vmem:[#allocation3 + $0x30] sm:$0xff]
        %v2084 = vld [vmem:[#allocation3 + $0x38] sm:$0xff]
        %v2085 = vld [vmem:[#allocation3 + $0x40] sm:$0xff]
        %v2086 = vld [vmem:[#allocation3 + $0x48] sm:$0xff]
        %v2087 = vld [vmem:[#allocation3 + $0x50] sm:$0xff]
        %v2088 = vld [vmem:[#allocation3 + $0x58] sm:$0xff]
        %v2089 = vld [vmem:[#allocation3 + $0x60] sm:$0xff]
        %v2090 = vld [vmem:[#allocation3 + $0x68] sm:$0xff]
        %v2091 = vld [vmem:[#allocation3 + $0x70] sm:$0xff]
        %v2092 = vld [vmem:[#allocation3 + $0x78] sm:$0xff]
        %v2093 = vld [vmem:[#allocation3 + $0x80] sm:$0xff]
        %v2094 = vld [vmem:[#allocation3 + $0x88] sm:$0xff]
        %v2095 = vld [vmem:[#allocation3 + $0x90] sm:$0xff]
        %v2096 = vld [vmem:[#allocation3 + $0x98] sm:$0xff]
        %v2097 = vld [vmem:[#allocation3 + $0xa0] sm:$0xff]
        %v2098 = vld [vmem:[#allocation3 + $0xa8] sm:$0xff]
        %v2099 = vld [vmem:[#allocation3 + $0xb0] sm:$0xff]
        %v2100 = vld [vmem:[#allocation3 + $0xb8] sm:$0xff]
        %v2101 = vld [vmem:[#allocation3 + $0xc0] sm:$0xff]
        %v2102 = vld [vmem:[#allocation3 + $0xc8] sm:$0xff]
        %v2103 = vld [vmem:[#allocation3 + $0xd0] sm:$0xff]
        %v2104 = vld [vmem:[#allocation3 + $0xd8] sm:$0xff]
        %v2105 = vld [vmem:[#allocation3 + $0xe0] sm:$0xff]
        %v2106 = vld [vmem:[#allocation3 + $0xe8] sm:$0xff]
        %v2107 = vld [vmem:[#allocation3 + $0xf0] sm:$0xff]
        %v2108 = vld [vmem:[#allocation3 + $0xf8] sm:$0xff]
        %v2109 = vadd.f32 %v2077, %v1951
        %v2110 = vadd.f32 %v2078, %v1954
        %v2111 = vadd.f32 %v2079, %v1959
        %v2112 = vadd.f32 %v2080, %v1962
        %v2113 = vadd.f32 %v2081, %v1967
        %v2114 = vadd.f32 %v2082, %v1970
        %v2115 = vadd.f32 %v2083, %v1975
        %v2116 = vadd.f32 %v2084, %v1978
        %v2117 = vadd.f32 %v2085, %v1983
        %v2118 = vadd.f32 %v2086, %v1986
        %v2119 = vadd.f32 %v2087, %v1991
        %v2120 = vadd.f32 %v2088, %v1994
        %v2121 = vadd.f32 %v2089, %v1999
        %v2122 = vadd.f32 %v2090, %v2002
        %v2123 = vadd.f32 %v2091, %v2007
        %v2124 = vadd.f32 %v2092, %v2010
        %v2125 = vadd.f32 %v2093, %v2015
        %v2126 = vadd.f32 %v2094, %v2018
        %v2127 = vadd.f32 %v2095, %v2023
        %v2128 = vadd.f32 %v2096, %v2026
        %v2129 = vadd.f32 %v2097, %v2031
        %v2130 = vadd.f32 %v2098, %v2034
        %v2131 = vadd.f32 %v2099, %v2039
        %v2132 = vadd.f32 %v2100, %v2042
        %v2133 = vadd.f32 %v2101, %v2047
        %v2134 = vadd.f32 %v2102, %v2050
        %v2135 = vadd.f32 %v2103, %v2055
        %v2136 = vadd.f32 %v2104, %v2058
        %v2137 = vadd.f32 %v2105, %v2063
        %v2138 = vadd.f32 %v2106, %v2066
        %v2139 = vadd.f32 %v2107, %v2071
        %v2140 = vadd.f32 %v2108, %v2074
        %2141 = vst [vmem:[#allocation3] sm:$0xff] %v2109
        %2142 = vst [vmem:[#allocation3 + $0x8] sm:$0xff] %v2110
        %2143 = vst [vmem:[#allocation3 + $0x10] sm:$0xff] %v2111
        %2144 = vst [vmem:[#allocation3 + $0x18] sm:$0xff] %v2112
        %2145 = vst [vmem:[#allocation3 + $0x20] sm:$0xff] %v2113
        %2146 = vst [vmem:[#allocation3 + $0x28] sm:$0xff] %v2114
        %2147 = vst [vmem:[#allocation3 + $0x30] sm:$0xff] %v2115
        %2148 = vst [vmem:[#allocation3 + $0x38] sm:$0xff] %v2116
        %2149 = vst [vmem:[#allocation3 + $0x40] sm:$0xff] %v2117
        %2150 = vst [vmem:[#allocation3 + $0x48] sm:$0xff] %v2118
        %2151 = vst [vmem:[#allocation3 + $0x50] sm:$0xff] %v2119
        %2152 = vst [vmem:[#allocation3 + $0x58] sm:$0xff] %v2120
        %2153 = vst [vmem:[#allocation3 + $0x60] sm:$0xff] %v2121
        %2154 = vst [vmem:[#allocation3 + $0x68] sm:$0xff] %v2122
        %2155 = vst [vmem:[#allocation3 + $0x70] sm:$0xff] %v2123
        %2156 = vst [vmem:[#allocation3 + $0x78] sm:$0xff] %v2124
        %2157 = vst [vmem:[#allocation3 + $0x80] sm:$0xff] %v2125
        %2158 = vst [vmem:[#allocation3 + $0x88] sm:$0xff] %v2126
        %2159 = vst [vmem:[#allocation3 + $0x90] sm:$0xff] %v2127
        %2160 = vst [vmem:[#allocation3 + $0x98] sm:$0xff] %v2128
        %2161 = vst [vmem:[#allocation3 + $0xa0] sm:$0xff] %v2129
        %2162 = vst [vmem:[#allocation3 + $0xa8] sm:$0xff] %v2130
        %2163 = vst [vmem:[#allocation3 + $0xb0] sm:$0xff] %v2131
        %2164 = vst [vmem:[#allocation3 + $0xb8] sm:$0xff] %v2132
        %2165 = vst [vmem:[#allocation3 + $0xc0] sm:$0xff] %v2133
        %2166 = vst [vmem:[#allocation3 + $0xc8] sm:$0xff] %v2134
        %2167 = vst [vmem:[#allocation3 + $0xd0] sm:$0xff] %v2135
        %2168 = vst [vmem:[#allocation3 + $0xd8] sm:$0xff] %v2136
        %2169 = vst [vmem:[#allocation3 + $0xe0] sm:$0xff] %v2137
        %2170 = vst [vmem:[#allocation3 + $0xe8] sm:$0xff] %v2138
        %2171 = vst [vmem:[#allocation3 + $0xf0] sm:$0xff] %v2139
        %2172 = vst [vmem:[#allocation3 + $0xf8] sm:$0xff] %v2140
        %v2173 = vld [vmem:[#allocation2 + $0x30] sm:$0xff]
        %v2174 = vld [vmem:[#allocation2 + $0x38] sm:$0xff]
        %v2175 = vld [vmem:[#allocation2 + $0x40] sm:$0xff]
        %v2176 = vld [vmem:[#allocation2 + $0x48] sm:$0xff]
        %v2177 = vld [vmem:[#allocation2 + $0x50] sm:$0xff]
        %v2178 = vld [vmem:[#allocation2 + $0x58] sm:$0xff]
        %v2179 = vld [vmem:[#allocation2 + $0x60] sm:$0xff]
        %v2180 = vld [vmem:[#allocation2 + $0x68] sm:$0xff]
        %v2181 = vld [vmem:[#allocation2 + $0x70] sm:$0xff]
        %v2182 = vld [vmem:[#allocation2 + $0x78] sm:$0xff]
        %v2183 = vld [vmem:[#allocation2 + $0x80] sm:$0xff]
        %v2184 = vld [vmem:[#allocation2 + $0x88] sm:$0xff]
        %v2185 = vld [vmem:[#allocation2 + $0x90] sm:$0xff]
        %v2186 = vld [vmem:[#allocation2 + $0x98] sm:$0xff]
        %v2187 = vld [vmem:[#allocation2 + $0xa0] sm:$0xff]
        %v2188 = vld [vmem:[#allocation2 + $0xa8] sm:$0xff]
        %v2189 = vld [vmem:[#allocation2 + $0xb0] sm:$0xff]
        %v2190 = vld [vmem:[#allocation2 + $0xb8] sm:$0xff]
        %v2191 = vld [vmem:[#allocation2 + $0xc0] sm:$0xff]
        %v2192 = vld [vmem:[#allocation2 + $0xc8] sm:$0xff]
        %v2193 = vld [vmem:[#allocation2 + $0xd0] sm:$0xff]
        %v2194 = vld [vmem:[#allocation2 + $0xd8] sm:$0xff]
        %v2195 = vld [vmem:[#allocation2 + $0xe0] sm:$0xff]
        %v2196 = vld [vmem:[#allocation2 + $0xe8] sm:$0xff]
        %v2197 = vld [vmem:[#allocation2 + $0xf0] sm:$0xff]
        %v2198 = vld [vmem:[#allocation2 + $0xf8] sm:$0xff]
        %v2199 = vld [vmem:[#allocation2 + $0x100] sm:$0xff]
        %v2200 = vld [vmem:[#allocation2 + $0x108] sm:$0xff]
        %v2201 = vld [vmem:[#allocation2 + $0x110] sm:$0xff]
        %v2202 = vld [vmem:[#allocation2 + $0x118] sm:$0xff]
        %v2203 = vld [vmem:[#allocation2 + $0x120] sm:$0xff]
        %v2204 = vld [vmem:[#allocation2 + $0x128] sm:$0xff]
        %v2205 = vld [vmem:[#allocation2 + $0x130] sm:$0xff]
        %v2206 = vld [vmem:[#allocation2 + $0x138] sm:$0xff]
        %v2207 = vld [vmem:[#allocation2 + $0x140] sm:$0xff]
        %v2208 = vld [vmem:[#allocation2 + $0x148] sm:$0xff]
        %v2209 = vld [vmem:[#allocation2 + $0x150] sm:$0xff]
        %v2210 = vld [vmem:[#allocation2 + $0x158] sm:$0xff]
        %v2211 = vld [vmem:[#allocation2 + $0x160] sm:$0xff]
        %v2212 = vld [vmem:[#allocation2 + $0x168] sm:$0xff]
        %v2213 = vld [vmem:[#allocation2 + $0x170] sm:$0xff]
        %v2214 = vld [vmem:[#allocation2 + $0x178] sm:$0xff]
        %v2215 = vld [vmem:[#allocation2 + $0x180] sm:$0xff]
        %v2216 = vld [vmem:[#allocation2 + $0x188] sm:$0xff]
        %v2217 = vld [vmem:[#allocation2 + $0x190] sm:$0xff]
        %v2218 = vld [vmem:[#allocation2 + $0x198] sm:$0xff]
        %v2219 = vld [vmem:[#allocation2 + $0x1a0] sm:$0xff]
        %v2220 = vld [vmem:[#allocation2 + $0x1a8] sm:$0xff]
        %s2221 = scalar_lea.vmem %s3, 384
        %v2222 = vld [vmem:[%s2221] sm:$0xf]
        %v2223 = vld [vmem:[%s2221 + $0x4] sm:$0xf]
        %v2224 = vld [vmem:[%s2221 + $0x8] sm:$0xf]
        %v2225 = vld [vmem:[%s2221 + $0xc] sm:$0xf]
        %v2226 = vld [vmem:[%s2221 + $0x10] sm:$0xf]
        %v2227 = vld [vmem:[%s2221 + $0x14] sm:$0xf]
        %v2228 = vld [vmem:[%s2221 + $0x18] sm:$0xf]
        %v2229 = vld [vmem:[%s2221 + $0x1c] sm:$0xf]
        %v2230 = vld [vmem:[%s2221 + $0x20] sm:$0xf]
        %v2231 = vld [vmem:[%s2221 + $0x24] sm:$0xf]
        %v2232 = vld [vmem:[%s2221 + $0x28] sm:$0xf]
        %v2233 = vld [vmem:[%s2221 + $0x2c] sm:$0xf]
        %v2234 = vld [vmem:[%s2221 + $0x30] sm:$0xf]
        %v2235 = vld [vmem:[%s2221 + $0x34] sm:$0xf]
        %v2236 = vld [vmem:[%s2221 + $0x38] sm:$0xf]
        %v2237 = vld [vmem:[%s2221 + $0x3c] sm:$0xf]
        %v2238 = vld [vmem:[%s2221 + $0x40] sm:$0xf]
        %v2239 = vld [vmem:[%s2221 + $0x44] sm:$0xf]
        %v2240 = vld [vmem:[%s2221 + $0x48] sm:$0xf]
        %v2241 = vld [vmem:[%s2221 + $0x4c] sm:$0xf]
        %v2242 = vld [vmem:[%s2221 + $0x50] sm:$0xf]
        %v2243 = vld [vmem:[%s2221 + $0x54] sm:$0xf]
        %v2244 = vld [vmem:[%s2221 + $0x58] sm:$0xf]
        %v2245 = vld [vmem:[%s2221 + $0x5c] sm:$0xf]
        %v2246 = vld [vmem:[%s2221 + $0x60] sm:$0xf]
        %v2247 = vld [vmem:[%s2221 + $0x64] sm:$0xf]
        %v2248 = vld [vmem:[%s2221 + $0x68] sm:$0xf]
        %v2249 = vld [vmem:[%s2221 + $0x6c] sm:$0xf]
        %v2250 = vld [vmem:[%s2221 + $0x70] sm:$0xf]
        %v2251 = vld [vmem:[%s2221 + $0x74] sm:$0xf]
        %v2252 = vld [vmem:[%s2221 + $0x78] sm:$0xf]
        %v2253 = vld [vmem:[%s2221 + $0x7c] sm:$0xf]
        %v2254 = vld [vmem:[%s2221 + $0x80] sm:$0xf]
        %v2255 = vld [vmem:[%s2221 + $0x84] sm:$0xf]
        %v2256 = vld [vmem:[%s2221 + $0x88] sm:$0xf]
        %v2257 = vld [vmem:[%s2221 + $0x8c] sm:$0xf]
        %v2258 = vld [vmem:[%s2221 + $0x90] sm:$0xf]
        %v2259 = vld [vmem:[%s2221 + $0x94] sm:$0xf]
        %v2260 = vld [vmem:[%s2221 + $0x98] sm:$0xf]
        %v2261 = vld [vmem:[%s2221 + $0x9c] sm:$0xf]
        %v2262 = vld [vmem:[%s2221 + $0xa0] sm:$0xf]
        %v2263 = vld [vmem:[%s2221 + $0xa4] sm:$0xf]
        %v2264 = vld [vmem:[%s2221 + $0xa8] sm:$0xf]
        %v2265 = vld [vmem:[%s2221 + $0xac] sm:$0xf]
        %v2266 = vld [vmem:[%s2221 + $0xb0] sm:$0xf]
        %v2267 = vld [vmem:[%s2221 + $0xb4] sm:$0xf]
        %v2268 = vld [vmem:[%s2221 + $0xb8] sm:$0xf]
        %v2269 = vld [vmem:[%s2221 + $0xbc] sm:$0xf]
        %v2318 = vunpack.c.l.b16 %v2222
        %v2319 = vunpack.c.l.b16 %v2223
        %v2320 = vunpack.c.l.b16 %v2224
        %v2321 = vunpack.c.l.b16 %v2225
        %v2322 = vunpack.c.l.b16 %v2226
        %v2323 = vunpack.c.l.b16 %v2227
        %v2324 = vunpack.c.l.b16 %v2228
        %v2325 = vunpack.c.l.b16 %v2229
        %v2326 = vunpack.c.l.b16 %v2230
        %v2327 = vunpack.c.l.b16 %v2231
        %v2328 = vunpack.c.l.b16 %v2232
        %v2329 = vunpack.c.l.b16 %v2233
        %v2330 = vunpack.c.l.b16 %v2234
        %v2331 = vunpack.c.l.b16 %v2235
        %v2332 = vunpack.c.l.b16 %v2236
        %v2333 = vunpack.c.l.b16 %v2237
        %v2334 = vunpack.c.l.b16 %v2238
        %v2335 = vunpack.c.l.b16 %v2239
        %v2336 = vunpack.c.l.b16 %v2240
        %v2337 = vunpack.c.l.b16 %v2241
        %v2338 = vunpack.c.l.b16 %v2242
        %v2339 = vunpack.c.l.b16 %v2243
        %v2340 = vunpack.c.l.b16 %v2244
        %v2341 = vunpack.c.l.b16 %v2245
        %v2342 = vunpack.c.l.b16 %v2246
        %v2343 = vunpack.c.l.b16 %v2247
        %v2344 = vunpack.c.l.b16 %v2248
        %v2345 = vunpack.c.l.b16 %v2249
        %v2346 = vunpack.c.l.b16 %v2250
        %v2347 = vunpack.c.l.b16 %v2251
        %v2348 = vunpack.c.l.b16 %v2252
        %v2349 = vunpack.c.l.b16 %v2253
        %v2350 = vunpack.c.l.b16 %v2254
        %v2351 = vunpack.c.l.b16 %v2255
        %v2352 = vunpack.c.l.b16 %v2256
        %v2353 = vunpack.c.l.b16 %v2257
        %v2354 = vunpack.c.l.b16 %v2258
        %v2355 = vunpack.c.l.b16 %v2259
        %v2356 = vunpack.c.l.b16 %v2260
        %v2357 = vunpack.c.l.b16 %v2261
        %v2358 = vunpack.c.l.b16 %v2262
        %v2359 = vunpack.c.l.b16 %v2263
        %v2360 = vunpack.c.l.b16 %v2264
        %v2361 = vunpack.c.l.b16 %v2265
        %v2362 = vunpack.c.l.b16 %v2266
        %v2363 = vunpack.c.l.b16 %v2267
        %v2364 = vunpack.c.l.b16 %v2268
        %v2365 = vunpack.c.l.b16 %v2269
        %v2366 = vpack.c.b16 %v2319, %v2318
        %v2367 = vpack.c.b16 %v2321, %v2320
        %v2368 = vpack.c.b16 %v2323, %v2322
        %v2369 = vpack.c.b16 %v2325, %v2324
        %v2370 = vpack.c.b16 %v2327, %v2326
        %v2371 = vpack.c.b16 %v2329, %v2328
        %v2372 = vpack.c.b16 %v2331, %v2330
        %v2373 = vpack.c.b16 %v2333, %v2332
        %v2374 = vpack.c.b16 %v2335, %v2334
        %v2375 = vpack.c.b16 %v2337, %v2336
        %v2376 = vpack.c.b16 %v2339, %v2338
        %v2377 = vpack.c.b16 %v2341, %v2340
        %v2378 = vpack.c.b16 %v2343, %v2342
        %v2379 = vpack.c.b16 %v2345, %v2344
        %v2380 = vpack.c.b16 %v2347, %v2346
        %v2381 = vpack.c.b16 %v2349, %v2348
        %v2382 = vpack.c.b16 %v2351, %v2350
        %v2383 = vpack.c.b16 %v2353, %v2352
        %v2384 = vpack.c.b16 %v2355, %v2354
        %v2385 = vpack.c.b16 %v2357, %v2356
        %v2386 = vpack.c.b16 %v2359, %v2358
        %v2387 = vpack.c.b16 %v2361, %v2360
        %v2388 = vpack.c.b16 %v2363, %v2362
        %v2389 = vpack.c.b16 %v2365, %v2364
        %2414 = vmatprep.subr.bf16.mxu0 0
        %2415 = vmatpush1.bf16.msra.mxu0 %v2366
        %2416 = vmatprep.subr.bf16.mxu0 0
        %2417 = vmatpush1.bf16.msra.mxu0 %v2367
        %2418 = vmatprep.subr.bf16.mxu0 0
        %2419 = vmatpush1.bf16.msra.mxu0 %v2368
        %2420 = vmatprep.subr.bf16.mxu0 0
        %2421 = vmatpush1.bf16.msra.mxu0 %v2369
        %2422 = vmatprep.subr.bf16.mxu0 0
        %2423 = vmatpush1.bf16.msra.mxu0 %v2370
        %2424 = vmatprep.subr.bf16.mxu0 0
        %2425 = vmatpush1.bf16.msra.mxu0 %v2371
        %2426 = vmatprep.subr.bf16.mxu0 0
        %2427 = vmatpush1.bf16.msra.mxu0 %v2372
        %2428 = vmatprep.subr.bf16.mxu0 0
        %2429 = vmatpush1.bf16.msra.mxu0 %v2373
        %2430 = vmatprep.subr.bf16.mxu0 0
        %2431 = vmatpush1.bf16.msra.mxu0 %v2374
        %2432 = vmatprep.subr.bf16.mxu0 0
        %2433 = vmatpush1.bf16.msra.mxu0 %v2375
        %2434 = vmatprep.subr.bf16.mxu0 0
        %2435 = vmatpush1.bf16.msra.mxu0 %v2376
        %2436 = vmatprep.subr.bf16.mxu0 0
        %2437 = vmatpush1.bf16.msra.mxu0 %v2377
        %2438 = vmatprep.subr.bf16.mxu0 0
        %2439 = vmatpush1.bf16.msra.mxu0 %v2378
        %2440 = vmatprep.subr.bf16.mxu0 0
        %2441 = vmatpush1.bf16.msra.mxu0 %v2379
        %2442 = vmatprep.subr.bf16.mxu0 0
        %2443 = vmatpush1.bf16.msra.mxu0 %v2380
        %2444 = vmatprep.subr.bf16.mxu0 0
        %2445 = vmatpush1.bf16.msra.mxu0 %v2381
        %2446 = vmatprep.mubr.bf16.mxu0 %v2174
        %2447 = vmatmul.mubr.bf16.gmra.mrb[0].mxu0 %v2173
        %v2448 = vpop.f32.mrb[0].mxu0
        %v2449 = vadd.f32 0.0, %v2448
        %v2450 = vpop.f32.mrb[0].mxu0
        %v2451 = vpop.f32.mrb[0].mxu0
        %v2452 = vadd.f32 0.0, %v2451
        %v2453 = vpop.f32.mrb[0].mxu0
        %2454 = vmatprep.mubr.bf16.mxu0 %v2177
        %2455 = vmatmul.mubr.bf16.gmra.mrb[0].mxu0 %v2176
        %v2456 = vpop.f32.mrb[0].mxu0
        %v2457 = vadd.f32 0.0, %v2456
        %v2458 = vpop.f32.mrb[0].mxu0
        %v2459 = vpop.f32.mrb[0].mxu0
        %v2460 = vadd.f32 0.0, %v2459
        %v2461 = vpop.f32.mrb[0].mxu0
        %2462 = vmatprep.mubr.bf16.mxu0 %v2180
        %2463 = vmatmul.mubr.bf16.gmra.mrb[0].mxu0 %v2179
        %v2464 = vpop.f32.mrb[0].mxu0
        %v2465 = vadd.f32 0.0, %v2464
        %v2466 = vpop.f32.mrb[0].mxu0
        %v2467 = vpop.f32.mrb[0].mxu0
        %v2468 = vadd.f32 0.0, %v2467
        %v2469 = vpop.f32.mrb[0].mxu0
        %2470 = vmatprep.mubr.bf16.mxu0 %v2183
        %2471 = vmatmul.mubr.bf16.gmra.mrb[0].mxu0 %v2182
        %v2472 = vpop.f32.mrb[0].mxu0
        %v2473 = vadd.f32 0.0, %v2472
        %v2474 = vpop.f32.mrb[0].mxu0
        %v2475 = vpop.f32.mrb[0].mxu0
        %v2476 = vadd.f32 0.0, %v2475
        %v2477 = vpop.f32.mrb[0].mxu0
        %2478 = vmatprep.mubr.bf16.mxu0 %v2186
        %2479 = vmatmul.mubr.bf16.gmra.mrb[0].mxu0 %v2185
        %v2480 = vpop.f32.mrb[0].mxu0
        %v2481 = vadd.f32 0.0, %v2480
        %v2482 = vpop.f32.mrb[0].mxu0
        %v2483 = vpop.f32.mrb[0].mxu0
        %v2484 = vadd.f32 0.0, %v2483
        %v2485 = vpop.f32.mrb[0].mxu0
        %2486 = vmatprep.mubr.bf16.mxu0 %v2189
        %2487 = vmatmul.mubr.bf16.gmra.mrb[0].mxu0 %v2188
        %v2488 = vpop.f32.mrb[0].mxu0
        %v2489 = vadd.f32 0.0, %v2488
        %v2490 = vpop.f32.mrb[0].mxu0
        %v2491 = vpop.f32.mrb[0].mxu0
        %v2492 = vadd.f32 0.0, %v2491
        %v2493 = vpop.f32.mrb[0].mxu0
        %2494 = vmatprep.mubr.bf16.mxu0 %v2192
        %2495 = vmatmul.mubr.bf16.gmra.mrb[0].mxu0 %v2191
        %v2496 = vpop.f32.mrb[0].mxu0
        %v2497 = vadd.f32 0.0, %v2496
        %v2498 = vpop.f32.mrb[0].mxu0
        %v2499 = vpop.f32.mrb[0].mxu0
        %v2500 = vadd.f32 0.0, %v2499
        %v2501 = vpop.f32.mrb[0].mxu0
        %2502 = vmatprep.mubr.bf16.mxu0 %v2195
        %2503 = vmatmul.mubr.bf16.gmra.mrb[0].mxu0 %v2194
        %v2504 = vpop.f32.mrb[0].mxu0
        %v2505 = vadd.f32 0.0, %v2504
        %v2506 = vpop.f32.mrb[0].mxu0
        %v2507 = vpop.f32.mrb[0].mxu0
        %v2508 = vadd.f32 0.0, %v2507
        %v2509 = vpop.f32.mrb[0].mxu0
        %2510 = vmatprep.mubr.bf16.mxu0 %v2198
        %2511 = vmatmul.mubr.bf16.gmra.mrb[0].mxu0 %v2197
        %v2512 = vpop.f32.mrb[0].mxu0
        %v2513 = vadd.f32 0.0, %v2512
        %v2514 = vpop.f32.mrb[0].mxu0
        %v2515 = vpop.f32.mrb[0].mxu0
        %v2516 = vadd.f32 0.0, %v2515
        %v2517 = vpop.f32.mrb[0].mxu0
        %2518 = vmatprep.mubr.bf16.mxu0 %v2201
        %2519 = vmatmul.mubr.bf16.gmra.mrb[0].mxu0 %v2200
        %v2520 = vpop.f32.mrb[0].mxu0
        %v2521 = vadd.f32 0.0, %v2520
        %v2522 = vpop.f32.mrb[0].mxu0
        %v2523 = vpop.f32.mrb[0].mxu0
        %v2524 = vadd.f32 0.0, %v2523
        %v2525 = vpop.f32.mrb[0].mxu0
        %2526 = vmatprep.mubr.bf16.mxu0 %v2204
        %2527 = vmatmul.mubr.bf16.gmra.mrb[0].mxu0 %v2203
        %v2528 = vpop.f32.mrb[0].mxu0
        %v2529 = vadd.f32 0.0, %v2528
        %v2530 = vpop.f32.mrb[0].mxu0
        %v2531 = vpop.f32.mrb[0].mxu0
        %v2532 = vadd.f32 0.0, %v2531
        %v2533 = vpop.f32.mrb[0].mxu0
        %2534 = vmatprep.mubr.bf16.mxu0 %v2207
        %2535 = vmatmul.mubr.bf16.gmra.mrb[0].mxu0 %v2206
        %v2536 = vpop.f32.mrb[0].mxu0
        %v2537 = vadd.f32 0.0, %v2536
        %v2538 = vpop.f32.mrb[0].mxu0
        %v2539 = vpop.f32.mrb[0].mxu0
        %v2540 = vadd.f32 0.0, %v2539
        %v2541 = vpop.f32.mrb[0].mxu0
        %2542 = vmatprep.mubr.bf16.mxu0 %v2210
        %2543 = vmatmul.mubr.bf16.gmra.mrb[0].mxu0 %v2209
        %v2544 = vpop.f32.mrb[0].mxu0
        %v2545 = vadd.f32 0.0, %v2544
        %v2546 = vpop.f32.mrb[0].mxu0
        %v2547 = vpop.f32.mrb[0].mxu0
        %v2548 = vadd.f32 0.0, %v2547
        %v2549 = vpop.f32.mrb[0].mxu0
        %2550 = vmatprep.mubr.bf16.mxu0 %v2213
        %2551 = vmatmul.mubr.bf16.gmra.mrb[0].mxu0 %v2212
        %v2552 = vpop.f32.mrb[0].mxu0
        %v2553 = vadd.f32 0.0, %v2552
        %v2554 = vpop.f32.mrb[0].mxu0
        %v2555 = vpop.f32.mrb[0].mxu0
        %v2556 = vadd.f32 0.0, %v2555
        %v2557 = vpop.f32.mrb[0].mxu0
        %2558 = vmatprep.mubr.bf16.mxu0 %v2216
        %2559 = vmatmul.mubr.bf16.gmra.mrb[0].mxu0 %v2215
        %v2560 = vpop.f32.mrb[0].mxu0
        %v2561 = vadd.f32 0.0, %v2560
        %v2562 = vpop.f32.mrb[0].mxu0
        %v2563 = vpop.f32.mrb[0].mxu0
        %v2564 = vadd.f32 0.0, %v2563
        %v2565 = vpop.f32.mrb[0].mxu0
        %2566 = vmatprep.mubr.bf16.mxu0 %v2219
        %2567 = vmatmul.mubr.bf16.gmra.mrb[0].mxu0 %v2218
        %v2568 = vpop.f32.mrb[0].mxu0
        %v2569 = vadd.f32 0.0, %v2568
        %v2570 = vpop.f32.mrb[0].mxu0
        %v2571 = vpop.f32.mrb[0].mxu0
        %v2572 = vadd.f32 0.0, %v2571
        %v2573 = vpop.f32.mrb[0].mxu0
        %2574 = vdwg.mxu0
        %2575 = vmatprep.subr.bf16.mxu0 0
        %2576 = vmatpush1.bf16.msra.mxu0 %v2382
        %2577 = vmatprep.subr.bf16.mxu0 0
        %2578 = vmatpush1.bf16.msra.mxu0 %v2383
        %2579 = vmatprep.subr.bf16.mxu0 0
        %2580 = vmatpush1.bf16.msra.mxu0 %v2384
        %2581 = vmatprep.subr.bf16.mxu0 0
        %2582 = vmatpush1.bf16.msra.mxu0 %v2385
        %2583 = vmatprep.subr.bf16.mxu0 0
        %2584 = vmatpush1.bf16.msra.mxu0 %v2386
        %2585 = vmatprep.subr.bf16.mxu0 0
        %2586 = vmatpush1.bf16.msra.mxu0 %v2387
        %2587 = vmatprep.subr.bf16.mxu0 0
        %2588 = vmatpush1.bf16.msra.mxu0 %v2388
        %2589 = vmatprep.subr.bf16.mxu0 0
        %2590 = vmatpush1.bf16.msra.mxu0 %v2389
        %2591 = vmatprep.subr.bf16.mxu0 0
        %2592 = vmatpush1.bf16.msra.mxu0 0
        %2593 = vmatprep.subr.bf16.mxu0 0
        %2594 = vmatpush1.bf16.msra.mxu0 0
        %2595 = vmatprep.subr.bf16.mxu0 0
        %2596 = vmatpush1.bf16.msra.mxu0 0
        %2597 = vmatprep.subr.bf16.mxu0 0
        %2598 = vmatpush1.bf16.msra.mxu0 0
        %2599 = vmatprep.subr.bf16.mxu0 0
        %2600 = vmatpush1.bf16.msra.mxu0 0
        %2601 = vmatprep.subr.bf16.mxu0 0
        %2602 = vmatpush1.bf16.msra.mxu0 0
        %2603 = vmatprep.subr.bf16.mxu0 0
        %2604 = vmatpush1.bf16.msra.mxu0 0
        %2605 = vmatprep.subr.bf16.mxu0 0
        %2606 = vmatpush1.bf16.msra.mxu0 0
        %2607 = vmatprep.mubr.bf16.mxu0 0
        %2608 = vmatmul.mubr.bf16.gmra.mrb[0].mxu0 %v2175
        %v2609 = vpop.f32.mrb[0].mxu0
        %v2610 = vadd.f32 %v2449, %v2609
        %v2611 = vpop.f32.mrb[0].mxu0
        %v2612 = vpop.f32.mrb[0].mxu0
        %v2613 = vadd.f32 %v2452, %v2612
        %v2614 = vpop.f32.mrb[0].mxu0
        %2615 = vmatprep.mubr.bf16.mxu0 0
        %2616 = vmatmul.mubr.bf16.gmra.mrb[0].mxu0 %v2178
        %v2617 = vpop.f32.mrb[0].mxu0
        %v2618 = vadd.f32 %v2457, %v2617
        %v2619 = vpop.f32.mrb[0].mxu0
        %v2620 = vpop.f32.mrb[0].mxu0
        %v2621 = vadd.f32 %v2460, %v2620
        %v2622 = vpop.f32.mrb[0].mxu0
        %2623 = vmatprep.mubr.bf16.mxu0 0
        %2624 = vmatmul.mubr.bf16.gmra.mrb[0].mxu0 %v2181
        %v2625 = vpop.f32.mrb[0].mxu0
        %v2626 = vadd.f32 %v2465, %v2625
        %v2627 = vpop.f32.mrb[0].mxu0
        %v2628 = vpop.f32.mrb[0].mxu0
        %v2629 = vadd.f32 %v2468, %v2628
        %v2630 = vpop.f32.mrb[0].mxu0
        %2631 = vmatprep.mubr.bf16.mxu0 0
        %2632 = vmatmul.mubr.bf16.gmra.mrb[0].mxu0 %v2184
        %v2633 = vpop.f32.mrb[0].mxu0
        %v2634 = vadd.f32 %v2473, %v2633
        %v2635 = vpop.f32.mrb[0].mxu0
        %v2636 = vpop.f32.mrb[0].mxu0
        %v2637 = vadd.f32 %v2476, %v2636
        %v2638 = vpop.f32.mrb[0].mxu0
        %2639 = vmatprep.mubr.bf16.mxu0 0
        %2640 = vmatmul.mubr.bf16.gmra.mrb[0].mxu0 %v2187
        %v2641 = vpop.f32.mrb[0].mxu0
        %v2642 = vadd.f32 %v2481, %v2641
        %v2643 = vpop.f32.mrb[0].mxu0
        %v2644 = vpop.f32.mrb[0].mxu0
        %v2645 = vadd.f32 %v2484, %v2644
        %v2646 = vpop.f32.mrb[0].mxu0
        %2647 = vmatprep.mubr.bf16.mxu0 0
        %2648 = vmatmul.mubr.bf16.gmra.mrb[0].mxu0 %v2190
        %v2649 = vpop.f32.mrb[0].mxu0
        %v2650 = vadd.f32 %v2489, %v2649
        %v2651 = vpop.f32.mrb[0].mxu0
        %v2652 = vpop.f32.mrb[0].mxu0
        %v2653 = vadd.f32 %v2492, %v2652
        %v2654 = vpop.f32.mrb[0].mxu0
        %2655 = vmatprep.mubr.bf16.mxu0 0
        %2656 = vmatmul.mubr.bf16.gmra.mrb[0].mxu0 %v2193
        %v2657 = vpop.f32.mrb[0].mxu0
        %v2658 = vadd.f32 %v2497, %v2657
        %v2659 = vpop.f32.mrb[0].mxu0
        %v2660 = vpop.f32.mrb[0].mxu0
        %v2661 = vadd.f32 %v2500, %v2660
        %v2662 = vpop.f32.mrb[0].mxu0
        %2663 = vmatprep.mubr.bf16.mxu0 0
        %2664 = vmatmul.mubr.bf16.gmra.mrb[0].mxu0 %v2196
        %v2665 = vpop.f32.mrb[0].mxu0
        %v2666 = vadd.f32 %v2505, %v2665
        %v2667 = vpop.f32.mrb[0].mxu0
        %v2668 = vpop.f32.mrb[0].mxu0
        %v2669 = vadd.f32 %v2508, %v2668
        %v2670 = vpop.f32.mrb[0].mxu0
        %2671 = vmatprep.mubr.bf16.mxu0 0
        %2672 = vmatmul.mubr.bf16.gmra.mrb[0].mxu0 %v2199
        %v2673 = vpop.f32.mrb[0].mxu0
        %v2674 = vadd.f32 %v2513, %v2673
        %v2675 = vpop.f32.mrb[0].mxu0
        %v2676 = vpop.f32.mrb[0].mxu0
        %v2677 = vadd.f32 %v2516, %v2676
        %v2678 = vpop.f32.mrb[0].mxu0
        %2679 = vmatprep.mubr.bf16.mxu0 0
        %2680 = vmatmul.mubr.bf16.gmra.mrb[0].mxu0 %v2202
        %v2681 = vpop.f32.mrb[0].mxu0
        %v2682 = vadd.f32 %v2521, %v2681
        %v2683 = vpop.f32.mrb[0].mxu0
        %v2684 = vpop.f32.mrb[0].mxu0
        %v2685 = vadd.f32 %v2524, %v2684
        %v2686 = vpop.f32.mrb[0].mxu0
        %2687 = vmatprep.mubr.bf16.mxu0 0
        %2688 = vmatmul.mubr.bf16.gmra.mrb[0].mxu0 %v2205
        %v2689 = vpop.f32.mrb[0].mxu0
        %v2690 = vadd.f32 %v2529, %v2689
        %v2691 = vpop.f32.mrb[0].mxu0
        %v2692 = vpop.f32.mrb[0].mxu0
        %v2693 = vadd.f32 %v2532, %v2692
        %v2694 = vpop.f32.mrb[0].mxu0
        %2695 = vmatprep.mubr.bf16.mxu0 0
        %2696 = vmatmul.mubr.bf16.gmra.mrb[0].mxu0 %v2208
        %v2697 = vpop.f32.mrb[0].mxu0
        %v2698 = vadd.f32 %v2537, %v2697
        %v2699 = vpop.f32.mrb[0].mxu0
        %v2700 = vpop.f32.mrb[0].mxu0
        %v2701 = vadd.f32 %v2540, %v2700
        %v2702 = vpop.f32.mrb[0].mxu0
        %2703 = vmatprep.mubr.bf16.mxu0 0
        %2704 = vmatmul.mubr.bf16.gmra.mrb[0].mxu0 %v2211
        %v2705 = vpop.f32.mrb[0].mxu0
        %v2706 = vadd.f32 %v2545, %v2705
        %v2707 = vpop.f32.mrb[0].mxu0
        %v2708 = vpop.f32.mrb[0].mxu0
        %v2709 = vadd.f32 %v2548, %v2708
        %v2710 = vpop.f32.mrb[0].mxu0
        %2711 = vmatprep.mubr.bf16.mxu0 0
        %2712 = vmatmul.mubr.bf16.gmra.mrb[0].mxu0 %v2214
        %v2713 = vpop.f32.mrb[0].mxu0
        %v2714 = vadd.f32 %v2553, %v2713
        %v2715 = vpop.f32.mrb[0].mxu0
        %v2716 = vpop.f32.mrb[0].mxu0
        %v2717 = vadd.f32 %v2556, %v2716
        %v2718 = vpop.f32.mrb[0].mxu0
        %2719 = vmatprep.mubr.bf16.mxu0 0
        %2720 = vmatmul.mubr.bf16.gmra.mrb[0].mxu0 %v2217
        %v2721 = vpop.f32.mrb[0].mxu0
        %v2722 = vadd.f32 %v2561, %v2721
        %v2723 = vpop.f32.mrb[0].mxu0
        %v2724 = vpop.f32.mrb[0].mxu0
        %v2725 = vadd.f32 %v2564, %v2724
        %v2726 = vpop.f32.mrb[0].mxu0
        %2727 = vmatprep.mubr.bf16.mxu0 0
        %2728 = vmatmul.mubr.bf16.gmra.mrb[0].mxu0 %v2220
        %v2729 = vpop.f32.mrb[0].mxu0
        %v2730 = vadd.f32 %v2569, %v2729
        %v2731 = vpop.f32.mrb[0].mxu0
        %v2732 = vpop.f32.mrb[0].mxu0
        %v2733 = vadd.f32 %v2572, %v2732
        %v2734 = vpop.f32.mrb[0].mxu0
        %2735 = vdwg.mxu0
        %v2736 = vld [vmem:[#allocation3] sm:$0xff]
        %v2737 = vld [vmem:[#allocation3 + $0x8] sm:$0xff]
        %v2738 = vld [vmem:[#allocation3 + $0x10] sm:$0xff]
        %v2739 = vld [vmem:[#allocation3 + $0x18] sm:$0xff]
        %v2740 = vld [vmem:[#allocation3 + $0x20] sm:$0xff]
        %v2741 = vld [vmem:[#allocation3 + $0x28] sm:$0xff]
        %v2742 = vld [vmem:[#allocation3 + $0x30] sm:$0xff]
        %v2743 = vld [vmem:[#allocation3 + $0x38] sm:$0xff]
        %v2744 = vld [vmem:[#allocation3 + $0x40] sm:$0xff]
        %v2745 = vld [vmem:[#allocation3 + $0x48] sm:$0xff]
        %v2746 = vld [vmem:[#allocation3 + $0x50] sm:$0xff]
        %v2747 = vld [vmem:[#allocation3 + $0x58] sm:$0xff]
        %v2748 = vld [vmem:[#allocation3 + $0x60] sm:$0xff]
        %v2749 = vld [vmem:[#allocation3 + $0x68] sm:$0xff]
        %v2750 = vld [vmem:[#allocation3 + $0x70] sm:$0xff]
        %v2751 = vld [vmem:[#allocation3 + $0x78] sm:$0xff]
        %v2752 = vld [vmem:[#allocation3 + $0x80] sm:$0xff]
        %v2753 = vld [vmem:[#allocation3 + $0x88] sm:$0xff]
        %v2754 = vld [vmem:[#allocation3 + $0x90] sm:$0xff]
        %v2755 = vld [vmem:[#allocation3 + $0x98] sm:$0xff]
        %v2756 = vld [vmem:[#allocation3 + $0xa0] sm:$0xff]
        %v2757 = vld [vmem:[#allocation3 + $0xa8] sm:$0xff]
        %v2758 = vld [vmem:[#allocation3 + $0xb0] sm:$0xff]
        %v2759 = vld [vmem:[#allocation3 + $0xb8] sm:$0xff]
        %v2760 = vld [vmem:[#allocation3 + $0xc0] sm:$0xff]
        %v2761 = vld [vmem:[#allocation3 + $0xc8] sm:$0xff]
        %v2762 = vld [vmem:[#allocation3 + $0xd0] sm:$0xff]
        %v2763 = vld [vmem:[#allocation3 + $0xd8] sm:$0xff]
        %v2764 = vld [vmem:[#allocation3 + $0xe0] sm:$0xff]
        %v2765 = vld [vmem:[#allocation3 + $0xe8] sm:$0xff]
        %v2766 = vld [vmem:[#allocation3 + $0xf0] sm:$0xff]
        %v2767 = vld [vmem:[#allocation3 + $0xf8] sm:$0xff]
        %v2768 = vadd.f32 %v2736, %v2610
        %v2769 = vadd.f32 %v2737, %v2613
        %v2770 = vadd.f32 %v2738, %v2618
        %v2771 = vadd.f32 %v2739, %v2621
        %v2772 = vadd.f32 %v2740, %v2626
        %v2773 = vadd.f32 %v2741, %v2629
        %v2774 = vadd.f32 %v2742, %v2634
        %v2775 = vadd.f32 %v2743, %v2637
        %v2776 = vadd.f32 %v2744, %v2642
        %v2777 = vadd.f32 %v2745, %v2645
        %v2778 = vadd.f32 %v2746, %v2650
        %v2779 = vadd.f32 %v2747, %v2653
        %v2780 = vadd.f32 %v2748, %v2658
        %v2781 = vadd.f32 %v2749, %v2661
        %v2782 = vadd.f32 %v2750, %v2666
        %v2783 = vadd.f32 %v2751, %v2669
        %v2784 = vadd.f32 %v2752, %v2674
        %v2785 = vadd.f32 %v2753, %v2677
        %v2786 = vadd.f32 %v2754, %v2682
        %v2787 = vadd.f32 %v2755, %v2685
        %v2788 = vadd.f32 %v2756, %v2690
        %v2789 = vadd.f32 %v2757, %v2693
        %v2790 = vadd.f32 %v2758, %v2698
        %v2791 = vadd.f32 %v2759, %v2701
        %v2792 = vadd.f32 %v2760, %v2706
        %v2793 = vadd.f32 %v2761, %v2709
        %v2794 = vadd.f32 %v2762, %v2714
        %v2795 = vadd.f32 %v2763, %v2717
        %v2796 = vadd.f32 %v2764, %v2722
        %v2797 = vadd.f32 %v2765, %v2725
        %v2798 = vadd.f32 %v2766, %v2730
        %v2799 = vadd.f32 %v2767, %v2733
        %2800 = vst [vmem:[#allocation3] sm:$0xff] %v2768
        %2801 = vst [vmem:[#allocation3 + $0x8] sm:$0xff] %v2769
        %2802 = vst [vmem:[#allocation3 + $0x10] sm:$0xff] %v2770
        %2803 = vst [vmem:[#allocation3 + $0x18] sm:$0xff] %v2771
        %2804 = vst [vmem:[#allocation3 + $0x20] sm:$0xff] %v2772
        %2805 = vst [vmem:[#allocation3 + $0x28] sm:$0xff] %v2773
        %2806 = vst [vmem:[#allocation3 + $0x30] sm:$0xff] %v2774
        %2807 = vst [vmem:[#allocation3 + $0x38] sm:$0xff] %v2775
        %2808 = vst [vmem:[#allocation3 + $0x40] sm:$0xff] %v2776
        %2809 = vst [vmem:[#allocation3 + $0x48] sm:$0xff] %v2777
        %2810 = vst [vmem:[#allocation3 + $0x50] sm:$0xff] %v2778
        %2811 = vst [vmem:[#allocation3 + $0x58] sm:$0xff] %v2779
        %2812 = vst [vmem:[#allocation3 + $0x60] sm:$0xff] %v2780
        %2813 = vst [vmem:[#allocation3 + $0x68] sm:$0xff] %v2781
        %2814 = vst [vmem:[#allocation3 + $0x70] sm:$0xff] %v2782
        %2815 = vst [vmem:[#allocation3 + $0x78] sm:$0xff] %v2783
        %2816 = vst [vmem:[#allocation3 + $0x80] sm:$0xff] %v2784
        %2817 = vst [vmem:[#allocation3 + $0x88] sm:$0xff] %v2785
        %2818 = vst [vmem:[#allocation3 + $0x90] sm:$0xff] %v2786
        %2819 = vst [vmem:[#allocation3 + $0x98] sm:$0xff] %v2787
        %2820 = vst [vmem:[#allocation3 + $0xa0] sm:$0xff] %v2788
        %2821 = vst [vmem:[#allocation3 + $0xa8] sm:$0xff] %v2789
        %2822 = vst [vmem:[#allocation3 + $0xb0] sm:$0xff] %v2790
        %2823 = vst [vmem:[#allocation3 + $0xb8] sm:$0xff] %v2791
        %2824 = vst [vmem:[#allocation3 + $0xc0] sm:$0xff] %v2792
        %2825 = vst [vmem:[#allocation3 + $0xc8] sm:$0xff] %v2793
        %2826 = vst [vmem:[#allocation3 + $0xd0] sm:$0xff] %v2794
        %2827 = vst [vmem:[#allocation3 + $0xd8] sm:$0xff] %v2795
        %2828 = vst [vmem:[#allocation3 + $0xe0] sm:$0xff] %v2796
        %2829 = vst [vmem:[#allocation3 + $0xe8] sm:$0xff] %v2797
        %2830 = vst [vmem:[#allocation3 + $0xf0] sm:$0xff] %v2798
        %2831 = vst [vmem:[#allocation3 + $0xf8] sm:$0xff] %v2799
        %v2832 = vld [vmem:[#allocation3] sm:$0xff]
        %v2833 = vld [vmem:[#allocation3 + $0x8] sm:$0xff]
        %v2834 = vld [vmem:[#allocation3 + $0x10] sm:$0xff]
        %v2835 = vld [vmem:[#allocation3 + $0x18] sm:$0xff]
        %v2836 = vld [vmem:[#allocation3 + $0x20] sm:$0xff]
        %v2837 = vld [vmem:[#allocation3 + $0x28] sm:$0xff]
        %v2838 = vld [vmem:[#allocation3 + $0x30] sm:$0xff]
        %v2839 = vld [vmem:[#allocation3 + $0x38] sm:$0xff]
        %v2840 = vld [vmem:[#allocation3 + $0x40] sm:$0xff]
        %v2841 = vld [vmem:[#allocation3 + $0x48] sm:$0xff]
        %v2842 = vld [vmem:[#allocation3 + $0x50] sm:$0xff]
        %v2843 = vld [vmem:[#allocation3 + $0x58] sm:$0xff]
        %v2844 = vld [vmem:[#allocation3 + $0x60] sm:$0xff]
        %v2845 = vld [vmem:[#allocation3 + $0x68] sm:$0xff]
        %v2846 = vld [vmem:[#allocation3 + $0x70] sm:$0xff]
        %v2847 = vld [vmem:[#allocation3 + $0x78] sm:$0xff]
        %v2848 = vld [vmem:[#allocation3 + $0x80] sm:$0xff]
        %v2849 = vld [vmem:[#allocation3 + $0x88] sm:$0xff]
        %v2850 = vld [vmem:[#allocation3 + $0x90] sm:$0xff]
        %v2851 = vld [vmem:[#allocation3 + $0x98] sm:$0xff]
        %v2852 = vld [vmem:[#allocation3 + $0xa0] sm:$0xff]
        %v2853 = vld [vmem:[#allocation3 + $0xa8] sm:$0xff]
        %v2854 = vld [vmem:[#allocation3 + $0xb0] sm:$0xff]
        %v2855 = vld [vmem:[#allocation3 + $0xb8] sm:$0xff]
        %v2856 = vld [vmem:[#allocation3 + $0xc0] sm:$0xff]
        %v2857 = vld [vmem:[#allocation3 + $0xc8] sm:$0xff]
        %v2858 = vld [vmem:[#allocation3 + $0xd0] sm:$0xff]
        %v2859 = vld [vmem:[#allocation3 + $0xd8] sm:$0xff]
        %v2860 = vld [vmem:[#allocation3 + $0xe0] sm:$0xff]
        %v2861 = vld [vmem:[#allocation3 + $0xe8] sm:$0xff]
        %v2862 = vld [vmem:[#allocation3 + $0xf0] sm:$0xff]
        %v2863 = vld [vmem:[#allocation3 + $0xf8] sm:$0xff]
        %v2864 = vld [vmem:[%s4] sm:$0x1]
        %v2866 = vlaneseq
        %v2867 = vshrl.u32 %v2866, 7
        %v2868 = vsub.s32 0, %v2867
        %v2869 = vrot.slane %v2864, %v2868
        %v2871 = vadd.f32 %v2832, %v2869
        %v2872 = vadd.f32 %v2833, %v2869
        %v2873 = vadd.f32 %v2834, %v2869
        %v2874 = vadd.f32 %v2835, %v2869
        %v2875 = vadd.f32 %v2836, %v2869
        %v2876 = vadd.f32 %v2837, %v2869
        %v2877 = vadd.f32 %v2838, %v2869
        %v2878 = vadd.f32 %v2839, %v2869
        %v2879 = vadd.f32 %v2840, %v2869
        %v2880 = vadd.f32 %v2841, %v2869
        %v2881 = vadd.f32 %v2842, %v2869
        %v2882 = vadd.f32 %v2843, %v2869
        %v2883 = vadd.f32 %v2844, %v2869
        %v2884 = vadd.f32 %v2845, %v2869
        %v2885 = vadd.f32 %v2846, %v2869
        %v2886 = vadd.f32 %v2847, %v2869
        %v2887 = vadd.f32 %v2848, %v2869
        %v2888 = vadd.f32 %v2849, %v2869
        %v2889 = vadd.f32 %v2850, %v2869
        %v2890 = vadd.f32 %v2851, %v2869
        %v2891 = vadd.f32 %v2852, %v2869
        %v2892 = vadd.f32 %v2853, %v2869
        %v2893 = vadd.f32 %v2854, %v2869
        %v2894 = vadd.f32 %v2855, %v2869
        %v2895 = vadd.f32 %v2856, %v2869
        %v2896 = vadd.f32 %v2857, %v2869
        %v2897 = vadd.f32 %v2858, %v2869
        %v2898 = vadd.f32 %v2859, %v2869
        %v2899 = vadd.f32 %v2860, %v2869
        %v2900 = vadd.f32 %v2861, %v2869
        %v2901 = vadd.f32 %v2862, %v2869
        %v2902 = vadd.f32 %v2863, %v2869
        %2903 = vst [vmem:[%s334] sm:$0xff] %v2871
        %2904 = vst [vmem:[%s334 + $0x8] sm:$0xff] %v2872
        %2905 = vst [vmem:[%s334 + $0x10] sm:$0xff] %v2873
        %2906 = vst [vmem:[%s334 + $0x18] sm:$0xff] %v2874
        %2907 = vst [vmem:[%s334 + $0x20] sm:$0xff] %v2875
        %2908 = vst [vmem:[%s334 + $0x28] sm:$0xff] %v2876
        %2909 = vst [vmem:[%s334 + $0x30] sm:$0xff] %v2877
        %2910 = vst [vmem:[%s334 + $0x38] sm:$0xff] %v2878
        %2911 = vst [vmem:[%s334 + $0x40] sm:$0xff] %v2879
        %2912 = vst [vmem:[%s334 + $0x48] sm:$0xff] %v2880
        %2913 = vst [vmem:[%s334 + $0x50] sm:$0xff] %v2881
        %2914 = vst [vmem:[%s334 + $0x58] sm:$0xff] %v2882
        %2915 = vst [vmem:[%s334 + $0x60] sm:$0xff] %v2883
        %2916 = vst [vmem:[%s334 + $0x68] sm:$0xff] %v2884
        %2917 = vst [vmem:[%s334 + $0x70] sm:$0xff] %v2885
        %2918 = vst [vmem:[%s334 + $0x78] sm:$0xff] %v2886
        %2919 = vst [vmem:[%s334 + $0x80] sm:$0xff] %v2887
        %2920 = vst [vmem:[%s334 + $0x88] sm:$0xff] %v2888
        %2921 = vst [vmem:[%s334 + $0x90] sm:$0xff] %v2889
        %2922 = vst [vmem:[%s334 + $0x98] sm:$0xff] %v2890
        %2923 = vst [vmem:[%s334 + $0xa0] sm:$0xff] %v2891
        %2924 = vst [vmem:[%s334 + $0xa8] sm:$0xff] %v2892
        %2925 = vst [vmem:[%s334 + $0xb0] sm:$0xff] %v2893
        %2926 = vst [vmem:[%s334 + $0xb8] sm:$0xff] %v2894
        %2927 = vst [vmem:[%s334 + $0xc0] sm:$0xff] %v2895
        %2928 = vst [vmem:[%s334 + $0xc8] sm:$0xff] %v2896
        %2929 = vst [vmem:[%s334 + $0xd0] sm:$0xff] %v2897
        %2930 = vst [vmem:[%s334 + $0xd8] sm:$0xff] %v2898
        %2931 = vst [vmem:[%s334 + $0xe0] sm:$0xff] %v2899
        %2932 = vst [vmem:[%s334 + $0xe8] sm:$0xff] %v2900
        %2933 = vst [vmem:[%s334 + $0xf0] sm:$0xff] %v2901
        %2934 = vst [vmem:[%s334 + $0xf8] sm:$0xff] %v2902
        %s2935 = sand.u32 %s183, 1
        %s2936 = scalar_lea.sflag [#allocation5], %s2935
        %s2937 = sand.u32 %s183, 1
        %s2938 = smul.addr %s2937, 256
        %s2939 = scalar_lea.vmem [#allocation4], %s2938
        // Predicated region
        $region57: #{adv_net_forward.2} parent=39 // pred_check
          %p2940 = pneg %p193
        $region58: #{adv_net_forward.2} parent=39 // pred_check_branch
          %2942 = sbr.rel (%p2940) target = $region60
        $region59: #{adv_net_forward.2} parent=39 // pred_region
          %s2943 = smul.u32 16, %s24
          %s2945 = ssub.s32 4096, 4096
          %2946 = vsyncadd %s2936, %s2945
          %s2947 = smul.addr %s2943, 2
          %s2948 = smul.addr %s23, 32
          %s2949 = sadd.s32 %s2947, %s2948
          %s2950 = smul.addr %s2949, 128
          %s2951 = scalar_lea.hbm %s5, %s2950
          %s2952 = sshll.u32 %s2939, 4
          %s2953 = int_to_ptr.vmem [resolvable:$true] %s2952
          %2958 = dma.vmem_to_hbm [thread:$0]  %s2953, 4096, %s2951, %s2936, 128, 128, 8
        $region60: #{adv_net_forward.2} parent=39 // pred_fallthru
          _
      $region40: #{adv_net_forward.2} parent=5 // pred_fallthru
        _
      %p2959 = scmp.le.s32.totalorder 2, %s14
      // Predicated region
      $region61: #{adv_net_forward.2} parent=5 // pred_check
        %p2960 = pneg %p2959
      $region62: #{adv_net_forward.2} parent=5 // pred_check_branch
        %2962 = sbr.rel (%p2960) target = $region64
      $region63: #{adv_net_forward.2} parent=5 // pred_region
        %s2963 = ssub.s32 %s14, 2
        // Predicated region
        $region65: #{adv_net_forward.2} parent=63 // pred_check
          %p2964 = pneg %p199
        $region66: #{adv_net_forward.2} parent=63 // pred_check_branch
          %2966 = sbr.rel (%p2964) target = $region68
        $region67: #{adv_net_forward.2} parent=63 // pred_region
          %s2967 = sand.u32 %s184, 1
          %s2968 = scalar_lea.sflag [#allocation5], %s2967
          %s2969 = sand.u32 %s184, 1
          %s2970 = smul.addr %s2969, 256
          %s2971 = scalar_lea.vmem [#allocation4], %s2970
          %2972 = dma.done %s2968, 4096
        $region68: #{adv_net_forward.2} parent=63 // pred_fallthru
          _
      $region64: #{adv_net_forward.2} parent=5 // pred_fallthru
        _
    $region6: #{adv_net_forward.2} parent=1 // loop_footer
      %s18 = sadd.s32 1, %s14
    $region7: #{adv_net_forward.2} parent=1 // loop_footer_branch
      %13 = sbr.rel target = $region3
    $region8: #{adv_net_forward.2} parent=1 // loop_exit
      _
    %2973 = vsyncpa [#allocation5], 1
    %s2974 = scalar_lea.sflag [#allocation5], 1
    %2975 = vsyncpa %s2974, 1

</llo_original>
